<compile_context>
chip_gen: v5e
topology: v5e:2x2
jax: 0.10.0
libtpu: 0.0.40
codegen_flags: <defaults>
</compile_context>

<pallas_src>
import functools

import jax
import jax.numpy as jnp
from jax.experimental import pallas as pl
from jax.experimental.pallas import tpu as pltpu

# Real (unpadded) model dims from the PyTorch module.
HID1 = 330      # weight:  X_size -> 330
HID2 = 130      # weight2: 330    -> 130
NOUT = 6        # fc1:     130    -> 6

# Lane-padded dims (multiples of 128).
HID1_P = 384
HID2_P = 256
NOUT_P = 128
LANE = 128

VMEM_LIMIT = 48 * 1024 * 1024   # <= v7x's 64 MiB physical, fine on v5e/v6e


def _round_up(x, m):
    return (x + m - 1) // m * m


def _pad2d(x, rows, cols, dtype=jnp.float32):
    r, c = x.shape
    return jnp.pad(x.astype(jnp.float32),
                   ((0, rows - r), (0, cols - c))).astype(dtype)


def _masked_log_softmax(h, valid_cols):
    """log_softmax over the last axis, masked to the first `valid_cols` lanes."""
    col = jax.lax.broadcasted_iota(jnp.int32, h.shape, h.ndim - 1)
    valid = col < valid_cols
    m = jnp.max(jnp.where(valid, h, -jnp.inf), axis=-1, keepdims=True)
    s = h - m
    p = jnp.where(valid, jnp.exp(s), 0.0)
    lse = jnp.log(jnp.sum(p, axis=-1, keepdims=True))
    return jnp.where(valid, s - lse, 0.0)


# --------------------------------------------------------------------------
# Fused single-call kernel (everything VMEM resident, no grid).
# --------------------------------------------------------------------------
def _fused_kernel(a_ref, xa_ref, w1_ref, w2_ref, b2_ref, wfc_ref, bfc_ref,
                  o_ref):
    mxu = a_ref.dtype
    ax = jnp.dot(a_ref[...], xa_ref[...], preferred_element_type=jnp.float32)
    h1 = jnp.dot(ax.astype(mxu), w1_ref[...],
                 preferred_element_type=jnp.float32)
    h1 = jnp.maximum(h1, 0.0)                                     # ReLU
    h2 = jnp.dot(h1.astype(mxu), w2_ref[...],
                 preferred_element_type=jnp.float32) + b2_ref[...]
    ah2 = jnp.dot(a_ref[...], h2.astype(mxu),
                  preferred_element_type=jnp.float32)
    ls = _masked_log_softmax(ah2, HID2)
    o_ref[...] = (jnp.dot(ls.astype(wfc_ref.dtype), wfc_ref[...],
                          preferred_element_type=jnp.float32) + bfc_ref[...])


# --------------------------------------------------------------------------
# Tiled kernel 1: H2_dense[i,:] = relu((A[i,:]@X_aug)@W1_aug) @ W2 + b2
#   grid = (row blocks of A, k blocks over A's columns); X_aug VMEM resident.
# --------------------------------------------------------------------------
def _layer12_kernel(a_ref, xa_ref, w1_ref, w2_ref, b2_ref, h2_ref, acc_ref,
                    *, tk):
    k = pl.program_id(1)

    @pl.when(k == 0)
    def _():
        acc_ref[...] = jnp.zeros_like(acc_ref)

    start = pl.multiple_of(k * tk, tk)
    acc_ref[...] += jnp.dot(a_ref[...], xa_ref[pl.ds(start, tk), :],
                            preferred_element_type=jnp.float32)

    @pl.when(k == pl.num_programs(1) - 1)
    def _():
        mxu = w1_ref.dtype
        # (A@X_aug) @ W1_aug == A @ (X @ W1 + b1)   (b1 folded as a W1 row)
        h = jnp.dot(acc_ref[...].astype(mxu), w1_ref[...],
                    preferred_element_type=jnp.float32)
        h = jnp.maximum(h, 0.0)                                   # ReLU
        h = jnp.dot(h.astype(mxu), w2_ref[...],
                    preferred_element_type=jnp.float32) + b2_ref[...]
        h2_ref[...] = h.astype(h2_ref.dtype)


# --------------------------------------------------------------------------
# Tiled kernel 2: out[i,:] = log_softmax(A[i,:]@H2)[:, :130] @ Wfc + bfc
#   H2_dense VMEM resident; rows sliced by k inside.
# --------------------------------------------------------------------------
def _layer3_kernel(a_ref, h2_ref, wfc_ref, bfc_ref, o_ref, acc_ref, *, tk):
    k = pl.program_id(1)

    @pl.when(k == 0)
    def _():
        acc_ref[...] = jnp.zeros_like(acc_ref)

    start = pl.multiple_of(k * tk, tk)
    acc_ref[...] += jnp.dot(a_ref[...], h2_ref[pl.ds(start, tk), :],
                            preferred_element_type=jnp.float32)

    @pl.when(k == pl.num_programs(1) - 1)
    def _():
        ls = _masked_log_softmax(acc_ref[...], HID2)
        o_ref[...] = (jnp.dot(ls.astype(wfc_ref.dtype), wfc_ref[...],
                              preferred_element_type=jnp.float32)
                      + bfc_ref[...])


# --------------------------------------------------------------------------
# Tile selection for the blocked path: big tiles (up to 512), 128-granular
# padding, >=2 row blocks so both v7x TensorCores get work.
# --------------------------------------------------------------------------
def _pick_tiles(N, tm, tk):
    if tm is not None:
        tk = tm if tk is None else tk
        assert tm % LANE == 0 and tk % LANE == 0
        Np = _round_up(_round_up(N, tm), tk)
        return tm, tk, Np
    best = None
    for d in (4, 3, 2, 1):                 # candidate tiles 512, 384, 256, 128
        t = LANE * d
        np_c = _round_up(N, t)
        if np_c // t < 2:                  # keep the parallel axis >= 2 blocks
            continue
        if (best is None or np_c < best[1]
                or (np_c == best[1] and t > best[0])):
            best = (t, np_c)
    if best is None:
        t, np_c = LANE, _round_up(N, LANE)
    else:
        t, np_c = best
    return t, t, np_c


# --------------------------------------------------------------------------
# Wrapper: pad to lane-dense shapes, dispatch fused vs tiled, slice result.
# --------------------------------------------------------------------------
def gcn_forward(X, A_hat, W1, b1, W2, b2, Wfc, bfc, *,
                tm=None, tk=None, mxu_dtype=jnp.bfloat16,
                fuse_max_n=1024, force_tiled=False):
    N, F = X.shape
    FA = F + 1                         # +1 column of ones carries b1 exactly
    FA_P = _round_up(FA, LANE)
    itm = jnp.dtype(mxu_dtype).itemsize

    use_fused = (not force_tiled) and (_round_up(N, LANE) <= fuse_max_n)
    if use_fused:
        Np = _round_up(N, LANE)
    else:
        tm, tk, Np = _pick_tiles(N, tm, tk)

    # ---- padded operands (zeros everywhere outside the real data) ----------
    A_p = _pad2d(A_hat, Np, Np, mxu_dtype)

    Xa = jnp.zeros((Np, FA_P), jnp.float32)
    Xa = Xa.at[:N, :F].set(X.astype(jnp.float32))
    Xa = Xa.at[:N, F].set(1.0)                     # ones column -> bias term
    Xa = Xa.astype(mxu_dtype)

    W1a = jnp.zeros((FA_P, HID1_P), jnp.float32)
    W1a = W1a.at[:F, :HID1].set(W1)
    W1a = W1a.at[F, :HID1].set(b1.reshape(-1))     # b1 folded as extra row
    W1a = W1a.astype(mxu_dtype)

    W2_p = _pad2d(W2, HID1_P, HID2_P, mxu_dtype)
    b2_p = _pad2d(b2.reshape(1, -1), 1, HID2_P, jnp.float32)   # f32 epilogue
    Wfc_p = _pad2d(Wfc, HID2_P, NOUT_P, mxu_dtype)
    bfc_p = _pad2d(bfc.reshape(1, -1), 1, NOUT_P, jnp.float32)

    if use_fused:
        # ---- single launch, everything resident in VMEM --------------------
        flops = (2 * Np * Np * (FA_P + HID2_P)
                 + 2 * Np * (FA_P * HID1_P + HID1_P * HID2_P + HID2_P * NOUT_P))
        bytes_acc = ((Np * Np + Np * FA_P + FA_P * HID1_P
                      + HID1_P * HID2_P + HID2_P * NOUT_P) * itm
                     + Np * NOUT_P * 4)
        out_p = pl.pallas_call(
            _fused_kernel,
            out_shape=jax.ShapeDtypeStruct((Np, NOUT_P), jnp.float32),
            compiler_params=pltpu.CompilerParams(
                vmem_limit_bytes=VMEM_LIMIT),
            cost_estimate=pl.CostEstimate(
                flops=flops, transcendentals=Np * HID2_P,
                bytes_accessed=bytes_acc),
        )(A_p, Xa, W1a, W2_p, b2_p, Wfc_p, bfc_p)
        return out_p[:N, :NOUT]

    # ---- blocked two-kernel path for large graphs ---------------------------
    cparams = pltpu.CompilerParams(
        dimension_semantics=("parallel", "arbitrary"),
        vmem_limit_bytes=VMEM_LIMIT,
    )
    grid = (Np // tm, Np // tk)

    ce1 = pl.CostEstimate(
        flops=2 * Np * Np * FA_P + 2 * Np * (FA_P * HID1_P + HID1_P * HID2_P),
        transcendentals=0,
        bytes_accessed=(Np * Np + Np * FA_P + FA_P * HID1_P
                        + HID1_P * HID2_P + Np * HID2_P) * itm)
    h2_dense = pl.pallas_call(
        functools.partial(_layer12_kernel, tk=tk),
        out_shape=jax.ShapeDtypeStruct((Np, HID2_P), mxu_dtype),
        grid_spec=pltpu.PrefetchScalarGridSpec(
            num_scalar_prefetch=0,
            grid=grid,
            in_specs=[
                pl.BlockSpec((tm, tk), lambda i, k: (i, k)),          # A tile
                pl.BlockSpec((Np, FA_P), lambda i, k: (0, 0)),        # Xa (resident)
                pl.BlockSpec((FA_P, HID1_P), lambda i, k: (0, 0)),    # W1_aug
                pl.BlockSpec((HID1_P, HID2_P), lambda i, k: (0, 0)),  # W2
                pl.BlockSpec((1, HID2_P), lambda i, k: (0, 0)),       # b2
            ],
            out_specs=pl.BlockSpec((tm, HID2_P), lambda i, k: (i, 0)),
            scratch_shapes=[pltpu.VMEM((tm, FA_P), jnp.float32)],
        ),
        compiler_params=cparams,
        cost_estimate=ce1,
    )(A_p, Xa, W1a, W2_p, b2_p)

    ce2 = pl.CostEstimate(
        flops=2 * Np * Np * HID2_P + 2 * Np * HID2_P * NOUT_P,
        transcendentals=Np * HID2_P,
        bytes_accessed=(Np * Np + Np * HID2_P + HID2_P * NOUT_P) * itm
                        + Np * NOUT_P * 4)
    out_p = pl.pallas_call(
        functools.partial(_layer3_kernel, tk=tk),
        out_shape=jax.ShapeDtypeStruct((Np, NOUT_P), jnp.float32),
        grid_spec=pltpu.PrefetchScalarGridSpec(
            num_scalar_prefetch=0,
            grid=grid,
            in_specs=[
                pl.BlockSpec((tm, tk), lambda i, k: (i, k)),          # A tile
                pl.BlockSpec((Np, HID2_P), lambda i, k: (0, 0)),      # H2 (resident)
                pl.BlockSpec((HID2_P, NOUT_P), lambda i, k: (0, 0)),  # Wfc
                pl.BlockSpec((1, NOUT_P), lambda i, k: (0, 0)),       # bfc
            ],
            out_specs=pl.BlockSpec((tm, NOUT_P), lambda i, k: (i, 0)),
            scratch_shapes=[pltpu.VMEM((tm, HID2_P), jnp.float32)],
        ),
        compiler_params=cparams,
        cost_estimate=ce2,
    )(A_p, h2_dense, Wfc_p, bfc_p)

    return out_p[:N, :NOUT]


# --------------------------------------------------------------------------
# Parameter init mirroring the PyTorch module's shapes.
# --------------------------------------------------------------------------
def init_params(key, x_size):
    k1, k2, k3, k4, k5, k6 = jax.random.split(key, 6)
    var1 = 2.0 / (HID1 + x_size)
    var2 = 2.0 / (HID2 + HID1)
    W1 = jax.random.normal(k1, (x_size, HID1), jnp.float32) * var1
    b1 = jax.random.normal(k2, (1, HID1), jnp.float32) * var1
    W2 = jax.random.normal(k3, (HID1, HID2), jnp.float32) * var2
    b2 = jax.random.normal(k4, (1, HID2), jnp.float32) * var2
    # fc1 = nn.Linear(130, 6): kernel uses weight.T
    bound = 1.0 / jnp.sqrt(float(HID2))
    Wfc = jax.random.uniform(k5, (HID2, NOUT), jnp.float32, -bound, bound)
    bfc = jax.random.uniform(k6, (1, NOUT), jnp.float32, -bound, bound)
    return W1, b1, W2, b2, Wfc, bfc


if __name__ == "__main__":
    key = jax.random.PRNGKey(0)
    k_x, k_a, k_p = jax.random.split(key, 3)

    N = 200        # number of graph nodes
    X_size = 16    # input feature dim

    X = jax.random.normal(k_x, (N, X_size), jnp.float32)
    # Row-normalized "adjacency": |random| + I, rows sum to 1.
    A = jnp.abs(jax.random.normal(k_a, (N, N), jnp.float32)) + jnp.eye(N)
    A_hat = A / jnp.sum(A, axis=-1, keepdims=True)

    W1, b1, W2, b2, Wfc, bfc = init_params(k_p, X_size)

    # Pure-JAX reference of the original (un-reassociated) math.
    h = X @ W1 + b1
    h = jnp.maximum(A_hat @ h, 0.0)
    h = h @ W2 + b2
    h = A_hat @ h
    h = jax.nn.log_softmax(h, axis=-1)
    ref = h @ Wfc + bfc

    # 1) fused single-kernel path, f32 MXU operands (exact check).
    out_fused_f32 = jax.block_until_ready(
        gcn_forward(X, A_hat, W1, b1, W2, b2, Wfc, bfc,
                    mxu_dtype=jnp.float32))
    # 2) blocked two-kernel path, f32, forced 2x2 grid (exact check).
    out_tiled_f32 = jax.block_until_ready(
        gcn_forward(X, A_hat, W1, b1, W2, b2, Wfc, bfc,
                    mxu_dtype=jnp.float32, force_tiled=True, tm=128, tk=128))
    # 3) default path: fused + bf16 MXU operands (loose check).
    out_fused_bf16 = jax.block_until_ready(
        gcn_forward(X, A_hat, W1, b1, W2, b2, Wfc, bfc))
    # 4) blocked path in bf16 (the large-graph production configuration).
    out_tiled_bf16 = jax.block_until_ready(
        gcn_forward(X, A_hat, W1, b1, W2, b2, Wfc, bfc,
                    force_tiled=True, tm=128, tk=128))

    for o in (out_fused_f32, out_tiled_f32, out_fused_bf16, out_tiled_bf16):
        assert o.shape == (N, NOUT)

    err_ff = float(jnp.max(jnp.abs(out_fused_f32 - ref)))
    err_tf = float(jnp.max(jnp.abs(out_tiled_f32 - ref)))
    err_fb = float(jnp.max(jnp.abs(out_fused_bf16 - ref)))
    err_tb = float(jnp.max(jnp.abs(out_tiled_bf16 - ref)))
    assert err_ff < 2e-4, err_ff
    assert err_tf < 2e-4, err_tf
    assert err_fb < 1e-1, err_fb     # bf16 MXU operands: loose tolerance
    assert err_tb < 1e-1, err_tb

    print("KERNEL_OK")
</pallas_src>

<mosaic_0001>
module attributes {stable_mosaic.version = 11 : i64} {
  func.func @_fused_kernel(%arg0: memref<256x256xf32, #tpu.memory_space<vmem>>, %arg1: memref<256x128xf32, #tpu.memory_space<vmem>>, %arg2: memref<128x384xf32, #tpu.memory_space<vmem>>, %arg3: memref<384x256xf32, #tpu.memory_space<vmem>>, %arg4: memref<1x256xf32, #tpu.memory_space<vmem>>, %arg5: memref<256x128xf32, #tpu.memory_space<vmem>>, %arg6: memref<1x128xf32, #tpu.memory_space<vmem>>, %arg7: memref<256x128xf32, #tpu.memory_space<vmem>>) attributes {dimension_semantics = [], scalar_prefetch = 0 : i64, scratch_operands = 0 : i64, tpu.core_type = #tpu.core_type<tc>} {
    %c0 = arith.constant 0 : index
    %c0_0 = arith.constant 0 : index
    %0 = vector.load %arg0[%c0, %c0_0] : memref<256x256xf32, #tpu.memory_space<vmem>>, vector<256x256xf32>
    %c0_1 = arith.constant 0 : index
    %c0_2 = arith.constant 0 : index
    %1 = vector.load %arg1[%c0_1, %c0_2] : memref<256x128xf32, #tpu.memory_space<vmem>>, vector<256x128xf32>
    %cst = arith.constant dense<0.000000e+00> : vector<256x128xf32>
    %2 = tpu.matmul %0, %1, %cst {dimension_numbers = #tpu.dot_dimension_numbers<[1], [0], [0], [1], [0, 0, 1, 1], [], []>} : vector<256x256xf32>, vector<256x128xf32>, vector<256x128xf32> -> vector<256x128xf32>
    %c0_3 = arith.constant 0 : index
    %c0_4 = arith.constant 0 : index
    %3 = vector.load %arg2[%c0_3, %c0_4] : memref<128x384xf32, #tpu.memory_space<vmem>>, vector<128x384xf32>
    %cst_5 = arith.constant dense<0.000000e+00> : vector<256x384xf32>
    %4 = tpu.matmul %2, %3, %cst_5 {dimension_numbers = #tpu.dot_dimension_numbers<[1], [0], [0], [1], [0, 0, 1, 1], [], []>} : vector<256x128xf32>, vector<128x384xf32>, vector<256x384xf32> -> vector<256x384xf32>
    %cst_6 = arith.constant 0.000000e+00 : f32
    %5 = vector.broadcast %cst_6 : f32 to vector<256x384xf32>
    %6 = arith.maximumf %4, %5 : vector<256x384xf32>
    %c0_7 = arith.constant 0 : index
    %c0_8 = arith.constant 0 : index
    %7 = vector.load %arg3[%c0_7, %c0_8] : memref<384x256xf32, #tpu.memory_space<vmem>>, vector<384x256xf32>
    %cst_9 = arith.constant dense<0.000000e+00> : vector<256x256xf32>
    %8 = tpu.matmul %6, %7, %cst_9 {dimension_numbers = #tpu.dot_dimension_numbers<[1], [0], [0], [1], [0, 0, 1, 1], [], []>} : vector<256x384xf32>, vector<384x256xf32>, vector<256x256xf32> -> vector<256x256xf32>
    %c0_10 = arith.constant 0 : index
    %c0_11 = arith.constant 0 : index
    %9 = vector.load %arg4[%c0_10, %c0_11] : memref<1x256xf32, #tpu.memory_space<vmem>>, vector<1x256xf32>
    %10 = vector.broadcast %9 : vector<1x256xf32> to vector<256x256xf32>
    %11 = arith.addf %8, %10 : vector<256x256xf32>
    %c0_12 = arith.constant 0 : index
    %c0_13 = arith.constant 0 : index
    %12 = vector.load %arg0[%c0_12, %c0_13] : memref<256x256xf32, #tpu.memory_space<vmem>>, vector<256x256xf32>
    %cst_14 = arith.constant dense<0.000000e+00> : vector<256x256xf32>
    %13 = tpu.matmul %12, %11, %cst_14 {dimension_numbers = #tpu.dot_dimension_numbers<[1], [0], [0], [1], [0, 0, 1, 1], [], []>} : vector<256x256xf32>, vector<256x256xf32>, vector<256x256xf32> -> vector<256x256xf32>
    %14 = tpu.iota {dimensions = array<i32: 1>} : vector<256x256xi32>
    %c130_i32 = arith.constant 130 : i32
    %15 = vector.broadcast %c130_i32 : i32 to vector<256x256xi32>
    %16 = arith.cmpi slt, %14, %15 : vector<256x256xi32>
    %cst_15 = arith.constant 0xFF800000 : f32
    %17 = vector.broadcast %cst_15 : f32 to vector<256x256xf32>
    %18 = arith.select %16, %13, %17 : vector<256x256xi1>, vector<256x256xf32>
    %cst_16 = arith.constant dense<0xFF800000> : vector<256xf32>
    %19 = vector.multi_reduction <maximumf>, %18, %cst_16 [1] : vector<256x256xf32> to vector<256xf32>
    %20 = vector.shape_cast %19 : vector<256xf32> to vector<256x1xf32>
    %21 = vector.broadcast %20 : vector<256x1xf32> to vector<256x256xf32>
    %22 = arith.subf %13, %21 : vector<256x256xf32>
    %23 = math.exp %22 : vector<256x256xf32>
    %cst_17 = arith.constant 0.000000e+00 : f32
    %24 = vector.broadcast %cst_17 : f32 to vector<256x256xf32>
    %25 = arith.select %16, %23, %24 : vector<256x256xi1>, vector<256x256xf32>
    %cst_18 = arith.constant dense<0.000000e+00> : vector<256xf32>
    %26 = vector.multi_reduction <add>, %25, %cst_18 [1] : vector<256x256xf32> to vector<256xf32>
    %27 = vector.shape_cast %26 : vector<256xf32> to vector<256x1xf32>
    %28 = math.log %27 : vector<256x1xf32>
    %29 = vector.broadcast %28 : vector<256x1xf32> to vector<256x256xf32>
    %30 = arith.subf %22, %29 : vector<256x256xf32>
    %cst_19 = arith.constant 0.000000e+00 : f32
    %31 = vector.broadcast %cst_19 : f32 to vector<256x256xf32>
    %32 = arith.select %16, %30, %31 : vector<256x256xi1>, vector<256x256xf32>
    %c0_20 = arith.constant 0 : index
    %c0_21 = arith.constant 0 : index
    %33 = vector.load %arg5[%c0_20, %c0_21] : memref<256x128xf32, #tpu.memory_space<vmem>>, vector<256x128xf32>
    %cst_22 = arith.constant dense<0.000000e+00> : vector<256x128xf32>
    %34 = tpu.matmul %32, %33, %cst_22 {dimension_numbers = #tpu.dot_dimension_numbers<[1], [0], [0], [1], [0, 0, 1, 1], [], []>} : vector<256x256xf32>, vector<256x128xf32>, vector<256x128xf32> -> vector<256x128xf32>
    %c0_23 = arith.constant 0 : index
    %c0_24 = arith.constant 0 : index
    %35 = vector.load %arg6[%c0_23, %c0_24] : memref<1x128xf32, #tpu.memory_space<vmem>>, vector<1x128xf32>
    %36 = vector.broadcast %35 : vector<1x128xf32> to vector<256x128xf32>
    %37 = arith.addf %34, %36 : vector<256x128xf32>
    %c0_25 = arith.constant 0 : index
    %c0_26 = arith.constant 0 : index
    %38 = vector.load %arg7[%c0_25, %c0_26] : memref<256x128xf32, #tpu.memory_space<vmem>>, vector<256x128xf32>
    tpu.vector_store %arg7[%c0_25, %c0_26], %37 {strides = array<i32>} : memref<256x128xf32, #tpu.memory_space<vmem>>, vector<256x128xf32>,
    return
  }
}

</mosaic_0001>

<llo_original>
// kernel: tpu_custom_call.1
$region0: #{tpu_custom_call.1}
  #allocation0 [shape = 'u32[]', space=smem, size = 0x4, offset = 0x4, fixed_abs, tag = 'smem constant byte address 0x4 - core index']
  #allocation1 [shape = 'u32[72,128]{1,0:T(1,128)}', space=vmem, size = 0x9000, scoped, tag = 'internal scratch']
  %s0 = inlined_call_operand.hbm [shape: f32[256,256], index: 0, kind: input, shape index: {}]
  %s1 = inlined_call_operand.hbm [shape: f32[256,128], index: 1, kind: input, shape index: {}]
  %s2 = inlined_call_operand.hbm [shape: f32[128,384], index: 2, kind: input, shape index: {}]
  %s3 = inlined_call_operand.hbm [shape: f32[384,256], index: 3, kind: input, shape index: {}]
  %s4 = inlined_call_operand.vmem [shape: f32[1,256], index: 4, kind: input, shape index: {}]
  %s5 = inlined_call_operand.hbm [shape: f32[256,128], index: 5, kind: input, shape index: {}]
  %s6 = inlined_call_operand.vmem [shape: f32[1,128], index: 6, kind: input, shape index: {}]
  %s7 = inlined_call_operand.hbm [shape: f32[256,128], index: 7, kind: output, shape index: {}]
  %s8 = sld [smem:[#allocation0]]
  $region58: #{tpu_custom_call.1} parent=0
    _
  %s10 = ssub.s32 1, %s8
  %s11 = scalar_select 0, %s10, %s8
  $region1: #{tpu_custom_call.1} parent=0
    #allocation2 [shape = 'u8[262144]{0}', space=vmem, size = 0x40000, scoped, tag = 'input window, operand 0, single buffered']
    #allocation3 [shape = 's32[1]{0}', space=sflag, size = 0x4, scoped, tag = 'scoped memory for tpu_custom_call.1']
    #allocation4 [shape = 's32[1]{0}', space=sflag, size = 0x4, scoped, tag = 'scoped memory for tpu_custom_call.1']
    #allocation5 [shape = 'u8[131072]{0}', space=vmem, size = 0x20000, scoped, tag = 'input window, operand 1, single buffered']
    #allocation6 [shape = 's32[1]{0}', space=sflag, size = 0x4, scoped, tag = 'scoped memory for tpu_custom_call.1']
    #allocation7 [shape = 'u8[196608]{0}', space=vmem, size = 0x30000, scoped, tag = 'input window, operand 2, single buffered']
    #allocation8 [shape = 'u8[393216]{0}', space=vmem, size = 0x60000, scoped, tag = 'input window, operand 3, single buffered']
    #allocation9 [shape = 's32[1]{0}', space=sflag, size = 0x4, scoped, tag = 'scoped memory for tpu_custom_call.1']
    #allocation10 [shape = 'u8[131072]{0}', space=vmem, size = 0x20000, scoped, tag = 'input window, operand 5, single buffered']
    #allocation11 [shape = 'u8[131072]{0}', space=vmem, size = 0x20000, scoped, tag = 'output window, operand 0, single buffered']
    %12 = vsyncpa [#allocation3], 0
    %13 = vsyncpa [#allocation6], 0
    %14 = vsyncpa [#allocation9], 0
    %15 = vsyncpa [#allocation4], 0
    // Predicated region
    $region2: #{tpu_custom_call.1} parent=1 // pred_check
      _
    $region3: #{tpu_custom_call.1} parent=1 // pred_check_branch
      %17 = sbr.rel (0) target = $region5
    $region4: #{tpu_custom_call.1} parent=1 // pred_region
      %19 = vsyncadd [#allocation3], 0
      %s20 = sshll.u32 %s0, 4
      %s21 = int_to_ptr.hbm [resolvable:$true] %s20
      %s22 = sshll.u32 [#allocation2], 4
      %s23 = int_to_ptr.vmem [resolvable:$true] %s22
      %28 = dma.hbm_to_vmem [thread:$0]  %s21, 8192, %s23, [#allocation3], 256, 256, 16
    $region5: #{tpu_custom_call.1} parent=1 // pred_fallthru
      _
    // Predicated region
    $region6: #{tpu_custom_call.1} parent=1 // pred_check
      _
    $region7: #{tpu_custom_call.1} parent=1 // pred_check_branch
      %30 = sbr.rel (0) target = $region9
    $region8: #{tpu_custom_call.1} parent=1 // pred_region
      %32 = vsyncadd [#allocation6], 0
      %s33 = sshll.u32 %s1, 4
      %s34 = int_to_ptr.hbm [resolvable:$true] %s33
      %s35 = sshll.u32 [#allocation5], 4
      %s36 = int_to_ptr.vmem [resolvable:$true] %s35
      %41 = dma.hbm_to_vmem [thread:$0]  %s34, 4096, %s36, [#allocation6], 128, 128, 8
    $region9: #{tpu_custom_call.1} parent=1 // pred_fallthru
      _
    // Predicated region
    $region10: #{tpu_custom_call.1} parent=1 // pred_check
      _
    $region11: #{tpu_custom_call.1} parent=1 // pred_check_branch
      %43 = sbr.rel (0) target = $region13
    $region12: #{tpu_custom_call.1} parent=1 // pred_region
      %45 = vsyncadd [#allocation6], 0
      %s46 = sshll.u32 %s2, 4
      %s47 = int_to_ptr.hbm [resolvable:$true] %s46
      %s48 = sshll.u32 [#allocation7], 4
      %s49 = int_to_ptr.vmem [resolvable:$true] %s48
      %54 = dma.hbm_to_vmem [thread:$0]  %s47, 6144, %s49, [#allocation6], 384, 384, 24
    $region13: #{tpu_custom_call.1} parent=1 // pred_fallthru
      _
    // Predicated region
    $region14: #{tpu_custom_call.1} parent=1 // pred_check
      _
    $region15: #{tpu_custom_call.1} parent=1 // pred_check_branch
      %56 = sbr.rel (0) target = $region17
    $region16: #{tpu_custom_call.1} parent=1 // pred_region
      %58 = vsyncadd [#allocation9], 0
      %s59 = sshll.u32 %s3, 4
      %s60 = int_to_ptr.hbm [resolvable:$true] %s59
      %s61 = sshll.u32 [#allocation8], 4
      %s62 = int_to_ptr.vmem [resolvable:$true] %s61
      %67 = dma.hbm_to_vmem [thread:$0]  %s60, 12288, %s62, [#allocation9], 256, 256, 16
    $region17: #{tpu_custom_call.1} parent=1 // pred_fallthru
      _
    // Predicated region
    $region18: #{tpu_custom_call.1} parent=1 // pred_check
      _
    $region19: #{tpu_custom_call.1} parent=1 // pred_check_branch
      %69 = sbr.rel (0) target = $region21
    $region20: #{tpu_custom_call.1} parent=1 // pred_region
      _
    $region21: #{tpu_custom_call.1} parent=1 // pred_fallthru
      _
    // Predicated region
    $region22: #{tpu_custom_call.1} parent=1 // pred_check
      _
    $region23: #{tpu_custom_call.1} parent=1 // pred_check_branch
      %71 = sbr.rel (0) target = $region25
    $region24: #{tpu_custom_call.1} parent=1 // pred_region
      %73 = vsyncadd [#allocation9], 0
      %s74 = sshll.u32 %s5, 4
      %s75 = int_to_ptr.hbm [resolvable:$true] %s74
      %s76 = sshll.u32 [#allocation10], 4
      %s77 = int_to_ptr.vmem [resolvable:$true] %s76
      %82 = dma.hbm_to_vmem [thread:$0]  %s75, 4096, %s77, [#allocation9], 128, 128, 8
    $region25: #{tpu_custom_call.1} parent=1 // pred_fallthru
      _
    // Predicated region
    $region26: #{tpu_custom_call.1} parent=1 // pred_check
      _
    $region27: #{tpu_custom_call.1} parent=1 // pred_check_branch
      %84 = sbr.rel (0) target = $region29
    $region28: #{tpu_custom_call.1} parent=1 // pred_region
      _
    $region29: #{tpu_custom_call.1} parent=1 // pred_fallthru
      _
    // Predicated region
    $region30: #{tpu_custom_call.1} parent=1 // pred_check
      _
    $region31: #{tpu_custom_call.1} parent=1 // pred_check_branch
      %86 = sbr.rel (0) target = $region33
    $region32: #{tpu_custom_call.1} parent=1 // pred_region
      %88 = dma.done [#allocation3], 8192
    $region33: #{tpu_custom_call.1} parent=1 // pred_fallthru
      _
    // Predicated region
    $region34: #{tpu_custom_call.1} parent=1 // pred_check
      _
    $region35: #{tpu_custom_call.1} parent=1 // pred_check_branch
      %90 = sbr.rel (0) target = $region37
    $region36: #{tpu_custom_call.1} parent=1 // pred_region
      %92 = dma.done [#allocation6], 4096
    $region37: #{tpu_custom_call.1} parent=1 // pred_fallthru
      _
    // Predicated region
    $region38: #{tpu_custom_call.1} parent=1 // pred_check
      _
    $region39: #{tpu_custom_call.1} parent=1 // pred_check_branch
      %94 = sbr.rel (0) target = $region41
    $region40: #{tpu_custom_call.1} parent=1 // pred_region
      %96 = dma.done [#allocation6], 6144
    $region41: #{tpu_custom_call.1} parent=1 // pred_fallthru
      _
    // Predicated region
    $region42: #{tpu_custom_call.1} parent=1 // pred_check
      _
    $region43: #{tpu_custom_call.1} parent=1 // pred_check_branch
      %98 = sbr.rel (0) target = $region45
    $region44: #{tpu_custom_call.1} parent=1 // pred_region
      %100 = dma.done [#allocation9], 12288
    $region45: #{tpu_custom_call.1} parent=1 // pred_fallthru
      _
    // Predicated region
    $region46: #{tpu_custom_call.1} parent=1 // pred_check
      _
    $region47: #{tpu_custom_call.1} parent=1 // pred_check_branch
      %102 = sbr.rel (0) target = $region49
    $region48: #{tpu_custom_call.1} parent=1 // pred_region
      %104 = dma.done [#allocation9], 4096
    $region49: #{tpu_custom_call.1} parent=1 // pred_fallthru
      _
    %v105 = vld [vmem:[#allocation2] sm:$0xff]
    %v106 = vld [vmem:[#allocation2 + $0x8] sm:$0xff]
    %v107 = vld [vmem:[#allocation2 + $0x10] sm:$0xff]
    %v108 = vld [vmem:[#allocation2 + $0x18] sm:$0xff]
    %v109 = vld [vmem:[#allocation2 + $0x20] sm:$0xff]
    %v110 = vld [vmem:[#allocation2 + $0x28] sm:$0xff]
    %v111 = vld [vmem:[#allocation2 + $0x30] sm:$0xff]
    %v112 = vld [vmem:[#allocation2 + $0x38] sm:$0xff]
    %v113 = vld [vmem:[#allocation2 + $0x40] sm:$0xff]
    %v114 = vld [vmem:[#allocation2 + $0x48] sm:$0xff]
    %v115 = vld [vmem:[#allocation2 + $0x50] sm:$0xff]
    %v116 = vld [vmem:[#allocation2 + $0x58] sm:$0xff]
    %v117 = vld [vmem:[#allocation2 + $0x60] sm:$0xff]
    %v118 = vld [vmem:[#allocation2 + $0x68] sm:$0xff]
    %v119 = vld [vmem:[#allocation2 + $0x70] sm:$0xff]
    %v120 = vld [vmem:[#allocation2 + $0x78] sm:$0xff]
    %v121 = vld [vmem:[#allocation2 + $0x80] sm:$0xff]
    %v122 = vld [vmem:[#allocation2 + $0x88] sm:$0xff]
    %v123 = vld [vmem:[#allocation2 + $0x90] sm:$0xff]
    %v124 = vld [vmem:[#allocation2 + $0x98] sm:$0xff]
    %v125 = vld [vmem:[#allocation2 + $0xa0] sm:$0xff]
    %v126 = vld [vmem:[#allocation2 + $0xa8] sm:$0xff]
    %v127 = vld [vmem:[#allocation2 + $0xb0] sm:$0xff]
    %v128 = vld [vmem:[#allocation2 + $0xb8] sm:$0xff]
    %v129 = vld [vmem:[#allocation2 + $0xc0] sm:$0xff]
    %v130 = vld [vmem:[#allocation2 + $0xc8] sm:$0xff]
    %v131 = vld [vmem:[#allocation2 + $0xd0] sm:$0xff]
    %v132 = vld [vmem:[#allocation2 + $0xd8] sm:$0xff]
    %v133 = vld [vmem:[#allocation2 + $0xe0] sm:$0xff]
    %v134 = vld [vmem:[#allocation2 + $0xe8] sm:$0xff]
    %v135 = vld [vmem:[#allocation2 + $0xf0] sm:$0xff]
    %v136 = vld [vmem:[#allocation2 + $0xf8] sm:$0xff]
    %v137 = vld [vmem:[#allocation2 + $0x100] sm:$0xff]
    %v138 = vld [vmem:[#allocation2 + $0x108] sm:$0xff]
    %v139 = vld [vmem:[#allocation2 + $0x110] sm:$0xff]
    %v140 = vld [vmem:[#allocation2 + $0x118] sm:$0xff]
    %v141 = vld [vmem:[#allocation2 + $0x120] sm:$0xff]
    %v142 = vld [vmem:[#allocation2 + $0x128] sm:$0xff]
    %v143 = vld [vmem:[#allocation2 + $0x130] sm:$0xff]
    %v144 = vld [vmem:[#allocation2 + $0x138] sm:$0xff]
    %v145 = vld [vmem:[#allocation2 + $0x140] sm:$0xff]
    %v146 = vld [vmem:[#allocation2 + $0x148] sm:$0xff]
    %v147 = vld [vmem:[#allocation2 + $0x150] sm:$0xff]
    %v148 = vld [vmem:[#allocation2 + $0x158] sm:$0xff]
    %v149 = vld [vmem:[#allocation2 + $0x160] sm:$0xff]
    %v150 = vld [vmem:[#allocation2 + $0x168] sm:$0xff]
    %v151 = vld [vmem:[#allocation2 + $0x170] sm:$0xff]
    %v152 = vld [vmem:[#allocation2 + $0x178] sm:$0xff]
    %v153 = vld [vmem:[#allocation2 + $0x180] sm:$0xff]
    %v154 = vld [vmem:[#allocation2 + $0x188] sm:$0xff]
    %v155 = vld [vmem:[#allocation2 + $0x190] sm:$0xff]
    %v156 = vld [vmem:[#allocation2 + $0x198] sm:$0xff]
    %v157 = vld [vmem:[#allocation2 + $0x1a0] sm:$0xff]
    %v158 = vld [vmem:[#allocation2 + $0x1a8] sm:$0xff]
    %v159 = vld [vmem:[#allocation2 + $0x1b0] sm:$0xff]
    %v160 = vld [vmem:[#allocation2 + $0x1b8] sm:$0xff]
    %v161 = vld [vmem:[#allocation2 + $0x1c0] sm:$0xff]
    %v162 = vld [vmem:[#allocation2 + $0x1c8] sm:$0xff]
    %v163 = vld [vmem:[#allocation2 + $0x1d0] sm:$0xff]
    %v164 = vld [vmem:[#allocation2 + $0x1d8] sm:$0xff]
    %v165 = vld [vmem:[#allocation2 + $0x1e0] sm:$0xff]
    %v166 = vld [vmem:[#allocation2 + $0x1e8] sm:$0xff]
    %v167 = vld [vmem:[#allocation2 + $0x1f0] sm:$0xff]
    %v168 = vld [vmem:[#allocation2 + $0x1f8] sm:$0xff]
    %v169 = vld [vmem:[#allocation5] sm:$0xff]
    %v170 = vld [vmem:[#allocation5 + $0x8] sm:$0xff]
    %v171 = vld [vmem:[#allocation5 + $0x10] sm:$0xff]
    %v172 = vld [vmem:[#allocation5 + $0x18] sm:$0xff]
    %v173 = vld [vmem:[#allocation5 + $0x20] sm:$0xff]
    %v174 = vld [vmem:[#allocation5 + $0x28] sm:$0xff]
    %v175 = vld [vmem:[#allocation5 + $0x30] sm:$0xff]
    %v176 = vld [vmem:[#allocation5 + $0x38] sm:$0xff]
    %v177 = vld [vmem:[#allocation5 + $0x40] sm:$0xff]
    %v178 = vld [vmem:[#allocation5 + $0x48] sm:$0xff]
    %v179 = vld [vmem:[#allocation5 + $0x50] sm:$0xff]
    %v180 = vld [vmem:[#allocation5 + $0x58] sm:$0xff]
    %v181 = vld [vmem:[#allocation5 + $0x60] sm:$0xff]
    %v182 = vld [vmem:[#allocation5 + $0x68] sm:$0xff]
    %v183 = vld [vmem:[#allocation5 + $0x70] sm:$0xff]
    %v184 = vld [vmem:[#allocation5 + $0x78] sm:$0xff]
    %v185 = vld [vmem:[#allocation5 + $0x80] sm:$0xff]
    %v186 = vld [vmem:[#allocation5 + $0x88] sm:$0xff]
    %v187 = vld [vmem:[#allocation5 + $0x90] sm:$0xff]
    %v188 = vld [vmem:[#allocation5 + $0x98] sm:$0xff]
    %v189 = vld [vmem:[#allocation5 + $0xa0] sm:$0xff]
    %v190 = vld [vmem:[#allocation5 + $0xa8] sm:$0xff]
    %v191 = vld [vmem:[#allocation5 + $0xb0] sm:$0xff]
    %v192 = vld [vmem:[#allocation5 + $0xb8] sm:$0xff]
    %v193 = vld [vmem:[#allocation5 + $0xc0] sm:$0xff]
    %v194 = vld [vmem:[#allocation5 + $0xc8] sm:$0xff]
    %v195 = vld [vmem:[#allocation5 + $0xd0] sm:$0xff]
    %v196 = vld [vmem:[#allocation5 + $0xd8] sm:$0xff]
    %v197 = vld [vmem:[#allocation5 + $0xe0] sm:$0xff]
    %v198 = vld [vmem:[#allocation5 + $0xe8] sm:$0xff]
    %v199 = vld [vmem:[#allocation5 + $0xf0] sm:$0xff]
    %v200 = vld [vmem:[#allocation5 + $0xf8] sm:$0xff]
    %201 = vmatpush.msra.mxu0 %v184
    %202 = vmatpush.msra.mxu0 %v183
    %203 = vmatpush.msra.mxu0 %v182
    %204 = vmatpush.msra.mxu0 %v181
    %205 = vmatpush.msra.mxu0 %v180
    %206 = vmatpush.msra.mxu0 %v179
    %207 = vmatpush.msra.mxu0 %v178
    %208 = vmatpush.msra.mxu0 %v177
    %209 = vmatpush.msra.mxu0 %v176
    %210 = vmatpush.msra.mxu0 %v175
    %211 = vmatpush.msra.mxu0 %v174
    %212 = vmatpush.msra.mxu0 %v173
    %213 = vmatpush.msra.mxu0 %v172
    %214 = vmatpush.msra.mxu0 %v171
    %215 = vmatpush.msra.mxu0 %v170
    %216 = vmatpush.msra.mxu0 %v169
    %217 = vmatmul.f32.gmra.mxu0 %v105
    %v218 = vpop.f32.mrf.mxu0
    %v219 = vadd.f32 0.0, %v218
    %220 = vmatmul.f32.gmra.mxu0 %v107
    %v221 = vpop.f32.mrf.mxu0
    %v222 = vadd.f32 0.0, %v221
    %223 = vmatmul.f32.gmra.mxu0 %v109
    %v224 = vpop.f32.mrf.mxu0
    %v225 = vadd.f32 0.0, %v224
    %226 = vmatmul.f32.gmra.mxu0 %v111
    %v227 = vpop.f32.mrf.mxu0
    %v228 = vadd.f32 0.0, %v227
    %229 = vmatmul.f32.gmra.mxu0 %v113
    %v230 = vpop.f32.mrf.mxu0
    %v231 = vadd.f32 0.0, %v230
    %232 = vmatmul.f32.gmra.mxu0 %v115
    %v233 = vpop.f32.mrf.mxu0
    %v234 = vadd.f32 0.0, %v233
    %235 = vmatmul.f32.gmra.mxu0 %v117
    %v236 = vpop.f32.mrf.mxu0
    %v237 = vadd.f32 0.0, %v236
    %238 = vmatmul.f32.gmra.mxu0 %v119
    %v239 = vpop.f32.mrf.mxu0
    %v240 = vadd.f32 0.0, %v239
    %241 = vmatmul.f32.gmra.mxu0 %v121
    %v242 = vpop.f32.mrf.mxu0
    %v243 = vadd.f32 0.0, %v242
    %244 = vmatmul.f32.gmra.mxu0 %v123
    %v245 = vpop.f32.mrf.mxu0
    %v246 = vadd.f32 0.0, %v245
    %247 = vmatmul.f32.gmra.mxu0 %v125
    %v248 = vpop.f32.mrf.mxu0
    %v249 = vadd.f32 0.0, %v248
    %250 = vmatmul.f32.gmra.mxu0 %v127
    %v251 = vpop.f32.mrf.mxu0
    %v252 = vadd.f32 0.0, %v251
    %253 = vmatmul.f32.gmra.mxu0 %v129
    %v254 = vpop.f32.mrf.mxu0
    %v255 = vadd.f32 0.0, %v254
    %256 = vmatmul.f32.gmra.mxu0 %v131
    %v257 = vpop.f32.mrf.mxu0
    %v258 = vadd.f32 0.0, %v257
    %259 = vmatmul.f32.gmra.mxu0 %v133
    %v260 = vpop.f32.mrf.mxu0
    %v261 = vadd.f32 0.0, %v260
    %262 = vmatmul.f32.gmra.mxu0 %v135
    %v263 = vpop.f32.mrf.mxu0
    %v264 = vadd.f32 0.0, %v263
    %265 = vmatmul.f32.gmra.mxu0 %v137
    %v266 = vpop.f32.mrf.mxu0
    %v267 = vadd.f32 0.0, %v266
    %268 = vmatmul.f32.gmra.mxu0 %v139
    %v269 = vpop.f32.mrf.mxu0
    %v270 = vadd.f32 0.0, %v269
    %271 = vmatmul.f32.gmra.mxu0 %v141
    %v272 = vpop.f32.mrf.mxu0
    %v273 = vadd.f32 0.0, %v272
    %274 = vmatmul.f32.gmra.mxu0 %v143
    %v275 = vpop.f32.mrf.mxu0
    %v276 = vadd.f32 0.0, %v275
    %277 = vmatmul.f32.gmra.mxu0 %v145
    %v278 = vpop.f32.mrf.mxu0
    %v279 = vadd.f32 0.0, %v278
    %280 = vmatmul.f32.gmra.mxu0 %v147
    %v281 = vpop.f32.mrf.mxu0
    %v282 = vadd.f32 0.0, %v281
    %283 = vmatmul.f32.gmra.mxu0 %v149
    %v284 = vpop.f32.mrf.mxu0
    %v285 = vadd.f32 0.0, %v284
    %286 = vmatmul.f32.gmra.mxu0 %v151
    %v287 = vpop.f32.mrf.mxu0
    %v288 = vadd.f32 0.0, %v287
    %289 = vmatmul.f32.gmra.mxu0 %v153
    %v290 = vpop.f32.mrf.mxu0
    %v291 = vadd.f32 0.0, %v290
    %292 = vmatmul.f32.gmra.mxu0 %v155
    %v293 = vpop.f32.mrf.mxu0
    %v294 = vadd.f32 0.0, %v293
    %295 = vmatmul.f32.gmra.mxu0 %v157
    %v296 = vpop.f32.mrf.mxu0
    %v297 = vadd.f32 0.0, %v296
    %298 = vmatmul.f32.gmra.mxu0 %v159
    %v299 = vpop.f32.mrf.mxu0
    %v300 = vadd.f32 0.0, %v299
    %301 = vmatmul.f32.gmra.mxu0 %v161
    %v302 = vpop.f32.mrf.mxu0
    %v303 = vadd.f32 0.0, %v302
    %304 = vmatmul.f32.gmra.mxu0 %v163
    %v305 = vpop.f32.mrf.mxu0
    %v306 = vadd.f32 0.0, %v305
    %307 = vmatmul.f32.gmra.mxu0 %v165
    %v308 = vpop.f32.mrf.mxu0
    %v309 = vadd.f32 0.0, %v308
    %310 = vmatmul.f32.gmra.mxu0 %v167
    %v311 = vpop.f32.mrf.mxu0
    %v312 = vadd.f32 0.0, %v311
    %313 = vdwg.mxu0
    %314 = vmatpush.msra.mxu0 %v200
    %315 = vmatpush.msra.mxu0 %v199
    %316 = vmatpush.msra.mxu0 %v198
    %317 = vmatpush.msra.mxu0 %v197
    %318 = vmatpush.msra.mxu0 %v196
    %319 = vmatpush.msra.mxu0 %v195
    %320 = vmatpush.msra.mxu0 %v194
    %321 = vmatpush.msra.mxu0 %v193
    %322 = vmatpush.msra.mxu0 %v192
    %323 = vmatpush.msra.mxu0 %v191
    %324 = vmatpush.msra.mxu0 %v190
    %325 = vmatpush.msra.mxu0 %v189
    %326 = vmatpush.msra.mxu0 %v188
    %327 = vmatpush.msra.mxu0 %v187
    %328 = vmatpush.msra.mxu0 %v186
    %329 = vmatpush.msra.mxu0 %v185
    %330 = vmatmul.f32.gmra.mxu0 %v106
    %v331 = vpop.f32.mrf.mxu0
    %v332 = vadd.f32 %v219, %v331
    %333 = vmatmul.f32.gmra.mxu0 %v108
    %v334 = vpop.f32.mrf.mxu0
    %v335 = vadd.f32 %v222, %v334
    %336 = vmatmul.f32.gmra.mxu0 %v110
    %v337 = vpop.f32.mrf.mxu0
    %v338 = vadd.f32 %v225, %v337
    %339 = vmatmul.f32.gmra.mxu0 %v112
    %v340 = vpop.f32.mrf.mxu0
    %v341 = vadd.f32 %v228, %v340
    %342 = vmatmul.f32.gmra.mxu0 %v114
    %v343 = vpop.f32.mrf.mxu0
    %v344 = vadd.f32 %v231, %v343
    %345 = vmatmul.f32.gmra.mxu0 %v116
    %v346 = vpop.f32.mrf.mxu0
    %v347 = vadd.f32 %v234, %v346
    %348 = vmatmul.f32.gmra.mxu0 %v118
    %v349 = vpop.f32.mrf.mxu0
    %v350 = vadd.f32 %v237, %v349
    %351 = vmatmul.f32.gmra.mxu0 %v120
    %v352 = vpop.f32.mrf.mxu0
    %v353 = vadd.f32 %v240, %v352
    %354 = vmatmul.f32.gmra.mxu0 %v122
    %v355 = vpop.f32.mrf.mxu0
    %v356 = vadd.f32 %v243, %v355
    %357 = vmatmul.f32.gmra.mxu0 %v124
    %v358 = vpop.f32.mrf.mxu0
    %v359 = vadd.f32 %v246, %v358
    %360 = vmatmul.f32.gmra.mxu0 %v126
    %v361 = vpop.f32.mrf.mxu0
    %v362 = vadd.f32 %v249, %v361
    %363 = vmatmul.f32.gmra.mxu0 %v128
    %v364 = vpop.f32.mrf.mxu0
    %v365 = vadd.f32 %v252, %v364
    %366 = vmatmul.f32.gmra.mxu0 %v130
    %v367 = vpop.f32.mrf.mxu0
    %v368 = vadd.f32 %v255, %v367
    %369 = vmatmul.f32.gmra.mxu0 %v132
    %v370 = vpop.f32.mrf.mxu0
    %v371 = vadd.f32 %v258, %v370
    %372 = vmatmul.f32.gmra.mxu0 %v134
    %v373 = vpop.f32.mrf.mxu0
    %v374 = vadd.f32 %v261, %v373
    %375 = vmatmul.f32.gmra.mxu0 %v136
    %v376 = vpop.f32.mrf.mxu0
    %v377 = vadd.f32 %v264, %v376
    %378 = vmatmul.f32.gmra.mxu0 %v138
    %v379 = vpop.f32.mrf.mxu0
    %v380 = vadd.f32 %v267, %v379
    %381 = vmatmul.f32.gmra.mxu0 %v140
    %v382 = vpop.f32.mrf.mxu0
    %v383 = vadd.f32 %v270, %v382
    %384 = vmatmul.f32.gmra.mxu0 %v142
    %v385 = vpop.f32.mrf.mxu0
    %v386 = vadd.f32 %v273, %v385
    %387 = vmatmul.f32.gmra.mxu0 %v144
    %v388 = vpop.f32.mrf.mxu0
    %v389 = vadd.f32 %v276, %v388
    %390 = vmatmul.f32.gmra.mxu0 %v146
    %v391 = vpop.f32.mrf.mxu0
    %v392 = vadd.f32 %v279, %v391
    %393 = vmatmul.f32.gmra.mxu0 %v148
    %v394 = vpop.f32.mrf.mxu0
    %v395 = vadd.f32 %v282, %v394
    %396 = vmatmul.f32.gmra.mxu0 %v150
    %v397 = vpop.f32.mrf.mxu0
    %v398 = vadd.f32 %v285, %v397
    %399 = vmatmul.f32.gmra.mxu0 %v152
    %v400 = vpop.f32.mrf.mxu0
    %v401 = vadd.f32 %v288, %v400
    %402 = vmatmul.f32.gmra.mxu0 %v154
    %v403 = vpop.f32.mrf.mxu0
    %v404 = vadd.f32 %v291, %v403
    %405 = vmatmul.f32.gmra.mxu0 %v156
    %v406 = vpop.f32.mrf.mxu0
    %v407 = vadd.f32 %v294, %v406
    %408 = vmatmul.f32.gmra.mxu0 %v158
    %v409 = vpop.f32.mrf.mxu0
    %v410 = vadd.f32 %v297, %v409
    %411 = vmatmul.f32.gmra.mxu0 %v160
    %v412 = vpop.f32.mrf.mxu0
    %v413 = vadd.f32 %v300, %v412
    %414 = vmatmul.f32.gmra.mxu0 %v162
    %v415 = vpop.f32.mrf.mxu0
    %v416 = vadd.f32 %v303, %v415
    %417 = vmatmul.f32.gmra.mxu0 %v164
    %v418 = vpop.f32.mrf.mxu0
    %v419 = vadd.f32 %v306, %v418
    %420 = vmatmul.f32.gmra.mxu0 %v166
    %v421 = vpop.f32.mrf.mxu0
    %v422 = vadd.f32 %v309, %v421
    %423 = vmatmul.f32.gmra.mxu0 %v168
    %v424 = vpop.f32.mrf.mxu0
    %v425 = vadd.f32 %v312, %v424
    %426 = vdwg.mxu0
    %v427 = vld [vmem:[#allocation7] sm:$0xff]
    %v428 = vld [vmem:[#allocation7 + $0x8] sm:$0xff]
    %v429 = vld [vmem:[#allocation7 + $0x10] sm:$0xff]
    %v430 = vld [vmem:[#allocation7 + $0x18] sm:$0xff]
    %v431 = vld [vmem:[#allocation7 + $0x20] sm:$0xff]
    %v432 = vld [vmem:[#allocation7 + $0x28] sm:$0xff]
    %v433 = vld [vmem:[#allocation7 + $0x30] sm:$0xff]
    %v434 = vld [vmem:[#allocation7 + $0x38] sm:$0xff]
    %v435 = vld [vmem:[#allocation7 + $0x40] sm:$0xff]
    %v436 = vld [vmem:[#allocation7 + $0x48] sm:$0xff]
    %v437 = vld [vmem:[#allocation7 + $0x50] sm:$0xff]
    %v438 = vld [vmem:[#allocation7 + $0x58] sm:$0xff]
    %v439 = vld [vmem:[#allocation7 + $0x60] sm:$0xff]
    %v440 = vld [vmem:[#allocation7 + $0x68] sm:$0xff]
    %v441 = vld [vmem:[#allocation7 + $0x70] sm:$0xff]
    %v442 = vld [vmem:[#allocation7 + $0x78] sm:$0xff]
    %v443 = vld [vmem:[#allocation7 + $0x80] sm:$0xff]
    %v444 = vld [vmem:[#allocation7 + $0x88] sm:$0xff]
    %v445 = vld [vmem:[#allocation7 + $0x90] sm:$0xff]
    %v446 = vld [vmem:[#allocation7 + $0x98] sm:$0xff]
    %v447 = vld [vmem:[#allocation7 + $0xa0] sm:$0xff]
    %v448 = vld [vmem:[#allocation7 + $0xa8] sm:$0xff]
    %v449 = vld [vmem:[#allocation7 + $0xb0] sm:$0xff]
    %v450 = vld [vmem:[#allocation7 + $0xb8] sm:$0xff]
    %v451 = vld [vmem:[#allocation7 + $0xc0] sm:$0xff]
    %v452 = vld [vmem:[#allocation7 + $0xc8] sm:$0xff]
    %v453 = vld [vmem:[#allocation7 + $0xd0] sm:$0xff]
    %v454 = vld [vmem:[#allocation7 + $0xd8] sm:$0xff]
    %v455 = vld [vmem:[#allocation7 + $0xe0] sm:$0xff]
    %v456 = vld [vmem:[#allocation7 + $0xe8] sm:$0xff]
    %v457 = vld [vmem:[#allocation7 + $0xf0] sm:$0xff]
    %v458 = vld [vmem:[#allocation7 + $0xf8] sm:$0xff]
    %v459 = vld [vmem:[#allocation7 + $0x100] sm:$0xff]
    %v460 = vld [vmem:[#allocation7 + $0x108] sm:$0xff]
    %v461 = vld [vmem:[#allocation7 + $0x110] sm:$0xff]
    %v462 = vld [vmem:[#allocation7 + $0x118] sm:$0xff]
    %v463 = vld [vmem:[#allocation7 + $0x120] sm:$0xff]
    %v464 = vld [vmem:[#allocation7 + $0x128] sm:$0xff]
    %v465 = vld [vmem:[#allocation7 + $0x130] sm:$0xff]
    %v466 = vld [vmem:[#allocation7 + $0x138] sm:$0xff]
    %v467 = vld [vmem:[#allocation7 + $0x140] sm:$0xff]
    %v468 = vld [vmem:[#allocation7 + $0x148] sm:$0xff]
    %v469 = vld [vmem:[#allocation7 + $0x150] sm:$0xff]
    %v470 = vld [vmem:[#allocation7 + $0x158] sm:$0xff]
    %v471 = vld [vmem:[#allocation7 + $0x160] sm:$0xff]
    %v472 = vld [vmem:[#allocation7 + $0x168] sm:$0xff]
    %v473 = vld [vmem:[#allocation7 + $0x170] sm:$0xff]
    %v474 = vld [vmem:[#allocation7 + $0x178] sm:$0xff]
    %475 = vmatpush.msra.mxu0 %v472
    %476 = vmatpush.msra.mxu0 %v469
    %477 = vmatpush.msra.mxu0 %v466
    %478 = vmatpush.msra.mxu0 %v463
    %479 = vmatpush.msra.mxu0 %v460
    %480 = vmatpush.msra.mxu0 %v457
    %481 = vmatpush.msra.mxu0 %v454
    %482 = vmatpush.msra.mxu0 %v451
    %483 = vmatpush.msra.mxu0 %v448
    %484 = vmatpush.msra.mxu0 %v445
    %485 = vmatpush.msra.mxu0 %v442
    %486 = vmatpush.msra.mxu0 %v439
    %487 = vmatpush.msra.mxu0 %v436
    %488 = vmatpush.msra.mxu0 %v433
    %489 = vmatpush.msra.mxu0 %v430
    %490 = vmatpush.msra.mxu0 %v427
    %491 = vmatmul.f32.gmra.mxu0 %v332
    %v492 = vpop.f32.mrf.mxu0
    %v493 = vadd.f32 0.0, %v492
    %494 = vmatmul.f32.gmra.mxu0 %v335
    %v495 = vpop.f32.mrf.mxu0
    %v496 = vadd.f32 0.0, %v495
    %497 = vmatmul.f32.gmra.mxu0 %v338
    %v498 = vpop.f32.mrf.mxu0
    %v499 = vadd.f32 0.0, %v498
    %500 = vmatmul.f32.gmra.mxu0 %v341
    %v501 = vpop.f32.mrf.mxu0
    %v502 = vadd.f32 0.0, %v501
    %503 = vmatmul.f32.gmra.mxu0 %v344
    %v504 = vpop.f32.mrf.mxu0
    %v505 = vadd.f32 0.0, %v504
    %506 = vmatmul.f32.gmra.mxu0 %v347
    %v507 = vpop.f32.mrf.mxu0
    %v508 = vadd.f32 0.0, %v507
    %509 = vmatmul.f32.gmra.mxu0 %v350
    %v510 = vpop.f32.mrf.mxu0
    %v511 = vadd.f32 0.0, %v510
    %512 = vmatmul.f32.gmra.mxu0 %v353
    %v513 = vpop.f32.mrf.mxu0
    %v514 = vadd.f32 0.0, %v513
    %515 = vmatmul.f32.gmra.mxu0 %v356
    %v516 = vpop.f32.mrf.mxu0
    %v517 = vadd.f32 0.0, %v516
    %518 = vmatmul.f32.gmra.mxu0 %v359
    %v519 = vpop.f32.mrf.mxu0
    %v520 = vadd.f32 0.0, %v519
    %521 = vmatmul.f32.gmra.mxu0 %v362
    %v522 = vpop.f32.mrf.mxu0
    %v523 = vadd.f32 0.0, %v522
    %524 = vmatmul.f32.gmra.mxu0 %v365
    %v525 = vpop.f32.mrf.mxu0
    %v526 = vadd.f32 0.0, %v525
    %527 = vmatmul.f32.gmra.mxu0 %v368
    %v528 = vpop.f32.mrf.mxu0
    %v529 = vadd.f32 0.0, %v528
    %530 = vmatmul.f32.gmra.mxu0 %v371
    %v531 = vpop.f32.mrf.mxu0
    %v532 = vadd.f32 0.0, %v531
    %533 = vmatmul.f32.gmra.mxu0 %v374
    %v534 = vpop.f32.mrf.mxu0
    %v535 = vadd.f32 0.0, %v534
    %536 = vmatmul.f32.gmra.mxu0 %v377
    %v537 = vpop.f32.mrf.mxu0
    %v538 = vadd.f32 0.0, %v537
    %539 = vmatmul.f32.gmra.mxu0 %v380
    %v540 = vpop.f32.mrf.mxu0
    %v541 = vadd.f32 0.0, %v540
    %542 = vmatmul.f32.gmra.mxu0 %v383
    %v543 = vpop.f32.mrf.mxu0
    %v544 = vadd.f32 0.0, %v543
    %545 = vmatmul.f32.gmra.mxu0 %v386
    %v546 = vpop.f32.mrf.mxu0
    %v547 = vadd.f32 0.0, %v546
    %548 = vmatmul.f32.gmra.mxu0 %v389
    %v549 = vpop.f32.mrf.mxu0
    %v550 = vadd.f32 0.0, %v549
    %551 = vmatmul.f32.gmra.mxu0 %v392
    %v552 = vpop.f32.mrf.mxu0
    %v553 = vadd.f32 0.0, %v552
    %554 = vmatmul.f32.gmra.mxu0 %v395
    %v555 = vpop.f32.mrf.mxu0
    %v556 = vadd.f32 0.0, %v555
    %557 = vmatmul.f32.gmra.mxu0 %v398
    %v558 = vpop.f32.mrf.mxu0
    %v559 = vadd.f32 0.0, %v558
    %560 = vmatmul.f32.gmra.mxu0 %v401
    %v561 = vpop.f32.mrf.mxu0
    %v562 = vadd.f32 0.0, %v561
    %563 = vmatmul.f32.gmra.mxu0 %v404
    %v564 = vpop.f32.mrf.mxu0
    %v565 = vadd.f32 0.0, %v564
    %566 = vmatmul.f32.gmra.mxu0 %v407
    %v567 = vpop.f32.mrf.mxu0
    %v568 = vadd.f32 0.0, %v567
    %569 = vmatmul.f32.gmra.mxu0 %v410
    %v570 = vpop.f32.mrf.mxu0
    %v571 = vadd.f32 0.0, %v570
    %572 = vmatmul.f32.gmra.mxu0 %v413
    %v573 = vpop.f32.mrf.mxu0
    %v574 = vadd.f32 0.0, %v573
    %575 = vmatmul.f32.gmra.mxu0 %v416
    %v576 = vpop.f32.mrf.mxu0
    %v577 = vadd.f32 0.0, %v576
    %578 = vmatmul.f32.gmra.mxu0 %v419
    %v579 = vpop.f32.mrf.mxu0
    %v580 = vadd.f32 0.0, %v579
    %581 = vmatmul.f32.gmra.mxu0 %v422
    %v582 = vpop.f32.mrf.mxu0
    %v583 = vadd.f32 0.0, %v582
    %584 = vmatmul.f32.gmra.mxu0 %v425
    %v585 = vpop.f32.mrf.mxu0
    %v586 = vadd.f32 0.0, %v585
    %587 = vdwg.mxu0
    %588 = vmatpush.msra.mxu0 %v473
    %589 = vmatpush.msra.mxu0 %v470
    %590 = vmatpush.msra.mxu0 %v467
    %591 = vmatpush.msra.mxu0 %v464
    %592 = vmatpush.msra.mxu0 %v461
    %593 = vmatpush.msra.mxu0 %v458
    %594 = vmatpush.msra.mxu0 %v455
    %595 = vmatpush.msra.mxu0 %v452
    %596 = vmatpush.msra.mxu0 %v449
    %597 = vmatpush.msra.mxu0 %v446
    %598 = vmatpush.msra.mxu0 %v443
    %599 = vmatpush.msra.mxu0 %v440
    %600 = vmatpush.msra.mxu0 %v437
    %601 = vmatpush.msra.mxu0 %v434
    %602 = vmatpush.msra.mxu0 %v431
    %603 = vmatpush.msra.mxu0 %v428
    %604 = vmatmul.f32.gmra.mxu0 %v332
    %v605 = vpop.f32.mrf.mxu0
    %v606 = vadd.f32 0.0, %v605
    %607 = vmatmul.f32.gmra.mxu0 %v335
    %v608 = vpop.f32.mrf.mxu0
    %v609 = vadd.f32 0.0, %v608
    %610 = vmatmul.f32.gmra.mxu0 %v338
    %v611 = vpop.f32.mrf.mxu0
    %v612 = vadd.f32 0.0, %v611
    %613 = vmatmul.f32.gmra.mxu0 %v341
    %v614 = vpop.f32.mrf.mxu0
    %v615 = vadd.f32 0.0, %v614
    %616 = vmatmul.f32.gmra.mxu0 %v344
    %v617 = vpop.f32.mrf.mxu0
    %v618 = vadd.f32 0.0, %v617
    %619 = vmatmul.f32.gmra.mxu0 %v347
    %v620 = vpop.f32.mrf.mxu0
    %v621 = vadd.f32 0.0, %v620
    %622 = vmatmul.f32.gmra.mxu0 %v350
    %v623 = vpop.f32.mrf.mxu0
    %v624 = vadd.f32 0.0, %v623
    %625 = vmatmul.f32.gmra.mxu0 %v353
    %v626 = vpop.f32.mrf.mxu0
    %v627 = vadd.f32 0.0, %v626
    %628 = vmatmul.f32.gmra.mxu0 %v356
    %v629 = vpop.f32.mrf.mxu0
    %v630 = vadd.f32 0.0, %v629
    %631 = vmatmul.f32.gmra.mxu0 %v359
    %v632 = vpop.f32.mrf.mxu0
    %v633 = vadd.f32 0.0, %v632
    %634 = vmatmul.f32.gmra.mxu0 %v362
    %v635 = vpop.f32.mrf.mxu0
    %v636 = vadd.f32 0.0, %v635
    %637 = vmatmul.f32.gmra.mxu0 %v365
    %v638 = vpop.f32.mrf.mxu0
    %v639 = vadd.f32 0.0, %v638
    %640 = vmatmul.f32.gmra.mxu0 %v368
    %v641 = vpop.f32.mrf.mxu0
    %v642 = vadd.f32 0.0, %v641
    %643 = vmatmul.f32.gmra.mxu0 %v371
    %v644 = vpop.f32.mrf.mxu0
    %v645 = vadd.f32 0.0, %v644
    %646 = vmatmul.f32.gmra.mxu0 %v374
    %v647 = vpop.f32.mrf.mxu0
    %v648 = vadd.f32 0.0, %v647
    %649 = vmatmul.f32.gmra.mxu0 %v377
    %v650 = vpop.f32.mrf.mxu0
    %v651 = vadd.f32 0.0, %v650
    %652 = vmatmul.f32.gmra.mxu0 %v380
    %v653 = vpop.f32.mrf.mxu0
    %v654 = vadd.f32 0.0, %v653
    %655 = vmatmul.f32.gmra.mxu0 %v383
    %v656 = vpop.f32.mrf.mxu0
    %v657 = vadd.f32 0.0, %v656
    %658 = vmatmul.f32.gmra.mxu0 %v386
    %v659 = vpop.f32.mrf.mxu0
    %v660 = vadd.f32 0.0, %v659
    %661 = vmatmul.f32.gmra.mxu0 %v389
    %v662 = vpop.f32.mrf.mxu0
    %v663 = vadd.f32 0.0, %v662
    %664 = vmatmul.f32.gmra.mxu0 %v392
    %v665 = vpop.f32.mrf.mxu0
    %v666 = vadd.f32 0.0, %v665
    %667 = vmatmul.f32.gmra.mxu0 %v395
    %v668 = vpop.f32.mrf.mxu0
    %v669 = vadd.f32 0.0, %v668
    %670 = vmatmul.f32.gmra.mxu0 %v398
    %v671 = vpop.f32.mrf.mxu0
    %v672 = vadd.f32 0.0, %v671
    %673 = vmatmul.f32.gmra.mxu0 %v401
    %v674 = vpop.f32.mrf.mxu0
    %v675 = vadd.f32 0.0, %v674
    %676 = vmatmul.f32.gmra.mxu0 %v404
    %v677 = vpop.f32.mrf.mxu0
    %v678 = vadd.f32 0.0, %v677
    %679 = vmatmul.f32.gmra.mxu0 %v407
    %v680 = vpop.f32.mrf.mxu0
    %v681 = vadd.f32 0.0, %v680
    %682 = vmatmul.f32.gmra.mxu0 %v410
    %v683 = vpop.f32.mrf.mxu0
    %v684 = vadd.f32 0.0, %v683
    %685 = vmatmul.f32.gmra.mxu0 %v413
    %v686 = vpop.f32.mrf.mxu0
    %v687 = vadd.f32 0.0, %v686
    %688 = vmatmul.f32.gmra.mxu0 %v416
    %v689 = vpop.f32.mrf.mxu0
    %v690 = vadd.f32 0.0, %v689
    %691 = vmatmul.f32.gmra.mxu0 %v419
    %v692 = vpop.f32.mrf.mxu0
    %v693 = vadd.f32 0.0, %v692
    %694 = vmatmul.f32.gmra.mxu0 %v422
    %v695 = vpop.f32.mrf.mxu0
    %v696 = vadd.f32 0.0, %v695
    %697 = vmatmul.f32.gmra.mxu0 %v425
    %v698 = vpop.f32.mrf.mxu0
    %v699 = vadd.f32 0.0, %v698
    %700 = vdwg.mxu0
    %701 = vmatpush.msra.mxu0 %v474
    %702 = vmatpush.msra.mxu0 %v471
    %703 = vmatpush.msra.mxu0 %v468
    %704 = vmatpush.msra.mxu0 %v465
    %705 = vmatpush.msra.mxu0 %v462
    %706 = vmatpush.msra.mxu0 %v459
    %707 = vmatpush.msra.mxu0 %v456
    %708 = vmatpush.msra.mxu0 %v453
    %709 = vmatpush.msra.mxu0 %v450
    %710 = vmatpush.msra.mxu0 %v447
    %711 = vmatpush.msra.mxu0 %v444
    %712 = vmatpush.msra.mxu0 %v441
    %713 = vmatpush.msra.mxu0 %v438
    %714 = vmatpush.msra.mxu0 %v435
    %715 = vmatpush.msra.mxu0 %v432
    %716 = vmatpush.msra.mxu0 %v429
    %717 = vmatmul.f32.gmra.mxu0 %v332
    %v718 = vpop.f32.mrf.mxu0
    %v719 = vadd.f32 0.0, %v718
    %720 = vmatmul.f32.gmra.mxu0 %v335
    %v721 = vpop.f32.mrf.mxu0
    %v722 = vadd.f32 0.0, %v721
    %723 = vmatmul.f32.gmra.mxu0 %v338
    %v724 = vpop.f32.mrf.mxu0
    %v725 = vadd.f32 0.0, %v724
    %726 = vmatmul.f32.gmra.mxu0 %v341
    %v727 = vpop.f32.mrf.mxu0
    %v728 = vadd.f32 0.0, %v727
    %729 = vmatmul.f32.gmra.mxu0 %v344
    %v730 = vpop.f32.mrf.mxu0
    %v731 = vadd.f32 0.0, %v730
    %732 = vmatmul.f32.gmra.mxu0 %v347
    %v733 = vpop.f32.mrf.mxu0
    %v734 = vadd.f32 0.0, %v733
    %735 = vmatmul.f32.gmra.mxu0 %v350
    %v736 = vpop.f32.mrf.mxu0
    %v737 = vadd.f32 0.0, %v736
    %738 = vmatmul.f32.gmra.mxu0 %v353
    %v739 = vpop.f32.mrf.mxu0
    %v740 = vadd.f32 0.0, %v739
    %741 = vmatmul.f32.gmra.mxu0 %v356
    %v742 = vpop.f32.mrf.mxu0
    %v743 = vadd.f32 0.0, %v742
    %744 = vmatmul.f32.gmra.mxu0 %v359
    %v745 = vpop.f32.mrf.mxu0
    %v746 = vadd.f32 0.0, %v745
    %747 = vmatmul.f32.gmra.mxu0 %v362
    %v748 = vpop.f32.mrf.mxu0
    %v749 = vadd.f32 0.0, %v748
    %750 = vmatmul.f32.gmra.mxu0 %v365
    %v751 = vpop.f32.mrf.mxu0
    %v752 = vadd.f32 0.0, %v751
    %753 = vmatmul.f32.gmra.mxu0 %v368
    %v754 = vpop.f32.mrf.mxu0
    %v755 = vadd.f32 0.0, %v754
    %756 = vmatmul.f32.gmra.mxu0 %v371
    %v757 = vpop.f32.mrf.mxu0
    %v758 = vadd.f32 0.0, %v757
    %759 = vmatmul.f32.gmra.mxu0 %v374
    %v760 = vpop.f32.mrf.mxu0
    %v761 = vadd.f32 0.0, %v760
    %762 = vmatmul.f32.gmra.mxu0 %v377
    %v763 = vpop.f32.mrf.mxu0
    %v764 = vadd.f32 0.0, %v763
    %765 = vmatmul.f32.gmra.mxu0 %v380
    %v766 = vpop.f32.mrf.mxu0
    %v767 = vadd.f32 0.0, %v766
    %768 = vmatmul.f32.gmra.mxu0 %v383
    %v769 = vpop.f32.mrf.mxu0
    %v770 = vadd.f32 0.0, %v769
    %771 = vmatmul.f32.gmra.mxu0 %v386
    %v772 = vpop.f32.mrf.mxu0
    %v773 = vadd.f32 0.0, %v772
    %774 = vmatmul.f32.gmra.mxu0 %v389
    %v775 = vpop.f32.mrf.mxu0
    %v776 = vadd.f32 0.0, %v775
    %777 = vmatmul.f32.gmra.mxu0 %v392
    %v778 = vpop.f32.mrf.mxu0
    %v779 = vadd.f32 0.0, %v778
    %780 = vmatmul.f32.gmra.mxu0 %v395
    %v781 = vpop.f32.mrf.mxu0
    %v782 = vadd.f32 0.0, %v781
    %783 = vmatmul.f32.gmra.mxu0 %v398
    %v784 = vpop.f32.mrf.mxu0
    %v785 = vadd.f32 0.0, %v784
    %786 = vmatmul.f32.gmra.mxu0 %v401
    %v787 = vpop.f32.mrf.mxu0
    %v788 = vadd.f32 0.0, %v787
    %789 = vmatmul.f32.gmra.mxu0 %v404
    %v790 = vpop.f32.mrf.mxu0
    %v791 = vadd.f32 0.0, %v790
    %792 = vmatmul.f32.gmra.mxu0 %v407
    %v793 = vpop.f32.mrf.mxu0
    %v794 = vadd.f32 0.0, %v793
    %795 = vmatmul.f32.gmra.mxu0 %v410
    %v796 = vpop.f32.mrf.mxu0
    %v797 = vadd.f32 0.0, %v796
    %798 = vmatmul.f32.gmra.mxu0 %v413
    %v799 = vpop.f32.mrf.mxu0
    %v800 = vadd.f32 0.0, %v799
    %801 = vmatmul.f32.gmra.mxu0 %v416
    %v802 = vpop.f32.mrf.mxu0
    %v803 = vadd.f32 0.0, %v802
    %804 = vmatmul.f32.gmra.mxu0 %v419
    %v805 = vpop.f32.mrf.mxu0
    %v806 = vadd.f32 0.0, %v805
    %807 = vmatmul.f32.gmra.mxu0 %v422
    %v808 = vpop.f32.mrf.mxu0
    %v809 = vadd.f32 0.0, %v808
    %810 = vmatmul.f32.gmra.mxu0 %v425
    %v811 = vpop.f32.mrf.mxu0
    %v812 = vadd.f32 0.0, %v811
    %813 = vdwg.mxu0
    %v814 = vmax.f32 %v493, 0.0
    %v815 = vmax.f32 %v606, 0.0
    %v816 = vmax.f32 %v719, 0.0
    %v817 = vmax.f32 %v496, 0.0
    %v818 = vmax.f32 %v609, 0.0
    %v819 = vmax.f32 %v722, 0.0
    %v820 = vmax.f32 %v499, 0.0
    %v821 = vmax.f32 %v612, 0.0
    %v822 = vmax.f32 %v725, 0.0
    %v823 = vmax.f32 %v502, 0.0
    %v824 = vmax.f32 %v615, 0.0
    %v825 = vmax.f32 %v728, 0.0
    %v826 = vmax.f32 %v505, 0.0
    %v827 = vmax.f32 %v618, 0.0
    %v828 = vmax.f32 %v731, 0.0
    %v829 = vmax.f32 %v508, 0.0
    %v830 = vmax.f32 %v621, 0.0
    %v831 = vmax.f32 %v734, 0.0
    %v832 = vmax.f32 %v511, 0.0
    %v833 = vmax.f32 %v624, 0.0
    %v834 = vmax.f32 %v737, 0.0
    %v835 = vmax.f32 %v514, 0.0
    %v836 = vmax.f32 %v627, 0.0
    %v837 = vmax.f32 %v740, 0.0
    %v838 = vmax.f32 %v517, 0.0
    %v839 = vmax.f32 %v630, 0.0
    %v840 = vmax.f32 %v743, 0.0
    %v841 = vmax.f32 %v520, 0.0
    %v842 = vmax.f32 %v633, 0.0
    %v843 = vmax.f32 %v746, 0.0
    %v844 = vmax.f32 %v523, 0.0
    %v845 = vmax.f32 %v636, 0.0
    %v846 = vmax.f32 %v749, 0.0
    %v847 = vmax.f32 %v526, 0.0
    %v848 = vmax.f32 %v639, 0.0
    %v849 = vmax.f32 %v752, 0.0
    %v850 = vmax.f32 %v529, 0.0
    %v851 = vmax.f32 %v642, 0.0
    %v852 = vmax.f32 %v755, 0.0
    %v853 = vmax.f32 %v532, 0.0
    %v854 = vmax.f32 %v645, 0.0
    %v855 = vmax.f32 %v758, 0.0
    %v856 = vmax.f32 %v535, 0.0
    %v857 = vmax.f32 %v648, 0.0
    %v858 = vmax.f32 %v761, 0.0
    %v859 = vmax.f32 %v538, 0.0
    %v860 = vmax.f32 %v651, 0.0
    %v861 = vmax.f32 %v764, 0.0
    %v862 = vmax.f32 %v541, 0.0
    %v863 = vmax.f32 %v654, 0.0
    %v864 = vmax.f32 %v767, 0.0
    %v865 = vmax.f32 %v544, 0.0
    %v866 = vmax.f32 %v657, 0.0
    %v867 = vmax.f32 %v770, 0.0
    %v868 = vmax.f32 %v547, 0.0
    %v869 = vmax.f32 %v660, 0.0
    %v870 = vmax.f32 %v773, 0.0
    %v871 = vmax.f32 %v550, 0.0
    %v872 = vmax.f32 %v663, 0.0
    %v873 = vmax.f32 %v776, 0.0
    %v874 = vmax.f32 %v553, 0.0
    %v875 = vmax.f32 %v666, 0.0
    %v876 = vmax.f32 %v779, 0.0
    %v877 = vmax.f32 %v556, 0.0
    %v878 = vmax.f32 %v669, 0.0
    %v879 = vmax.f32 %v782, 0.0
    %v880 = vmax.f32 %v559, 0.0
    %v881 = vmax.f32 %v672, 0.0
    %v882 = vmax.f32 %v785, 0.0
    %v883 = vmax.f32 %v562, 0.0
    %v884 = vmax.f32 %v675, 0.0
    %v885 = vmax.f32 %v788, 0.0
    %v886 = vmax.f32 %v565, 0.0
    %v887 = vmax.f32 %v678, 0.0
    %v888 = vmax.f32 %v791, 0.0
    %v889 = vmax.f32 %v568, 0.0
    %v890 = vmax.f32 %v681, 0.0
    %v891 = vmax.f32 %v794, 0.0
    %v892 = vmax.f32 %v571, 0.0
    %v893 = vmax.f32 %v684, 0.0
    %v894 = vmax.f32 %v797, 0.0
    %v895 = vmax.f32 %v574, 0.0
    %v896 = vmax.f32 %v687, 0.0
    %v897 = vmax.f32 %v800, 0.0
    %v898 = vmax.f32 %v577, 0.0
    %v899 = vmax.f32 %v690, 0.0
    %v900 = vmax.f32 %v803, 0.0
    %v901 = vmax.f32 %v580, 0.0
    %v902 = vmax.f32 %v693, 0.0
    %v903 = vmax.f32 %v806, 0.0
    %v904 = vmax.f32 %v583, 0.0
    %v905 = vmax.f32 %v696, 0.0
    %v906 = vmax.f32 %v809, 0.0
    %v907 = vmax.f32 %v586, 0.0
    %v908 = vmax.f32 %v699, 0.0
    %v909 = vmax.f32 %v812, 0.0
    %v910 = vld [vmem:[#allocation8] sm:$0xff]
    %v911 = vld [vmem:[#allocation8 + $0x8] sm:$0xff]
    %v912 = vld [vmem:[#allocation8 + $0x10] sm:$0xff]
    %v913 = vld [vmem:[#allocation8 + $0x18] sm:$0xff]
    %v914 = vld [vmem:[#allocation8 + $0x20] sm:$0xff]
    %v915 = vld [vmem:[#allocation8 + $0x28] sm:$0xff]
    %v916 = vld [vmem:[#allocation8 + $0x30] sm:$0xff]
    %v917 = vld [vmem:[#allocation8 + $0x38] sm:$0xff]
    %v918 = vld [vmem:[#allocation8 + $0x40] sm:$0xff]
    %v919 = vld [vmem:[#allocation8 + $0x48] sm:$0xff]
    %v920 = vld [vmem:[#allocation8 + $0x50] sm:$0xff]
    %v921 = vld [vmem:[#allocation8 + $0x58] sm:$0xff]
    %v922 = vld [vmem:[#allocation8 + $0x60] sm:$0xff]
    %v923 = vld [vmem:[#allocation8 + $0x68] sm:$0xff]
    %v924 = vld [vmem:[#allocation8 + $0x70] sm:$0xff]
    %v925 = vld [vmem:[#allocation8 + $0x78] sm:$0xff]
    %v926 = vld [vmem:[#allocation8 + $0x80] sm:$0xff]
    %v927 = vld [vmem:[#allocation8 + $0x88] sm:$0xff]
    %v928 = vld [vmem:[#allocation8 + $0x90] sm:$0xff]
    %v929 = vld [vmem:[#allocation8 + $0x98] sm:$0xff]
    %v930 = vld [vmem:[#allocation8 + $0xa0] sm:$0xff]
    %v931 = vld [vmem:[#allocation8 + $0xa8] sm:$0xff]
    %v932 = vld [vmem:[#allocation8 + $0xb0] sm:$0xff]
    %v933 = vld [vmem:[#allocation8 + $0xb8] sm:$0xff]
    %v934 = vld [vmem:[#allocation8 + $0xc0] sm:$0xff]
    %v935 = vld [vmem:[#allocation8 + $0xc8] sm:$0xff]
    %v936 = vld [vmem:[#allocation8 + $0xd0] sm:$0xff]
    %v937 = vld [vmem:[#allocation8 + $0xd8] sm:$0xff]
    %v938 = vld [vmem:[#allocation8 + $0xe0] sm:$0xff]
    %v939 = vld [vmem:[#allocation8 + $0xe8] sm:$0xff]
    %v940 = vld [vmem:[#allocation8 + $0xf0] sm:$0xff]
    %v941 = vld [vmem:[#allocation8 + $0xf8] sm:$0xff]
    %v942 = vld [vmem:[#allocation8 + $0x100] sm:$0xff]
    %v943 = vld [vmem:[#allocation8 + $0x108] sm:$0xff]
    %v944 = vld [vmem:[#allocation8 + $0x110] sm:$0xff]
    %v945 = vld [vmem:[#allocation8 + $0x118] sm:$0xff]
    %v946 = vld [vmem:[#allocation8 + $0x120] sm:$0xff]
    %v947 = vld [vmem:[#allocation8 + $0x128] sm:$0xff]
    %v948 = vld [vmem:[#allocation8 + $0x130] sm:$0xff]
    %v949 = vld [vmem:[#allocation8 + $0x138] sm:$0xff]
    %v950 = vld [vmem:[#allocation8 + $0x140] sm:$0xff]
    %v951 = vld [vmem:[#allocation8 + $0x148] sm:$0xff]
    %v952 = vld [vmem:[#allocation8 + $0x150] sm:$0xff]
    %v953 = vld [vmem:[#allocation8 + $0x158] sm:$0xff]
    %v954 = vld [vmem:[#allocation8 + $0x160] sm:$0xff]
    %v955 = vld [vmem:[#allocation8 + $0x168] sm:$0xff]
    %v956 = vld [vmem:[#allocation8 + $0x170] sm:$0xff]
    %v957 = vld [vmem:[#allocation8 + $0x178] sm:$0xff]
    %v958 = vld [vmem:[#allocation8 + $0x180] sm:$0xff]
    %v959 = vld [vmem:[#allocation8 + $0x188] sm:$0xff]
    %v960 = vld [vmem:[#allocation8 + $0x190] sm:$0xff]
    %v961 = vld [vmem:[#allocation8 + $0x198] sm:$0xff]
    %v962 = vld [vmem:[#allocation8 + $0x1a0] sm:$0xff]
    %v963 = vld [vmem:[#allocation8 + $0x1a8] sm:$0xff]
    %v964 = vld [vmem:[#allocation8 + $0x1b0] sm:$0xff]
    %v965 = vld [vmem:[#allocation8 + $0x1b8] sm:$0xff]
    %v966 = vld [vmem:[#allocation8 + $0x1c0] sm:$0xff]
    %v967 = vld [vmem:[#allocation8 + $0x1c8] sm:$0xff]
    %v968 = vld [vmem:[#allocation8 + $0x1d0] sm:$0xff]
    %v969 = vld [vmem:[#allocation8 + $0x1d8] sm:$0xff]
    %v970 = vld [vmem:[#allocation8 + $0x1e0] sm:$0xff]
    %v971 = vld [vmem:[#allocation8 + $0x1e8] sm:$0xff]
    %v972 = vld [vmem:[#allocation8 + $0x1f0] sm:$0xff]
    %v973 = vld [vmem:[#allocation8 + $0x1f8] sm:$0xff]
    %v974 = vld [vmem:[#allocation8 + $0x200] sm:$0xff]
    %v975 = vld [vmem:[#allocation8 + $0x208] sm:$0xff]
    %v976 = vld [vmem:[#allocation8 + $0x210] sm:$0xff]
    %v977 = vld [vmem:[#allocation8 + $0x218] sm:$0xff]
    %v978 = vld [vmem:[#allocation8 + $0x220] sm:$0xff]
    %v979 = vld [vmem:[#allocation8 + $0x228] sm:$0xff]
    %v980 = vld [vmem:[#allocation8 + $0x230] sm:$0xff]
    %v981 = vld [vmem:[#allocation8 + $0x238] sm:$0xff]
    %v982 = vld [vmem:[#allocation8 + $0x240] sm:$0xff]
    %v983 = vld [vmem:[#allocation8 + $0x248] sm:$0xff]
    %v984 = vld [vmem:[#allocation8 + $0x250] sm:$0xff]
    %v985 = vld [vmem:[#allocation8 + $0x258] sm:$0xff]
    %v986 = vld [vmem:[#allocation8 + $0x260] sm:$0xff]
    %v987 = vld [vmem:[#allocation8 + $0x268] sm:$0xff]
    %v988 = vld [vmem:[#allocation8 + $0x270] sm:$0xff]
    %v989 = vld [vmem:[#allocation8 + $0x278] sm:$0xff]
    %v990 = vld [vmem:[#allocation8 + $0x280] sm:$0xff]
    %v991 = vld [vmem:[#allocation8 + $0x288] sm:$0xff]
    %v992 = vld [vmem:[#allocation8 + $0x290] sm:$0xff]
    %v993 = vld [vmem:[#allocation8 + $0x298] sm:$0xff]
    %v994 = vld [vmem:[#allocation8 + $0x2a0] sm:$0xff]
    %v995 = vld [vmem:[#allocation8 + $0x2a8] sm:$0xff]
    %v996 = vld [vmem:[#allocation8 + $0x2b0] sm:$0xff]
    %v997 = vld [vmem:[#allocation8 + $0x2b8] sm:$0xff]
    %v998 = vld [vmem:[#allocation8 + $0x2c0] sm:$0xff]
    %v999 = vld [vmem:[#allocation8 + $0x2c8] sm:$0xff]
    %v1000 = vld [vmem:[#allocation8 + $0x2d0] sm:$0xff]
    %v1001 = vld [vmem:[#allocation8 + $0x2d8] sm:$0xff]
    %v1002 = vld [vmem:[#allocation8 + $0x2e0] sm:$0xff]
    %v1003 = vld [vmem:[#allocation8 + $0x2e8] sm:$0xff]
    %v1004 = vld [vmem:[#allocation8 + $0x2f0] sm:$0xff]
    %v1005 = vld [vmem:[#allocation8 + $0x2f8] sm:$0xff]
    %v1006 = vld [vmem:[%s4] sm:$0x3]
    %v1008 = vperm.slane %v1006, 0
    %v1009 = vperm.slane %v1006, 1
    %1012 = vmatpush.msra.mxu0 %v940
    %1013 = vmatpush.msra.mxu0 %v938
    %1014 = vmatpush.msra.mxu0 %v936
    %1015 = vmatpush.msra.mxu0 %v934
    %1016 = vmatpush.msra.mxu0 %v932
    %1017 = vmatpush.msra.mxu0 %v930
    %1018 = vmatpush.msra.mxu0 %v928
    %1019 = vmatpush.msra.mxu0 %v926
    %1020 = vmatpush.msra.mxu0 %v924
    %1021 = vmatpush.msra.mxu0 %v922
    %1022 = vmatpush.msra.mxu0 %v920
    %1023 = vmatpush.msra.mxu0 %v918
    %1024 = vmatpush.msra.mxu0 %v916
    %1025 = vmatpush.msra.mxu0 %v914
    %1026 = vmatpush.msra.mxu0 %v912
    %1027 = vmatpush.msra.mxu0 %v910
    %1028 = vmatmul.f32.gmra.mxu0 %v814
    %v1029 = vpop.f32.mrf.mxu0
    %v1030 = vadd.f32 %v1008, %v1029
    %1031 = vmatmul.f32.gmra.mxu0 %v817
    %v1032 = vpop.f32.mrf.mxu0
    %v1033 = vadd.f32 %v1008, %v1032
    %1034 = vmatmul.f32.gmra.mxu0 %v820
    %v1035 = vpop.f32.mrf.mxu0
    %v1036 = vadd.f32 %v1008, %v1035
    %1037 = vmatmul.f32.gmra.mxu0 %v823
    %v1038 = vpop.f32.mrf.mxu0
    %v1039 = vadd.f32 %v1008, %v1038
    %1040 = vmatmul.f32.gmra.mxu0 %v826
    %v1041 = vpop.f32.mrf.mxu0
    %v1042 = vadd.f32 %v1008, %v1041
    %1043 = vmatmul.f32.gmra.mxu0 %v829
    %v1044 = vpop.f32.mrf.mxu0
    %v1045 = vadd.f32 %v1008, %v1044
    %1046 = vmatmul.f32.gmra.mxu0 %v832
    %v1047 = vpop.f32.mrf.mxu0
    %v1048 = vadd.f32 %v1008, %v1047
    %1049 = vmatmul.f32.gmra.mxu0 %v835
    %v1050 = vpop.f32.mrf.mxu0
    %v1051 = vadd.f32 %v1008, %v1050
    %1052 = vmatmul.f32.gmra.mxu0 %v838
    %v1053 = vpop.f32.mrf.mxu0
    %v1054 = vadd.f32 %v1008, %v1053
    %1055 = vmatmul.f32.gmra.mxu0 %v841
    %v1056 = vpop.f32.mrf.mxu0
    %v1057 = vadd.f32 %v1008, %v1056
    %1058 = vmatmul.f32.gmra.mxu0 %v844
    %v1059 = vpop.f32.mrf.mxu0
    %v1060 = vadd.f32 %v1008, %v1059
    %1061 = vmatmul.f32.gmra.mxu0 %v847
    %v1062 = vpop.f32.mrf.mxu0
    %v1063 = vadd.f32 %v1008, %v1062
    %1064 = vmatmul.f32.gmra.mxu0 %v850
    %v1065 = vpop.f32.mrf.mxu0
    %v1066 = vadd.f32 %v1008, %v1065
    %1067 = vmatmul.f32.gmra.mxu0 %v853
    %v1068 = vpop.f32.mrf.mxu0
    %v1069 = vadd.f32 %v1008, %v1068
    %1070 = vmatmul.f32.gmra.mxu0 %v856
    %v1071 = vpop.f32.mrf.mxu0
    %v1072 = vadd.f32 %v1008, %v1071
    %1073 = vmatmul.f32.gmra.mxu0 %v859
    %v1074 = vpop.f32.mrf.mxu0
    %v1075 = vadd.f32 %v1008, %v1074
    %1076 = vmatmul.f32.gmra.mxu0 %v862
    %v1077 = vpop.f32.mrf.mxu0
    %v1078 = vadd.f32 %v1008, %v1077
    %1079 = vmatmul.f32.gmra.mxu0 %v865
    %v1080 = vpop.f32.mrf.mxu0
    %v1081 = vadd.f32 %v1008, %v1080
    %1082 = vmatmul.f32.gmra.mxu0 %v868
    %v1083 = vpop.f32.mrf.mxu0
    %v1084 = vadd.f32 %v1008, %v1083
    %1085 = vmatmul.f32.gmra.mxu0 %v871
    %v1086 = vpop.f32.mrf.mxu0
    %v1087 = vadd.f32 %v1008, %v1086
    %1088 = vmatmul.f32.gmra.mxu0 %v874
    %v1089 = vpop.f32.mrf.mxu0
    %v1090 = vadd.f32 %v1008, %v1089
    %1091 = vmatmul.f32.gmra.mxu0 %v877
    %v1092 = vpop.f32.mrf.mxu0
    %v1093 = vadd.f32 %v1008, %v1092
    %1094 = vmatmul.f32.gmra.mxu0 %v880
    %v1095 = vpop.f32.mrf.mxu0
    %v1096 = vadd.f32 %v1008, %v1095
    %1097 = vmatmul.f32.gmra.mxu0 %v883
    %v1098 = vpop.f32.mrf.mxu0
    %v1099 = vadd.f32 %v1008, %v1098
    %1100 = vmatmul.f32.gmra.mxu0 %v886
    %v1101 = vpop.f32.mrf.mxu0
    %v1102 = vadd.f32 %v1008, %v1101
    %1103 = vmatmul.f32.gmra.mxu0 %v889
    %v1104 = vpop.f32.mrf.mxu0
    %v1105 = vadd.f32 %v1008, %v1104
    %1106 = vmatmul.f32.gmra.mxu0 %v892
    %v1107 = vpop.f32.mrf.mxu0
    %v1108 = vadd.f32 %v1008, %v1107
    %1109 = vmatmul.f32.gmra.mxu0 %v895
    %v1110 = vpop.f32.mrf.mxu0
    %v1111 = vadd.f32 %v1008, %v1110
    %1112 = vmatmul.f32.gmra.mxu0 %v898
    %v1113 = vpop.f32.mrf.mxu0
    %v1114 = vadd.f32 %v1008, %v1113
    %1115 = vmatmul.f32.gmra.mxu0 %v901
    %v1116 = vpop.f32.mrf.mxu0
    %v1117 = vadd.f32 %v1008, %v1116
    %1118 = vmatmul.f32.gmra.mxu0 %v904
    %v1119 = vpop.f32.mrf.mxu0
    %v1120 = vadd.f32 %v1008, %v1119
    %1121 = vmatmul.f32.gmra.mxu0 %v907
    %v1122 = vpop.f32.mrf.mxu0
    %v1123 = vadd.f32 %v1008, %v1122
    %1124 = vdwg.mxu0
    %1125 = vmatpush.msra.mxu0 %v972
    %1126 = vmatpush.msra.mxu0 %v970
    %1127 = vmatpush.msra.mxu0 %v968
    %1128 = vmatpush.msra.mxu0 %v966
    %1129 = vmatpush.msra.mxu0 %v964
    %1130 = vmatpush.msra.mxu0 %v962
    %1131 = vmatpush.msra.mxu0 %v960
    %1132 = vmatpush.msra.mxu0 %v958
    %1133 = vmatpush.msra.mxu0 %v956
    %1134 = vmatpush.msra.mxu0 %v954
    %1135 = vmatpush.msra.mxu0 %v952
    %1136 = vmatpush.msra.mxu0 %v950
    %1137 = vmatpush.msra.mxu0 %v948
    %1138 = vmatpush.msra.mxu0 %v946
    %1139 = vmatpush.msra.mxu0 %v944
    %1140 = vmatpush.msra.mxu0 %v942
    %1141 = vmatmul.f32.gmra.mxu0 %v815
    %v1142 = vpop.f32.mrf.mxu0
    %v1143 = vadd.f32 %v1030, %v1142
    %1144 = vmatmul.f32.gmra.mxu0 %v818
    %v1145 = vpop.f32.mrf.mxu0
    %v1146 = vadd.f32 %v1033, %v1145
    %1147 = vmatmul.f32.gmra.mxu0 %v821
    %v1148 = vpop.f32.mrf.mxu0
    %v1149 = vadd.f32 %v1036, %v1148
    %1150 = vmatmul.f32.gmra.mxu0 %v824
    %v1151 = vpop.f32.mrf.mxu0
    %v1152 = vadd.f32 %v1039, %v1151
    %1153 = vmatmul.f32.gmra.mxu0 %v827
    %v1154 = vpop.f32.mrf.mxu0
    %v1155 = vadd.f32 %v1042, %v1154
    %1156 = vmatmul.f32.gmra.mxu0 %v830
    %v1157 = vpop.f32.mrf.mxu0
    %v1158 = vadd.f32 %v1045, %v1157
    %1159 = vmatmul.f32.gmra.mxu0 %v833
    %v1160 = vpop.f32.mrf.mxu0
    %v1161 = vadd.f32 %v1048, %v1160
    %1162 = vmatmul.f32.gmra.mxu0 %v836
    %v1163 = vpop.f32.mrf.mxu0
    %v1164 = vadd.f32 %v1051, %v1163
    %1165 = vmatmul.f32.gmra.mxu0 %v839
    %v1166 = vpop.f32.mrf.mxu0
    %v1167 = vadd.f32 %v1054, %v1166
    %1168 = vmatmul.f32.gmra.mxu0 %v842
    %v1169 = vpop.f32.mrf.mxu0
    %v1170 = vadd.f32 %v1057, %v1169
    %1171 = vmatmul.f32.gmra.mxu0 %v845
    %v1172 = vpop.f32.mrf.mxu0
    %v1173 = vadd.f32 %v1060, %v1172
    %1174 = vmatmul.f32.gmra.mxu0 %v848
    %v1175 = vpop.f32.mrf.mxu0
    %v1176 = vadd.f32 %v1063, %v1175
    %1177 = vmatmul.f32.gmra.mxu0 %v851
    %v1178 = vpop.f32.mrf.mxu0
    %v1179 = vadd.f32 %v1066, %v1178
    %1180 = vmatmul.f32.gmra.mxu0 %v854
    %v1181 = vpop.f32.mrf.mxu0
    %v1182 = vadd.f32 %v1069, %v1181
    %1183 = vmatmul.f32.gmra.mxu0 %v857
    %v1184 = vpop.f32.mrf.mxu0
    %v1185 = vadd.f32 %v1072, %v1184
    %1186 = vmatmul.f32.gmra.mxu0 %v860
    %v1187 = vpop.f32.mrf.mxu0
    %v1188 = vadd.f32 %v1075, %v1187
    %1189 = vmatmul.f32.gmra.mxu0 %v863
    %v1190 = vpop.f32.mrf.mxu0
    %v1191 = vadd.f32 %v1078, %v1190
    %1192 = vmatmul.f32.gmra.mxu0 %v866
    %v1193 = vpop.f32.mrf.mxu0
    %v1194 = vadd.f32 %v1081, %v1193
    %1195 = vmatmul.f32.gmra.mxu0 %v869
    %v1196 = vpop.f32.mrf.mxu0
    %v1197 = vadd.f32 %v1084, %v1196
    %1198 = vmatmul.f32.gmra.mxu0 %v872
    %v1199 = vpop.f32.mrf.mxu0
    %v1200 = vadd.f32 %v1087, %v1199
    %1201 = vmatmul.f32.gmra.mxu0 %v875
    %v1202 = vpop.f32.mrf.mxu0
    %v1203 = vadd.f32 %v1090, %v1202
    %1204 = vmatmul.f32.gmra.mxu0 %v878
    %v1205 = vpop.f32.mrf.mxu0
    %v1206 = vadd.f32 %v1093, %v1205
    %1207 = vmatmul.f32.gmra.mxu0 %v881
    %v1208 = vpop.f32.mrf.mxu0
    %v1209 = vadd.f32 %v1096, %v1208
    %1210 = vmatmul.f32.gmra.mxu0 %v884
    %v1211 = vpop.f32.mrf.mxu0
    %v1212 = vadd.f32 %v1099, %v1211
    %1213 = vmatmul.f32.gmra.mxu0 %v887
    %v1214 = vpop.f32.mrf.mxu0
    %v1215 = vadd.f32 %v1102, %v1214
    %1216 = vmatmul.f32.gmra.mxu0 %v890
    %v1217 = vpop.f32.mrf.mxu0
    %v1218 = vadd.f32 %v1105, %v1217
    %1219 = vmatmul.f32.gmra.mxu0 %v893
    %v1220 = vpop.f32.mrf.mxu0
    %v1221 = vadd.f32 %v1108, %v1220
    %1222 = vmatmul.f32.gmra.mxu0 %v896
    %v1223 = vpop.f32.mrf.mxu0
    %v1224 = vadd.f32 %v1111, %v1223
    %1225 = vmatmul.f32.gmra.mxu0 %v899
    %v1226 = vpop.f32.mrf.mxu0
    %v1227 = vadd.f32 %v1114, %v1226
    %1228 = vmatmul.f32.gmra.mxu0 %v902
    %v1229 = vpop.f32.mrf.mxu0
    %v1230 = vadd.f32 %v1117, %v1229
    %1231 = vmatmul.f32.gmra.mxu0 %v905
    %v1232 = vpop.f32.mrf.mxu0
    %v1233 = vadd.f32 %v1120, %v1232
    %1234 = vmatmul.f32.gmra.mxu0 %v908
    %v1235 = vpop.f32.mrf.mxu0
    %v1236 = vadd.f32 %v1123, %v1235
    %1237 = vdwg.mxu0
    %1238 = vmatpush.msra.mxu0 %v1004
    %1239 = vmatpush.msra.mxu0 %v1002
    %1240 = vmatpush.msra.mxu0 %v1000
    %1241 = vmatpush.msra.mxu0 %v998
    %1242 = vmatpush.msra.mxu0 %v996
    %1243 = vmatpush.msra.mxu0 %v994
    %1244 = vmatpush.msra.mxu0 %v992
    %1245 = vmatpush.msra.mxu0 %v990
    %1246 = vmatpush.msra.mxu0 %v988
    %1247 = vmatpush.msra.mxu0 %v986
    %1248 = vmatpush.msra.mxu0 %v984
    %1249 = vmatpush.msra.mxu0 %v982
    %1250 = vmatpush.msra.mxu0 %v980
    %1251 = vmatpush.msra.mxu0 %v978
    %1252 = vmatpush.msra.mxu0 %v976
    %1253 = vmatpush.msra.mxu0 %v974
    %1254 = vmatmul.f32.gmra.mxu0 %v816
    %v1255 = vpop.f32.mrf.mxu0
    %v1256 = vadd.f32 %v1143, %v1255
    %1257 = vmatmul.f32.gmra.mxu0 %v819
    %v1258 = vpop.f32.mrf.mxu0
    %v1259 = vadd.f32 %v1146, %v1258
    %1260 = vmatmul.f32.gmra.mxu0 %v822
    %v1261 = vpop.f32.mrf.mxu0
    %v1262 = vadd.f32 %v1149, %v1261
    %1263 = vmatmul.f32.gmra.mxu0 %v825
    %v1264 = vpop.f32.mrf.mxu0
    %v1265 = vadd.f32 %v1152, %v1264
    %1266 = vmatmul.f32.gmra.mxu0 %v828
    %v1267 = vpop.f32.mrf.mxu0
    %v1268 = vadd.f32 %v1155, %v1267
    %1269 = vmatmul.f32.gmra.mxu0 %v831
    %v1270 = vpop.f32.mrf.mxu0
    %v1271 = vadd.f32 %v1158, %v1270
    %1272 = vmatmul.f32.gmra.mxu0 %v834
    %v1273 = vpop.f32.mrf.mxu0
    %v1274 = vadd.f32 %v1161, %v1273
    %1275 = vmatmul.f32.gmra.mxu0 %v837
    %v1276 = vpop.f32.mrf.mxu0
    %v1277 = vadd.f32 %v1164, %v1276
    %1278 = vmatmul.f32.gmra.mxu0 %v840
    %v1279 = vpop.f32.mrf.mxu0
    %v1280 = vadd.f32 %v1167, %v1279
    %1281 = vmatmul.f32.gmra.mxu0 %v843
    %v1282 = vpop.f32.mrf.mxu0
    %v1283 = vadd.f32 %v1170, %v1282
    %1284 = vmatmul.f32.gmra.mxu0 %v846
    %v1285 = vpop.f32.mrf.mxu0
    %v1286 = vadd.f32 %v1173, %v1285
    %1287 = vmatmul.f32.gmra.mxu0 %v849
    %v1288 = vpop.f32.mrf.mxu0
    %v1289 = vadd.f32 %v1176, %v1288
    %1290 = vmatmul.f32.gmra.mxu0 %v852
    %v1291 = vpop.f32.mrf.mxu0
    %v1292 = vadd.f32 %v1179, %v1291
    %1293 = vmatmul.f32.gmra.mxu0 %v855
    %v1294 = vpop.f32.mrf.mxu0
    %v1295 = vadd.f32 %v1182, %v1294
    %1296 = vmatmul.f32.gmra.mxu0 %v858
    %v1297 = vpop.f32.mrf.mxu0
    %v1298 = vadd.f32 %v1185, %v1297
    %1299 = vmatmul.f32.gmra.mxu0 %v861
    %v1300 = vpop.f32.mrf.mxu0
    %v1301 = vadd.f32 %v1188, %v1300
    %1302 = vmatmul.f32.gmra.mxu0 %v864
    %v1303 = vpop.f32.mrf.mxu0
    %v1304 = vadd.f32 %v1191, %v1303
    %1305 = vmatmul.f32.gmra.mxu0 %v867
    %v1306 = vpop.f32.mrf.mxu0
    %v1307 = vadd.f32 %v1194, %v1306
    %1308 = vmatmul.f32.gmra.mxu0 %v870
    %v1309 = vpop.f32.mrf.mxu0
    %v1310 = vadd.f32 %v1197, %v1309
    %1311 = vmatmul.f32.gmra.mxu0 %v873
    %v1312 = vpop.f32.mrf.mxu0
    %v1313 = vadd.f32 %v1200, %v1312
    %1314 = vmatmul.f32.gmra.mxu0 %v876
    %v1315 = vpop.f32.mrf.mxu0
    %v1316 = vadd.f32 %v1203, %v1315
    %1317 = vmatmul.f32.gmra.mxu0 %v879
    %v1318 = vpop.f32.mrf.mxu0
    %v1319 = vadd.f32 %v1206, %v1318
    %1320 = vmatmul.f32.gmra.mxu0 %v882
    %v1321 = vpop.f32.mrf.mxu0
    %v1322 = vadd.f32 %v1209, %v1321
    %1323 = vmatmul.f32.gmra.mxu0 %v885
    %v1324 = vpop.f32.mrf.mxu0
    %v1325 = vadd.f32 %v1212, %v1324
    %1326 = vmatmul.f32.gmra.mxu0 %v888
    %v1327 = vpop.f32.mrf.mxu0
    %v1328 = vadd.f32 %v1215, %v1327
    %1329 = vmatmul.f32.gmra.mxu0 %v891
    %v1330 = vpop.f32.mrf.mxu0
    %v1331 = vadd.f32 %v1218, %v1330
    %1332 = vmatmul.f32.gmra.mxu0 %v894
    %v1333 = vpop.f32.mrf.mxu0
    %v1334 = vadd.f32 %v1221, %v1333
    %1335 = vmatmul.f32.gmra.mxu0 %v897
    %v1336 = vpop.f32.mrf.mxu0
    %v1337 = vadd.f32 %v1224, %v1336
    %1338 = vmatmul.f32.gmra.mxu0 %v900
    %v1339 = vpop.f32.mrf.mxu0
    %v1340 = vadd.f32 %v1227, %v1339
    %1341 = vmatmul.f32.gmra.mxu0 %v903
    %v1342 = vpop.f32.mrf.mxu0
    %v1343 = vadd.f32 %v1230, %v1342
    %1344 = vmatmul.f32.gmra.mxu0 %v906
    %v1345 = vpop.f32.mrf.mxu0
    %v1346 = vadd.f32 %v1233, %v1345
    %1347 = vmatmul.f32.gmra.mxu0 %v909
    %v1348 = vpop.f32.mrf.mxu0
    %v1349 = vadd.f32 %v1236, %v1348
    %1350 = vdwg.mxu0
    %1351 = vmatpush.msra.mxu0 %v941
    %1352 = vmatpush.msra.mxu0 %v939
    %1353 = vmatpush.msra.mxu0 %v937
    %1354 = vmatpush.msra.mxu0 %v935
    %1355 = vmatpush.msra.mxu0 %v933
    %1356 = vmatpush.msra.mxu0 %v931
    %1357 = vmatpush.msra.mxu0 %v929
    %1358 = vmatpush.msra.mxu0 %v927
    %1359 = vmatpush.msra.mxu0 %v925
    %1360 = vmatpush.msra.mxu0 %v923
    %1361 = vmatpush.msra.mxu0 %v921
    %1362 = vmatpush.msra.mxu0 %v919
    %1363 = vmatpush.msra.mxu0 %v917
    %1364 = vmatpush.msra.mxu0 %v915
    %1365 = vmatpush.msra.mxu0 %v913
    %1366 = vmatpush.msra.mxu0 %v911
    %1367 = vmatmul.f32.gmra.mxu0 %v814
    %v1368 = vpop.f32.mrf.mxu0
    %v1369 = vadd.f32 %v1009, %v1368
    %1370 = vmatmul.f32.gmra.mxu0 %v817
    %v1371 = vpop.f32.mrf.mxu0
    %v1372 = vadd.f32 %v1009, %v1371
    %1373 = vmatmul.f32.gmra.mxu0 %v820
    %v1374 = vpop.f32.mrf.mxu0
    %v1375 = vadd.f32 %v1009, %v1374
    %1376 = vmatmul.f32.gmra.mxu0 %v823
    %v1377 = vpop.f32.mrf.mxu0
    %v1378 = vadd.f32 %v1009, %v1377
    %1379 = vmatmul.f32.gmra.mxu0 %v826
    %v1380 = vpop.f32.mrf.mxu0
    %v1381 = vadd.f32 %v1009, %v1380
    %1382 = vmatmul.f32.gmra.mxu0 %v829
    %v1383 = vpop.f32.mrf.mxu0
    %v1384 = vadd.f32 %v1009, %v1383
    %1385 = vmatmul.f32.gmra.mxu0 %v832
    %v1386 = vpop.f32.mrf.mxu0
    %v1387 = vadd.f32 %v1009, %v1386
    %1388 = vmatmul.f32.gmra.mxu0 %v835
    %v1389 = vpop.f32.mrf.mxu0
    %v1390 = vadd.f32 %v1009, %v1389
    %1391 = vmatmul.f32.gmra.mxu0 %v838
    %v1392 = vpop.f32.mrf.mxu0
    %v1393 = vadd.f32 %v1009, %v1392
    %1394 = vmatmul.f32.gmra.mxu0 %v841
    %v1395 = vpop.f32.mrf.mxu0
    %v1396 = vadd.f32 %v1009, %v1395
    %1397 = vmatmul.f32.gmra.mxu0 %v844
    %v1398 = vpop.f32.mrf.mxu0
    %v1399 = vadd.f32 %v1009, %v1398
    %1400 = vmatmul.f32.gmra.mxu0 %v847
    %v1401 = vpop.f32.mrf.mxu0
    %v1402 = vadd.f32 %v1009, %v1401
    %1403 = vmatmul.f32.gmra.mxu0 %v850
    %v1404 = vpop.f32.mrf.mxu0
    %v1405 = vadd.f32 %v1009, %v1404
    %1406 = vmatmul.f32.gmra.mxu0 %v853
    %v1407 = vpop.f32.mrf.mxu0
    %v1408 = vadd.f32 %v1009, %v1407
    %1409 = vmatmul.f32.gmra.mxu0 %v856
    %v1410 = vpop.f32.mrf.mxu0
    %v1411 = vadd.f32 %v1009, %v1410
    %1412 = vmatmul.f32.gmra.mxu0 %v859
    %v1413 = vpop.f32.mrf.mxu0
    %v1414 = vadd.f32 %v1009, %v1413
    %1415 = vmatmul.f32.gmra.mxu0 %v862
    %v1416 = vpop.f32.mrf.mxu0
    %v1417 = vadd.f32 %v1009, %v1416
    %1418 = vmatmul.f32.gmra.mxu0 %v865
    %v1419 = vpop.f32.mrf.mxu0
    %v1420 = vadd.f32 %v1009, %v1419
    %1421 = vmatmul.f32.gmra.mxu0 %v868
    %v1422 = vpop.f32.mrf.mxu0
    %v1423 = vadd.f32 %v1009, %v1422
    %1424 = vmatmul.f32.gmra.mxu0 %v871
    %v1425 = vpop.f32.mrf.mxu0
    %v1426 = vadd.f32 %v1009, %v1425
    %1427 = vmatmul.f32.gmra.mxu0 %v874
    %v1428 = vpop.f32.mrf.mxu0
    %v1429 = vadd.f32 %v1009, %v1428
    %1430 = vmatmul.f32.gmra.mxu0 %v877
    %v1431 = vpop.f32.mrf.mxu0
    %v1432 = vadd.f32 %v1009, %v1431
    %1433 = vmatmul.f32.gmra.mxu0 %v880
    %v1434 = vpop.f32.mrf.mxu0
    %v1435 = vadd.f32 %v1009, %v1434
    %1436 = vmatmul.f32.gmra.mxu0 %v883
    %v1437 = vpop.f32.mrf.mxu0
    %v1438 = vadd.f32 %v1009, %v1437
    %1439 = vmatmul.f32.gmra.mxu0 %v886
    %v1440 = vpop.f32.mrf.mxu0
    %v1441 = vadd.f32 %v1009, %v1440
    %1442 = vmatmul.f32.gmra.mxu0 %v889
    %v1443 = vpop.f32.mrf.mxu0
    %v1444 = vadd.f32 %v1009, %v1443
    %1445 = vmatmul.f32.gmra.mxu0 %v892
    %v1446 = vpop.f32.mrf.mxu0
    %v1447 = vadd.f32 %v1009, %v1446
    %1448 = vmatmul.f32.gmra.mxu0 %v895
    %v1449 = vpop.f32.mrf.mxu0
    %v1450 = vadd.f32 %v1009, %v1449
    %1451 = vmatmul.f32.gmra.mxu0 %v898
    %v1452 = vpop.f32.mrf.mxu0
    %v1453 = vadd.f32 %v1009, %v1452
    %1454 = vmatmul.f32.gmra.mxu0 %v901
    %v1455 = vpop.f32.mrf.mxu0
    %v1456 = vadd.f32 %v1009, %v1455
    %1457 = vmatmul.f32.gmra.mxu0 %v904
    %v1458 = vpop.f32.mrf.mxu0
    %v1459 = vadd.f32 %v1009, %v1458
    %1460 = vmatmul.f32.gmra.mxu0 %v907
    %v1461 = vpop.f32.mrf.mxu0
    %v1462 = vadd.f32 %v1009, %v1461
    %1463 = vdwg.mxu0
    %1464 = vmatpush.msra.mxu0 %v973
    %1465 = vmatpush.msra.mxu0 %v971
    %1466 = vmatpush.msra.mxu0 %v969
    %1467 = vmatpush.msra.mxu0 %v967
    %1468 = vmatpush.msra.mxu0 %v965
    %1469 = vmatpush.msra.mxu0 %v963
    %1470 = vmatpush.msra.mxu0 %v961
    %1471 = vmatpush.msra.mxu0 %v959
    %1472 = vmatpush.msra.mxu0 %v957
    %1473 = vmatpush.msra.mxu0 %v955
    %1474 = vmatpush.msra.mxu0 %v953
    %1475 = vmatpush.msra.mxu0 %v951
    %1476 = vmatpush.msra.mxu0 %v949
    %1477 = vmatpush.msra.mxu0 %v947
    %1478 = vmatpush.msra.mxu0 %v945
    %1479 = vmatpush.msra.mxu0 %v943
    %1480 = vmatmul.f32.gmra.mxu0 %v815
    %v1481 = vpop.f32.mrf.mxu0
    %v1482 = vadd.f32 %v1369, %v1481
    %1483 = vmatmul.f32.gmra.mxu0 %v818
    %v1484 = vpop.f32.mrf.mxu0
    %v1485 = vadd.f32 %v1372, %v1484
    %1486 = vmatmul.f32.gmra.mxu0 %v821
    %v1487 = vpop.f32.mrf.mxu0
    %v1488 = vadd.f32 %v1375, %v1487
    %1489 = vmatmul.f32.gmra.mxu0 %v824
    %v1490 = vpop.f32.mrf.mxu0
    %v1491 = vadd.f32 %v1378, %v1490
    %1492 = vmatmul.f32.gmra.mxu0 %v827
    %v1493 = vpop.f32.mrf.mxu0
    %v1494 = vadd.f32 %v1381, %v1493
    %1495 = vmatmul.f32.gmra.mxu0 %v830
    %v1496 = vpop.f32.mrf.mxu0
    %v1497 = vadd.f32 %v1384, %v1496
    %1498 = vmatmul.f32.gmra.mxu0 %v833
    %v1499 = vpop.f32.mrf.mxu0
    %v1500 = vadd.f32 %v1387, %v1499
    %1501 = vmatmul.f32.gmra.mxu0 %v836
    %v1502 = vpop.f32.mrf.mxu0
    %v1503 = vadd.f32 %v1390, %v1502
    %1504 = vmatmul.f32.gmra.mxu0 %v839
    %v1505 = vpop.f32.mrf.mxu0
    %v1506 = vadd.f32 %v1393, %v1505
    %1507 = vmatmul.f32.gmra.mxu0 %v842
    %v1508 = vpop.f32.mrf.mxu0
    %v1509 = vadd.f32 %v1396, %v1508
    %1510 = vmatmul.f32.gmra.mxu0 %v845
    %v1511 = vpop.f32.mrf.mxu0
    %v1512 = vadd.f32 %v1399, %v1511
    %1513 = vmatmul.f32.gmra.mxu0 %v848
    %v1514 = vpop.f32.mrf.mxu0
    %v1515 = vadd.f32 %v1402, %v1514
    %1516 = vmatmul.f32.gmra.mxu0 %v851
    %v1517 = vpop.f32.mrf.mxu0
    %v1518 = vadd.f32 %v1405, %v1517
    %1519 = vmatmul.f32.gmra.mxu0 %v854
    %v1520 = vpop.f32.mrf.mxu0
    %v1521 = vadd.f32 %v1408, %v1520
    %1522 = vmatmul.f32.gmra.mxu0 %v857
    %v1523 = vpop.f32.mrf.mxu0
    %v1524 = vadd.f32 %v1411, %v1523
    %1525 = vmatmul.f32.gmra.mxu0 %v860
    %v1526 = vpop.f32.mrf.mxu0
    %v1527 = vadd.f32 %v1414, %v1526
    %1528 = vmatmul.f32.gmra.mxu0 %v863
    %v1529 = vpop.f32.mrf.mxu0
    %v1530 = vadd.f32 %v1417, %v1529
    %1531 = vmatmul.f32.gmra.mxu0 %v866
    %v1532 = vpop.f32.mrf.mxu0
    %v1533 = vadd.f32 %v1420, %v1532
    %1534 = vmatmul.f32.gmra.mxu0 %v869
    %v1535 = vpop.f32.mrf.mxu0
    %v1536 = vadd.f32 %v1423, %v1535
    %1537 = vmatmul.f32.gmra.mxu0 %v872
    %v1538 = vpop.f32.mrf.mxu0
    %v1539 = vadd.f32 %v1426, %v1538
    %1540 = vmatmul.f32.gmra.mxu0 %v875
    %v1541 = vpop.f32.mrf.mxu0
    %v1542 = vadd.f32 %v1429, %v1541
    %1543 = vmatmul.f32.gmra.mxu0 %v878
    %v1544 = vpop.f32.mrf.mxu0
    %v1545 = vadd.f32 %v1432, %v1544
    %1546 = vmatmul.f32.gmra.mxu0 %v881
    %v1547 = vpop.f32.mrf.mxu0
    %v1548 = vadd.f32 %v1435, %v1547
    %1549 = vmatmul.f32.gmra.mxu0 %v884
    %v1550 = vpop.f32.mrf.mxu0
    %v1551 = vadd.f32 %v1438, %v1550
    %1552 = vmatmul.f32.gmra.mxu0 %v887
    %v1553 = vpop.f32.mrf.mxu0
    %v1554 = vadd.f32 %v1441, %v1553
    %1555 = vmatmul.f32.gmra.mxu0 %v890
    %v1556 = vpop.f32.mrf.mxu0
    %v1557 = vadd.f32 %v1444, %v1556
    %1558 = vmatmul.f32.gmra.mxu0 %v893
    %v1559 = vpop.f32.mrf.mxu0
    %v1560 = vadd.f32 %v1447, %v1559
    %1561 = vmatmul.f32.gmra.mxu0 %v896
    %v1562 = vpop.f32.mrf.mxu0
    %v1563 = vadd.f32 %v1450, %v1562
    %1564 = vmatmul.f32.gmra.mxu0 %v899
    %v1565 = vpop.f32.mrf.mxu0
    %v1566 = vadd.f32 %v1453, %v1565
    %1567 = vmatmul.f32.gmra.mxu0 %v902
    %v1568 = vpop.f32.mrf.mxu0
    %v1569 = vadd.f32 %v1456, %v1568
    %1570 = vmatmul.f32.gmra.mxu0 %v905
    %v1571 = vpop.f32.mrf.mxu0
    %v1572 = vadd.f32 %v1459, %v1571
    %1573 = vmatmul.f32.gmra.mxu0 %v908
    %v1574 = vpop.f32.mrf.mxu0
    %v1575 = vadd.f32 %v1462, %v1574
    %1576 = vdwg.mxu0
    %1577 = vmatpush.msra.mxu0 %v1005
    %1578 = vmatpush.msra.mxu0 %v1003
    %1579 = vmatpush.msra.mxu0 %v1001
    %1580 = vmatpush.msra.mxu0 %v999
    %1581 = vmatpush.msra.mxu0 %v997
    %1582 = vmatpush.msra.mxu0 %v995
    %1583 = vmatpush.msra.mxu0 %v993
    %1584 = vmatpush.msra.mxu0 %v991
    %1585 = vmatpush.msra.mxu0 %v989
    %1586 = vmatpush.msra.mxu0 %v987
    %1587 = vmatpush.msra.mxu0 %v985
    %1588 = vmatpush.msra.mxu0 %v983
    %1589 = vmatpush.msra.mxu0 %v981
    %1590 = vmatpush.msra.mxu0 %v979
    %1591 = vmatpush.msra.mxu0 %v977
    %1592 = vmatpush.msra.mxu0 %v975
    %1593 = vmatmul.f32.gmra.mxu0 %v816
    %v1594 = vpop.f32.mrf.mxu0
    %v1595 = vadd.f32 %v1482, %v1594
    %1596 = vmatmul.f32.gmra.mxu0 %v819
    %v1597 = vpop.f32.mrf.mxu0
    %v1598 = vadd.f32 %v1485, %v1597
    %1599 = vmatmul.f32.gmra.mxu0 %v822
    %v1600 = vpop.f32.mrf.mxu0
    %v1601 = vadd.f32 %v1488, %v1600
    %1602 = vmatmul.f32.gmra.mxu0 %v825
    %v1603 = vpop.f32.mrf.mxu0
    %v1604 = vadd.f32 %v1491, %v1603
    %1605 = vmatmul.f32.gmra.mxu0 %v828
    %v1606 = vpop.f32.mrf.mxu0
    %v1607 = vadd.f32 %v1494, %v1606
    %1608 = vmatmul.f32.gmra.mxu0 %v831
    %v1609 = vpop.f32.mrf.mxu0
    %v1610 = vadd.f32 %v1497, %v1609
    %1611 = vmatmul.f32.gmra.mxu0 %v834
    %v1612 = vpop.f32.mrf.mxu0
    %v1613 = vadd.f32 %v1500, %v1612
    %1614 = vmatmul.f32.gmra.mxu0 %v837
    %v1615 = vpop.f32.mrf.mxu0
    %v1616 = vadd.f32 %v1503, %v1615
    %1617 = vmatmul.f32.gmra.mxu0 %v840
    %v1618 = vpop.f32.mrf.mxu0
    %v1619 = vadd.f32 %v1506, %v1618
    %1620 = vmatmul.f32.gmra.mxu0 %v843
    %v1621 = vpop.f32.mrf.mxu0
    %v1622 = vadd.f32 %v1509, %v1621
    %1623 = vmatmul.f32.gmra.mxu0 %v846
    %v1624 = vpop.f32.mrf.mxu0
    %v1625 = vadd.f32 %v1512, %v1624
    %1626 = vmatmul.f32.gmra.mxu0 %v849
    %v1627 = vpop.f32.mrf.mxu0
    %v1628 = vadd.f32 %v1515, %v1627
    %1629 = vmatmul.f32.gmra.mxu0 %v852
    %v1630 = vpop.f32.mrf.mxu0
    %v1631 = vadd.f32 %v1518, %v1630
    %1632 = vmatmul.f32.gmra.mxu0 %v855
    %v1633 = vpop.f32.mrf.mxu0
    %v1634 = vadd.f32 %v1521, %v1633
    %1635 = vmatmul.f32.gmra.mxu0 %v858
    %v1636 = vpop.f32.mrf.mxu0
    %v1637 = vadd.f32 %v1524, %v1636
    %1638 = vmatmul.f32.gmra.mxu0 %v861
    %v1639 = vpop.f32.mrf.mxu0
    %v1640 = vadd.f32 %v1527, %v1639
    %1641 = vmatmul.f32.gmra.mxu0 %v864
    %v1642 = vpop.f32.mrf.mxu0
    %v1643 = vadd.f32 %v1530, %v1642
    %1644 = vmatmul.f32.gmra.mxu0 %v867
    %v1645 = vpop.f32.mrf.mxu0
    %v1646 = vadd.f32 %v1533, %v1645
    %1647 = vmatmul.f32.gmra.mxu0 %v870
    %v1648 = vpop.f32.mrf.mxu0
    %v1649 = vadd.f32 %v1536, %v1648
    %1650 = vmatmul.f32.gmra.mxu0 %v873
    %v1651 = vpop.f32.mrf.mxu0
    %v1652 = vadd.f32 %v1539, %v1651
    %1653 = vmatmul.f32.gmra.mxu0 %v876
    %v1654 = vpop.f32.mrf.mxu0
    %v1655 = vadd.f32 %v1542, %v1654
    %1656 = vmatmul.f32.gmra.mxu0 %v879
    %v1657 = vpop.f32.mrf.mxu0
    %v1658 = vadd.f32 %v1545, %v1657
    %1659 = vmatmul.f32.gmra.mxu0 %v882
    %v1660 = vpop.f32.mrf.mxu0
    %v1661 = vadd.f32 %v1548, %v1660
    %1662 = vmatmul.f32.gmra.mxu0 %v885
    %v1663 = vpop.f32.mrf.mxu0
    %v1664 = vadd.f32 %v1551, %v1663
    %1665 = vmatmul.f32.gmra.mxu0 %v888
    %v1666 = vpop.f32.mrf.mxu0
    %v1667 = vadd.f32 %v1554, %v1666
    %1668 = vmatmul.f32.gmra.mxu0 %v891
    %v1669 = vpop.f32.mrf.mxu0
    %v1670 = vadd.f32 %v1557, %v1669
    %1671 = vmatmul.f32.gmra.mxu0 %v894
    %v1672 = vpop.f32.mrf.mxu0
    %v1673 = vadd.f32 %v1560, %v1672
    %1674 = vmatmul.f32.gmra.mxu0 %v897
    %v1675 = vpop.f32.mrf.mxu0
    %v1676 = vadd.f32 %v1563, %v1675
    %1677 = vmatmul.f32.gmra.mxu0 %v900
    %v1678 = vpop.f32.mrf.mxu0
    %v1679 = vadd.f32 %v1566, %v1678
    %1680 = vmatmul.f32.gmra.mxu0 %v903
    %v1681 = vpop.f32.mrf.mxu0
    %v1682 = vadd.f32 %v1569, %v1681
    %1683 = vmatmul.f32.gmra.mxu0 %v906
    %v1684 = vpop.f32.mrf.mxu0
    %v1685 = vadd.f32 %v1572, %v1684
    %1686 = vmatmul.f32.gmra.mxu0 %v909
    %v1687 = vpop.f32.mrf.mxu0
    %v1688 = vadd.f32 %v1575, %v1687
    %1689 = vdwg.mxu0
    %1690 = vmatpush.msra.mxu0 %v1301
    %1691 = vmatpush.msra.mxu0 %v1298
    %1692 = vmatpush.msra.mxu0 %v1295
    %1693 = vmatpush.msra.mxu0 %v1292
    %1694 = vmatpush.msra.mxu0 %v1289
    %1695 = vmatpush.msra.mxu0 %v1286
    %1696 = vmatpush.msra.mxu0 %v1283
    %1697 = vmatpush.msra.mxu0 %v1280
    %1698 = vmatpush.msra.mxu0 %v1277
    %1699 = vmatpush.msra.mxu0 %v1274
    %1700 = vmatpush.msra.mxu0 %v1271
    %1701 = vmatpush.msra.mxu0 %v1268
    %1702 = vmatpush.msra.mxu0 %v1265
    %1703 = vmatpush.msra.mxu0 %v1262
    %1704 = vmatpush.msra.mxu0 %v1259
    %1705 = vmatpush.msra.mxu0 %v1256
    %1706 = vmatmul.f32.gmra.mxu0 %v105
    %v1707 = vpop.f32.mrf.mxu0
    %v1708 = vadd.f32 0.0, %v1707
    %1709 = vmatmul.f32.gmra.mxu0 %v107
    %v1710 = vpop.f32.mrf.mxu0
    %v1711 = vadd.f32 0.0, %v1710
    %1712 = vmatmul.f32.gmra.mxu0 %v109
    %v1713 = vpop.f32.mrf.mxu0
    %v1714 = vadd.f32 0.0, %v1713
    %1715 = vmatmul.f32.gmra.mxu0 %v111
    %v1716 = vpop.f32.mrf.mxu0
    %v1717 = vadd.f32 0.0, %v1716
    %1718 = vmatmul.f32.gmra.mxu0 %v113
    %v1719 = vpop.f32.mrf.mxu0
    %v1720 = vadd.f32 0.0, %v1719
    %1721 = vmatmul.f32.gmra.mxu0 %v115
    %v1722 = vpop.f32.mrf.mxu0
    %v1723 = vadd.f32 0.0, %v1722
    %1724 = vmatmul.f32.gmra.mxu0 %v117
    %v1725 = vpop.f32.mrf.mxu0
    %v1726 = vadd.f32 0.0, %v1725
    %1727 = vmatmul.f32.gmra.mxu0 %v119
    %v1728 = vpop.f32.mrf.mxu0
    %v1729 = vadd.f32 0.0, %v1728
    %1730 = vmatmul.f32.gmra.mxu0 %v121
    %v1731 = vpop.f32.mrf.mxu0
    %v1732 = vadd.f32 0.0, %v1731
    %1733 = vmatmul.f32.gmra.mxu0 %v123
    %v1734 = vpop.f32.mrf.mxu0
    %v1735 = vadd.f32 0.0, %v1734
    %1736 = vmatmul.f32.gmra.mxu0 %v125
    %v1737 = vpop.f32.mrf.mxu0
    %v1738 = vadd.f32 0.0, %v1737
    %1739 = vmatmul.f32.gmra.mxu0 %v127
    %v1740 = vpop.f32.mrf.mxu0
    %v1741 = vadd.f32 0.0, %v1740
    %1742 = vmatmul.f32.gmra.mxu0 %v129
    %v1743 = vpop.f32.mrf.mxu0
    %v1744 = vadd.f32 0.0, %v1743
    %1745 = vmatmul.f32.gmra.mxu0 %v131
    %v1746 = vpop.f32.mrf.mxu0
    %v1747 = vadd.f32 0.0, %v1746
    %1748 = vmatmul.f32.gmra.mxu0 %v133
    %v1749 = vpop.f32.mrf.mxu0
    %v1750 = vadd.f32 0.0, %v1749
    %1751 = vmatmul.f32.gmra.mxu0 %v135
    %v1752 = vpop.f32.mrf.mxu0
    %v1753 = vadd.f32 0.0, %v1752
    %1754 = vmatmul.f32.gmra.mxu0 %v137
    %v1755 = vpop.f32.mrf.mxu0
    %v1756 = vadd.f32 0.0, %v1755
    %1757 = vmatmul.f32.gmra.mxu0 %v139
    %v1758 = vpop.f32.mrf.mxu0
    %v1759 = vadd.f32 0.0, %v1758
    %1760 = vmatmul.f32.gmra.mxu0 %v141
    %v1761 = vpop.f32.mrf.mxu0
    %v1762 = vadd.f32 0.0, %v1761
    %1763 = vmatmul.f32.gmra.mxu0 %v143
    %v1764 = vpop.f32.mrf.mxu0
    %v1765 = vadd.f32 0.0, %v1764
    %1766 = vmatmul.f32.gmra.mxu0 %v145
    %v1767 = vpop.f32.mrf.mxu0
    %v1768 = vadd.f32 0.0, %v1767
    %1769 = vmatmul.f32.gmra.mxu0 %v147
    %v1770 = vpop.f32.mrf.mxu0
    %v1771 = vadd.f32 0.0, %v1770
    %1772 = vmatmul.f32.gmra.mxu0 %v149
    %v1773 = vpop.f32.mrf.mxu0
    %v1774 = vadd.f32 0.0, %v1773
    %1775 = vmatmul.f32.gmra.mxu0 %v151
    %v1776 = vpop.f32.mrf.mxu0
    %v1777 = vadd.f32 0.0, %v1776
    %1778 = vmatmul.f32.gmra.mxu0 %v153
    %v1779 = vpop.f32.mrf.mxu0
    %v1780 = vadd.f32 0.0, %v1779
    %1781 = vmatmul.f32.gmra.mxu0 %v155
    %v1782 = vpop.f32.mrf.mxu0
    %v1783 = vadd.f32 0.0, %v1782
    %1784 = vmatmul.f32.gmra.mxu0 %v157
    %v1785 = vpop.f32.mrf.mxu0
    %v1786 = vadd.f32 0.0, %v1785
    %1787 = vmatmul.f32.gmra.mxu0 %v159
    %v1788 = vpop.f32.mrf.mxu0
    %v1789 = vadd.f32 0.0, %v1788
    %1790 = vmatmul.f32.gmra.mxu0 %v161
    %v1791 = vpop.f32.mrf.mxu0
    %v1792 = vadd.f32 0.0, %v1791
    %1793 = vmatmul.f32.gmra.mxu0 %v163
    %v1794 = vpop.f32.mrf.mxu0
    %v1795 = vadd.f32 0.0, %v1794
    %1796 = vmatmul.f32.gmra.mxu0 %v165
    %v1797 = vpop.f32.mrf.mxu0
    %v1798 = vadd.f32 0.0, %v1797
    %1799 = vmatmul.f32.gmra.mxu0 %v167
    %v1800 = vpop.f32.mrf.mxu0
    %v1801 = vadd.f32 0.0, %v1800
    %1802 = vdwg.mxu0
    %1803 = vmatpush.msra.mxu0 %v1349
    %1804 = vmatpush.msra.mxu0 %v1346
    %1805 = vmatpush.msra.mxu0 %v1343
    %1806 = vmatpush.msra.mxu0 %v1340
    %1807 = vmatpush.msra.mxu0 %v1337
    %1808 = vmatpush.msra.mxu0 %v1334
    %1809 = vmatpush.msra.mxu0 %v1331
    %1810 = vmatpush.msra.mxu0 %v1328
    %1811 = vmatpush.msra.mxu0 %v1325
    %1812 = vmatpush.msra.mxu0 %v1322
    %1813 = vmatpush.msra.mxu0 %v1319
    %1814 = vmatpush.msra.mxu0 %v1316
    %1815 = vmatpush.msra.mxu0 %v1313
    %1816 = vmatpush.msra.mxu0 %v1310
    %1817 = vmatpush.msra.mxu0 %v1307
    %1818 = vmatpush.msra.mxu0 %v1304
    %1819 = vmatmul.f32.gmra.mxu0 %v106
    %v1820 = vpop.f32.mrf.mxu0
    %v1821 = vadd.f32 %v1708, %v1820
    %1822 = vmatmul.f32.gmra.mxu0 %v108
    %v1823 = vpop.f32.mrf.mxu0
    %v1824 = vadd.f32 %v1711, %v1823
    %1825 = vmatmul.f32.gmra.mxu0 %v110
    %v1826 = vpop.f32.mrf.mxu0
    %v1827 = vadd.f32 %v1714, %v1826
    %1828 = vmatmul.f32.gmra.mxu0 %v112
    %v1829 = vpop.f32.mrf.mxu0
    %v1830 = vadd.f32 %v1717, %v1829
    %1831 = vmatmul.f32.gmra.mxu0 %v114
    %v1832 = vpop.f32.mrf.mxu0
    %v1833 = vadd.f32 %v1720, %v1832
    %1834 = vmatmul.f32.gmra.mxu0 %v116
    %v1835 = vpop.f32.mrf.mxu0
    %v1836 = vadd.f32 %v1723, %v1835
    %1837 = vmatmul.f32.gmra.mxu0 %v118
    %v1838 = vpop.f32.mrf.mxu0
    %v1839 = vadd.f32 %v1726, %v1838
    %1840 = vmatmul.f32.gmra.mxu0 %v120
    %v1841 = vpop.f32.mrf.mxu0
    %v1842 = vadd.f32 %v1729, %v1841
    %1843 = vmatmul.f32.gmra.mxu0 %v122
    %v1844 = vpop.f32.mrf.mxu0
    %v1845 = vadd.f32 %v1732, %v1844
    %1846 = vmatmul.f32.gmra.mxu0 %v124
    %v1847 = vpop.f32.mrf.mxu0
    %v1848 = vadd.f32 %v1735, %v1847
    %1849 = vmatmul.f32.gmra.mxu0 %v126
    %v1850 = vpop.f32.mrf.mxu0
    %v1851 = vadd.f32 %v1738, %v1850
    %1852 = vmatmul.f32.gmra.mxu0 %v128
    %v1853 = vpop.f32.mrf.mxu0
    %v1854 = vadd.f32 %v1741, %v1853
    %1855 = vmatmul.f32.gmra.mxu0 %v130
    %v1856 = vpop.f32.mrf.mxu0
    %v1857 = vadd.f32 %v1744, %v1856
    %1858 = vmatmul.f32.gmra.mxu0 %v132
    %v1859 = vpop.f32.mrf.mxu0
    %v1860 = vadd.f32 %v1747, %v1859
    %1861 = vmatmul.f32.gmra.mxu0 %v134
    %v1862 = vpop.f32.mrf.mxu0
    %v1863 = vadd.f32 %v1750, %v1862
    %1864 = vmatmul.f32.gmra.mxu0 %v136
    %v1865 = vpop.f32.mrf.mxu0
    %v1866 = vadd.f32 %v1753, %v1865
    %1867 = vmatmul.f32.gmra.mxu0 %v138
    %v1868 = vpop.f32.mrf.mxu0
    %v1869 = vadd.f32 %v1756, %v1868
    %1870 = vmatmul.f32.gmra.mxu0 %v140
    %v1871 = vpop.f32.mrf.mxu0
    %v1872 = vadd.f32 %v1759, %v1871
    %1873 = vmatmul.f32.gmra.mxu0 %v142
    %v1874 = vpop.f32.mrf.mxu0
    %v1875 = vadd.f32 %v1762, %v1874
    %1876 = vmatmul.f32.gmra.mxu0 %v144
    %v1877 = vpop.f32.mrf.mxu0
    %v1878 = vadd.f32 %v1765, %v1877
    %1879 = vmatmul.f32.gmra.mxu0 %v146
    %v1880 = vpop.f32.mrf.mxu0
    %v1881 = vadd.f32 %v1768, %v1880
    %1882 = vmatmul.f32.gmra.mxu0 %v148
    %v1883 = vpop.f32.mrf.mxu0
    %v1884 = vadd.f32 %v1771, %v1883
    %1885 = vmatmul.f32.gmra.mxu0 %v150
    %v1886 = vpop.f32.mrf.mxu0
    %v1887 = vadd.f32 %v1774, %v1886
    %1888 = vmatmul.f32.gmra.mxu0 %v152
    %v1889 = vpop.f32.mrf.mxu0
    %v1890 = vadd.f32 %v1777, %v1889
    %1891 = vmatmul.f32.gmra.mxu0 %v154
    %v1892 = vpop.f32.mrf.mxu0
    %v1893 = vadd.f32 %v1780, %v1892
    %1894 = vmatmul.f32.gmra.mxu0 %v156
    %v1895 = vpop.f32.mrf.mxu0
    %v1896 = vadd.f32 %v1783, %v1895
    %1897 = vmatmul.f32.gmra.mxu0 %v158
    %v1898 = vpop.f32.mrf.mxu0
    %v1899 = vadd.f32 %v1786, %v1898
    %1900 = vmatmul.f32.gmra.mxu0 %v160
    %v1901 = vpop.f32.mrf.mxu0
    %v1902 = vadd.f32 %v1789, %v1901
    %1903 = vmatmul.f32.gmra.mxu0 %v162
    %v1904 = vpop.f32.mrf.mxu0
    %v1905 = vadd.f32 %v1792, %v1904
    %1906 = vmatmul.f32.gmra.mxu0 %v164
    %v1907 = vpop.f32.mrf.mxu0
    %v1908 = vadd.f32 %v1795, %v1907
    %1909 = vmatmul.f32.gmra.mxu0 %v166
    %v1910 = vpop.f32.mrf.mxu0
    %v1911 = vadd.f32 %v1798, %v1910
    %1912 = vmatmul.f32.gmra.mxu0 %v168
    %v1913 = vpop.f32.mrf.mxu0
    %v1914 = vadd.f32 %v1801, %v1913
    %1915 = vdwg.mxu0
    %1916 = vmatpush.msra.mxu0 %v1640
    %1917 = vmatpush.msra.mxu0 %v1637
    %1918 = vmatpush.msra.mxu0 %v1634
    %1919 = vmatpush.msra.mxu0 %v1631
    %1920 = vmatpush.msra.mxu0 %v1628
    %1921 = vmatpush.msra.mxu0 %v1625
    %1922 = vmatpush.msra.mxu0 %v1622
    %1923 = vmatpush.msra.mxu0 %v1619
    %1924 = vmatpush.msra.mxu0 %v1616
    %1925 = vmatpush.msra.mxu0 %v1613
    %1926 = vmatpush.msra.mxu0 %v1610
    %1927 = vmatpush.msra.mxu0 %v1607
    %1928 = vmatpush.msra.mxu0 %v1604
    %1929 = vmatpush.msra.mxu0 %v1601
    %1930 = vmatpush.msra.mxu0 %v1598
    %1931 = vmatpush.msra.mxu0 %v1595
    %1932 = vmatmul.f32.gmra.mxu0 %v105
    %v1933 = vpop.f32.mrf.mxu0
    %v1934 = vadd.f32 0.0, %v1933
    %1935 = vmatmul.f32.gmra.mxu0 %v107
    %v1936 = vpop.f32.mrf.mxu0
    %v1937 = vadd.f32 0.0, %v1936
    %1938 = vmatmul.f32.gmra.mxu0 %v109
    %v1939 = vpop.f32.mrf.mxu0
    %v1940 = vadd.f32 0.0, %v1939
    %1941 = vmatmul.f32.gmra.mxu0 %v111
    %v1942 = vpop.f32.mrf.mxu0
    %v1943 = vadd.f32 0.0, %v1942
    %1944 = vmatmul.f32.gmra.mxu0 %v113
    %v1945 = vpop.f32.mrf.mxu0
    %v1946 = vadd.f32 0.0, %v1945
    %1947 = vmatmul.f32.gmra.mxu0 %v115
    %v1948 = vpop.f32.mrf.mxu0
    %v1949 = vadd.f32 0.0, %v1948
    %1950 = vmatmul.f32.gmra.mxu0 %v117
    %v1951 = vpop.f32.mrf.mxu0
    %v1952 = vadd.f32 0.0, %v1951
    %1953 = vmatmul.f32.gmra.mxu0 %v119
    %v1954 = vpop.f32.mrf.mxu0
    %v1955 = vadd.f32 0.0, %v1954
    %1956 = vmatmul.f32.gmra.mxu0 %v121
    %v1957 = vpop.f32.mrf.mxu0
    %v1958 = vadd.f32 0.0, %v1957
    %1959 = vmatmul.f32.gmra.mxu0 %v123
    %v1960 = vpop.f32.mrf.mxu0
    %v1961 = vadd.f32 0.0, %v1960
    %1962 = vmatmul.f32.gmra.mxu0 %v125
    %v1963 = vpop.f32.mrf.mxu0
    %v1964 = vadd.f32 0.0, %v1963
    %1965 = vmatmul.f32.gmra.mxu0 %v127
    %v1966 = vpop.f32.mrf.mxu0
    %v1967 = vadd.f32 0.0, %v1966
    %1968 = vmatmul.f32.gmra.mxu0 %v129
    %v1969 = vpop.f32.mrf.mxu0
    %v1970 = vadd.f32 0.0, %v1969
    %1971 = vmatmul.f32.gmra.mxu0 %v131
    %v1972 = vpop.f32.mrf.mxu0
    %v1973 = vadd.f32 0.0, %v1972
    %1974 = vmatmul.f32.gmra.mxu0 %v133
    %v1975 = vpop.f32.mrf.mxu0
    %v1976 = vadd.f32 0.0, %v1975
    %1977 = vmatmul.f32.gmra.mxu0 %v135
    %v1978 = vpop.f32.mrf.mxu0
    %v1979 = vadd.f32 0.0, %v1978
    %1980 = vmatmul.f32.gmra.mxu0 %v137
    %v1981 = vpop.f32.mrf.mxu0
    %v1982 = vadd.f32 0.0, %v1981
    %1983 = vmatmul.f32.gmra.mxu0 %v139
    %v1984 = vpop.f32.mrf.mxu0
    %v1985 = vadd.f32 0.0, %v1984
    %1986 = vmatmul.f32.gmra.mxu0 %v141
    %v1987 = vpop.f32.mrf.mxu0
    %v1988 = vadd.f32 0.0, %v1987
    %1989 = vmatmul.f32.gmra.mxu0 %v143
    %v1990 = vpop.f32.mrf.mxu0
    %v1991 = vadd.f32 0.0, %v1990
    %1992 = vmatmul.f32.gmra.mxu0 %v145
    %v1993 = vpop.f32.mrf.mxu0
    %v1994 = vadd.f32 0.0, %v1993
    %1995 = vmatmul.f32.gmra.mxu0 %v147
    %v1996 = vpop.f32.mrf.mxu0
    %v1997 = vadd.f32 0.0, %v1996
    %1998 = vmatmul.f32.gmra.mxu0 %v149
    %v1999 = vpop.f32.mrf.mxu0
    %v2000 = vadd.f32 0.0, %v1999
    %2001 = vmatmul.f32.gmra.mxu0 %v151
    %v2002 = vpop.f32.mrf.mxu0
    %v2003 = vadd.f32 0.0, %v2002
    %2004 = vmatmul.f32.gmra.mxu0 %v153
    %v2005 = vpop.f32.mrf.mxu0
    %v2006 = vadd.f32 0.0, %v2005
    %2007 = vmatmul.f32.gmra.mxu0 %v155
    %v2008 = vpop.f32.mrf.mxu0
    %v2009 = vadd.f32 0.0, %v2008
    %2010 = vmatmul.f32.gmra.mxu0 %v157
    %v2011 = vpop.f32.mrf.mxu0
    %v2012 = vadd.f32 0.0, %v2011
    %2013 = vmatmul.f32.gmra.mxu0 %v159
    %v2014 = vpop.f32.mrf.mxu0
    %v2015 = vadd.f32 0.0, %v2014
    %2016 = vmatmul.f32.gmra.mxu0 %v161
    %v2017 = vpop.f32.mrf.mxu0
    %v2018 = vadd.f32 0.0, %v2017
    %2019 = vmatmul.f32.gmra.mxu0 %v163
    %v2020 = vpop.f32.mrf.mxu0
    %v2021 = vadd.f32 0.0, %v2020
    %2022 = vmatmul.f32.gmra.mxu0 %v165
    %v2023 = vpop.f32.mrf.mxu0
    %v2024 = vadd.f32 0.0, %v2023
    %2025 = vmatmul.f32.gmra.mxu0 %v167
    %v2026 = vpop.f32.mrf.mxu0
    %v2027 = vadd.f32 0.0, %v2026
    %2028 = vdwg.mxu0
    %2029 = vmatpush.msra.mxu0 %v1688
    %2030 = vmatpush.msra.mxu0 %v1685
    %2031 = vmatpush.msra.mxu0 %v1682
    %2032 = vmatpush.msra.mxu0 %v1679
    %2033 = vmatpush.msra.mxu0 %v1676
    %2034 = vmatpush.msra.mxu0 %v1673
    %2035 = vmatpush.msra.mxu0 %v1670
    %2036 = vmatpush.msra.mxu0 %v1667
    %2037 = vmatpush.msra.mxu0 %v1664
    %2038 = vmatpush.msra.mxu0 %v1661
    %2039 = vmatpush.msra.mxu0 %v1658
    %2040 = vmatpush.msra.mxu0 %v1655
    %2041 = vmatpush.msra.mxu0 %v1652
    %2042 = vmatpush.msra.mxu0 %v1649
    %2043 = vmatpush.msra.mxu0 %v1646
    %2044 = vmatpush.msra.mxu0 %v1643
    %2045 = vmatmul.f32.gmra.mxu0 %v106
    %v2046 = vpop.f32.mrf.mxu0
    %v2047 = vadd.f32 %v1934, %v2046
    %2048 = vmatmul.f32.gmra.mxu0 %v108
    %v2049 = vpop.f32.mrf.mxu0
    %v2050 = vadd.f32 %v1937, %v2049
    %2051 = vmatmul.f32.gmra.mxu0 %v110
    %v2052 = vpop.f32.mrf.mxu0
    %v2053 = vadd.f32 %v1940, %v2052
    %2054 = vmatmul.f32.gmra.mxu0 %v112
    %v2055 = vpop.f32.mrf.mxu0
    %v2056 = vadd.f32 %v1943, %v2055
    %2057 = vmatmul.f32.gmra.mxu0 %v114
    %v2058 = vpop.f32.mrf.mxu0
    %v2059 = vadd.f32 %v1946, %v2058
    %2060 = vmatmul.f32.gmra.mxu0 %v116
    %v2061 = vpop.f32.mrf.mxu0
    %v2062 = vadd.f32 %v1949, %v2061
    %2063 = vmatmul.f32.gmra.mxu0 %v118
    %v2064 = vpop.f32.mrf.mxu0
    %v2065 = vadd.f32 %v1952, %v2064
    %2066 = vmatmul.f32.gmra.mxu0 %v120
    %v2067 = vpop.f32.mrf.mxu0
    %v2068 = vadd.f32 %v1955, %v2067
    %2069 = vmatmul.f32.gmra.mxu0 %v122
    %v2070 = vpop.f32.mrf.mxu0
    %v2071 = vadd.f32 %v1958, %v2070
    %2072 = vmatmul.f32.gmra.mxu0 %v124
    %v2073 = vpop.f32.mrf.mxu0
    %v2074 = vadd.f32 %v1961, %v2073
    %2075 = vmatmul.f32.gmra.mxu0 %v126
    %v2076 = vpop.f32.mrf.mxu0
    %v2077 = vadd.f32 %v1964, %v2076
    %2078 = vmatmul.f32.gmra.mxu0 %v128
    %v2079 = vpop.f32.mrf.mxu0
    %v2080 = vadd.f32 %v1967, %v2079
    %2081 = vmatmul.f32.gmra.mxu0 %v130
    %v2082 = vpop.f32.mrf.mxu0
    %v2083 = vadd.f32 %v1970, %v2082
    %2084 = vmatmul.f32.gmra.mxu0 %v132
    %v2085 = vpop.f32.mrf.mxu0
    %v2086 = vadd.f32 %v1973, %v2085
    %2087 = vmatmul.f32.gmra.mxu0 %v134
    %v2088 = vpop.f32.mrf.mxu0
    %v2089 = vadd.f32 %v1976, %v2088
    %2090 = vmatmul.f32.gmra.mxu0 %v136
    %v2091 = vpop.f32.mrf.mxu0
    %v2092 = vadd.f32 %v1979, %v2091
    %2093 = vmatmul.f32.gmra.mxu0 %v138
    %v2094 = vpop.f32.mrf.mxu0
    %v2095 = vadd.f32 %v1982, %v2094
    %2096 = vmatmul.f32.gmra.mxu0 %v140
    %v2097 = vpop.f32.mrf.mxu0
    %v2098 = vadd.f32 %v1985, %v2097
    %2099 = vmatmul.f32.gmra.mxu0 %v142
    %v2100 = vpop.f32.mrf.mxu0
    %v2101 = vadd.f32 %v1988, %v2100
    %2102 = vmatmul.f32.gmra.mxu0 %v144
    %v2103 = vpop.f32.mrf.mxu0
    %v2104 = vadd.f32 %v1991, %v2103
    %2105 = vmatmul.f32.gmra.mxu0 %v146
    %v2106 = vpop.f32.mrf.mxu0
    %v2107 = vadd.f32 %v1994, %v2106
    %2108 = vmatmul.f32.gmra.mxu0 %v148
    %v2109 = vpop.f32.mrf.mxu0
    %v2110 = vadd.f32 %v1997, %v2109
    %2111 = vmatmul.f32.gmra.mxu0 %v150
    %v2112 = vpop.f32.mrf.mxu0
    %v2113 = vadd.f32 %v2000, %v2112
    %2114 = vmatmul.f32.gmra.mxu0 %v152
    %v2115 = vpop.f32.mrf.mxu0
    %v2116 = vadd.f32 %v2003, %v2115
    %2117 = vmatmul.f32.gmra.mxu0 %v154
    %v2118 = vpop.f32.mrf.mxu0
    %v2119 = vadd.f32 %v2006, %v2118
    %2120 = vmatmul.f32.gmra.mxu0 %v156
    %v2121 = vpop.f32.mrf.mxu0
    %v2122 = vadd.f32 %v2009, %v2121
    %2123 = vmatmul.f32.gmra.mxu0 %v158
    %v2124 = vpop.f32.mrf.mxu0
    %v2125 = vadd.f32 %v2012, %v2124
    %2126 = vmatmul.f32.gmra.mxu0 %v160
    %v2127 = vpop.f32.mrf.mxu0
    %v2128 = vadd.f32 %v2015, %v2127
    %2129 = vmatmul.f32.gmra.mxu0 %v162
    %v2130 = vpop.f32.mrf.mxu0
    %v2131 = vadd.f32 %v2018, %v2130
    %2132 = vmatmul.f32.gmra.mxu0 %v164
    %v2133 = vpop.f32.mrf.mxu0
    %v2134 = vadd.f32 %v2021, %v2133
    %2135 = vmatmul.f32.gmra.mxu0 %v166
    %v2136 = vpop.f32.mrf.mxu0
    %v2137 = vadd.f32 %v2024, %v2136
    %2138 = vmatmul.f32.gmra.mxu0 %v168
    %v2139 = vpop.f32.mrf.mxu0
    %v2140 = vadd.f32 %v2027, %v2139
    %2141 = vdwg.mxu0
    %v2142 = vlaneseq
    %v2143 = vand.u32 %v2142, 127
    %v2144 = vadd.s32 %v2143, 128
    %vm2145 = vcmp.lt.s32.totalorder %v2143, 130
    %vm2146 = vcmp.lt.s32.totalorder %v2144, 130
    %v2147 = vsel %vm2145, %v1821, -inf
    %v2148 = vsel %vm2146, %v2047, -inf
    %v2149 = vsel %vm2145, %v1824, -inf
    %v2150 = vsel %vm2146, %v2050, -inf
    %v2151 = vsel %vm2145, %v1827, -inf
    %v2152 = vsel %vm2146, %v2053, -inf
    %v2153 = vsel %vm2145, %v1830, -inf
    %v2154 = vsel %vm2146, %v2056, -inf
    %v2155 = vsel %vm2145, %v1833, -inf
    %v2156 = vsel %vm2146, %v2059, -inf
    %v2157 = vsel %vm2145, %v1836, -inf
    %v2158 = vsel %vm2146, %v2062, -inf
    %v2159 = vsel %vm2145, %v1839, -inf
    %v2160 = vsel %vm2146, %v2065, -inf
    %v2161 = vsel %vm2145, %v1842, -inf
    %v2162 = vsel %vm2146, %v2068, -inf
    %v2163 = vsel %vm2145, %v1845, -inf
    %v2164 = vsel %vm2146, %v2071, -inf
    %v2165 = vsel %vm2145, %v1848, -inf
    %v2166 = vsel %vm2146, %v2074, -inf
    %v2167 = vsel %vm2145, %v1851, -inf
    %v2168 = vsel %vm2146, %v2077, -inf
    %v2169 = vsel %vm2145, %v1854, -inf
    %v2170 = vsel %vm2146, %v2080, -inf
    %v2171 = vsel %vm2145, %v1857, -inf
    %v2172 = vsel %vm2146, %v2083, -inf
    %v2173 = vsel %vm2145, %v1860, -inf
    %v2174 = vsel %vm2146, %v2086, -inf
    %v2175 = vsel %vm2145, %v1863, -inf
    %v2176 = vsel %vm2146, %v2089, -inf
    %v2177 = vsel %vm2145, %v1866, -inf
    %v2178 = vsel %vm2146, %v2092, -inf
    %v2179 = vsel %vm2145, %v1869, -inf
    %v2180 = vsel %vm2146, %v2095, -inf
    %v2181 = vsel %vm2145, %v1872, -inf
    %v2182 = vsel %vm2146, %v2098, -inf
    %v2183 = vsel %vm2145, %v1875, -inf
    %v2184 = vsel %vm2146, %v2101, -inf
    %v2185 = vsel %vm2145, %v1878, -inf
    %v2186 = vsel %vm2146, %v2104, -inf
    %v2187 = vsel %vm2145, %v1881, -inf
    %v2188 = vsel %vm2146, %v2107, -inf
    %v2189 = vsel %vm2145, %v1884, -inf
    %v2190 = vsel %vm2146, %v2110, -inf
    %v2191 = vsel %vm2145, %v1887, -inf
    %v2192 = vsel %vm2146, %v2113, -inf
    %v2193 = vsel %vm2145, %v1890, -inf
    %v2194 = vsel %vm2146, %v2116, -inf
    %v2195 = vsel %vm2145, %v1893, -inf
    %v2196 = vsel %vm2146, %v2119, -inf
    %v2197 = vsel %vm2145, %v1896, -inf
    %v2198 = vsel %vm2146, %v2122, -inf
    %v2199 = vsel %vm2145, %v1899, -inf
    %v2200 = vsel %vm2146, %v2125, -inf
    %v2201 = vsel %vm2145, %v1902, -inf
    %v2202 = vsel %vm2146, %v2128, -inf
    %v2203 = vsel %vm2145, %v1905, -inf
    %v2204 = vsel %vm2146, %v2131, -inf
    %v2205 = vsel %vm2145, %v1908, -inf
    %v2206 = vsel %vm2146, %v2134, -inf
    %v2207 = vsel %vm2145, %v1911, -inf
    %v2208 = vsel %vm2146, %v2137, -inf
    %v2209 = vsel %vm2145, %v1914, -inf
    %v2210 = vsel %vm2146, %v2140, -inf
    %v2211 = vmax.f32 %v2147, %v2148
    %2212 = vmax.xlane.f32.xlu0 %v2211
    %v2213 = vpop.xlane.xlu0 %2212
    %v2214 = vmax.f32 %v2149, %v2150
    %2215 = vmax.xlane.f32.xlu0 %v2214
    %v2216 = vpop.xlane.xlu0 %2215
    %v2217 = vmax.f32 %v2151, %v2152
    %2218 = vmax.xlane.f32.xlu0 %v2217
    %v2219 = vpop.xlane.xlu0 %2218
    %v2220 = vmax.f32 %v2153, %v2154
    %2221 = vmax.xlane.f32.xlu0 %v2220
    %v2222 = vpop.xlane.xlu0 %2221
    %v2223 = vmax.f32 %v2155, %v2156
    %2224 = vmax.xlane.f32.xlu0 %v2223
    %v2225 = vpop.xlane.xlu0 %2224
    %v2226 = vmax.f32 %v2157, %v2158
    %2227 = vmax.xlane.f32.xlu0 %v2226
    %v2228 = vpop.xlane.xlu0 %2227
    %v2229 = vmax.f32 %v2159, %v2160
    %2230 = vmax.xlane.f32.xlu0 %v2229
    %v2231 = vpop.xlane.xlu0 %2230
    %v2232 = vmax.f32 %v2161, %v2162
    %2233 = vmax.xlane.f32.xlu0 %v2232
    %v2234 = vpop.xlane.xlu0 %2233
    %v2235 = vmax.f32 %v2163, %v2164
    %2236 = vmax.xlane.f32.xlu0 %v2235
    %v2237 = vpop.xlane.xlu0 %2236
    %v2238 = vmax.f32 %v2165, %v2166
    %2239 = vmax.xlane.f32.xlu0 %v2238
    %v2240 = vpop.xlane.xlu0 %2239
    %v2241 = vmax.f32 %v2167, %v2168
    %2242 = vmax.xlane.f32.xlu0 %v2241
    %v2243 = vpop.xlane.xlu0 %2242
    %v2244 = vmax.f32 %v2169, %v2170
    %2245 = vmax.xlane.f32.xlu0 %v2244
    %v2246 = vpop.xlane.xlu0 %2245
    %v2247 = vmax.f32 %v2171, %v2172
    %2248 = vmax.xlane.f32.xlu0 %v2247
    %v2249 = vpop.xlane.xlu0 %2248
    %v2250 = vmax.f32 %v2173, %v2174
    %2251 = vmax.xlane.f32.xlu0 %v2250
    %v2252 = vpop.xlane.xlu0 %2251
    %v2253 = vmax.f32 %v2175, %v2176
    %2254 = vmax.xlane.f32.xlu0 %v2253
    %v2255 = vpop.xlane.xlu0 %2254
    %v2256 = vmax.f32 %v2177, %v2178
    %2257 = vmax.xlane.f32.xlu0 %v2256
    %v2258 = vpop.xlane.xlu0 %2257
    %v2259 = vmax.f32 %v2179, %v2180
    %2260 = vmax.xlane.f32.xlu0 %v2259
    %v2261 = vpop.xlane.xlu0 %2260
    %v2262 = vmax.f32 %v2181, %v2182
    %2263 = vmax.xlane.f32.xlu0 %v2262
    %v2264 = vpop.xlane.xlu0 %2263
    %v2265 = vmax.f32 %v2183, %v2184
    %2266 = vmax.xlane.f32.xlu0 %v2265
    %v2267 = vpop.xlane.xlu0 %2266
    %v2268 = vmax.f32 %v2185, %v2186
    %2269 = vmax.xlane.f32.xlu0 %v2268
    %v2270 = vpop.xlane.xlu0 %2269
    %v2271 = vmax.f32 %v2187, %v2188
    %2272 = vmax.xlane.f32.xlu0 %v2271
    %v2273 = vpop.xlane.xlu0 %2272
    %v2274 = vmax.f32 %v2189, %v2190
    %2275 = vmax.xlane.f32.xlu0 %v2274
    %v2276 = vpop.xlane.xlu0 %2275
    %v2277 = vmax.f32 %v2191, %v2192
    %2278 = vmax.xlane.f32.xlu0 %v2277
    %v2279 = vpop.xlane.xlu0 %2278
    %v2280 = vmax.f32 %v2193, %v2194
    %2281 = vmax.xlane.f32.xlu0 %v2280
    %v2282 = vpop.xlane.xlu0 %2281
    %v2283 = vmax.f32 %v2195, %v2196
    %2284 = vmax.xlane.f32.xlu0 %v2283
    %v2285 = vpop.xlane.xlu0 %2284
    %v2286 = vmax.f32 %v2197, %v2198
    %2287 = vmax.xlane.f32.xlu0 %v2286
    %v2288 = vpop.xlane.xlu0 %2287
    %v2289 = vmax.f32 %v2199, %v2200
    %2290 = vmax.xlane.f32.xlu0 %v2289
    %v2291 = vpop.xlane.xlu0 %2290
    %v2292 = vmax.f32 %v2201, %v2202
    %2293 = vmax.xlane.f32.xlu0 %v2292
    %v2294 = vpop.xlane.xlu0 %2293
    %v2295 = vmax.f32 %v2203, %v2204
    %2296 = vmax.xlane.f32.xlu0 %v2295
    %v2297 = vpop.xlane.xlu0 %2296
    %v2298 = vmax.f32 %v2205, %v2206
    %2299 = vmax.xlane.f32.xlu0 %v2298
    %v2300 = vpop.xlane.xlu0 %2299
    %v2301 = vmax.f32 %v2207, %v2208
    %2302 = vmax.xlane.f32.xlu0 %v2301
    %v2303 = vpop.xlane.xlu0 %2302
    %v2304 = vmax.f32 %v2209, %v2210
    %2305 = vmax.xlane.f32.xlu0 %v2304
    %v2306 = vpop.xlane.xlu0 %2305
    %v2307 = vsub.f32 %v1821, %v2213
    %v2308 = vsub.f32 %v2047, %v2213
    %v2309 = vsub.f32 %v1824, %v2216
    %v2310 = vsub.f32 %v2050, %v2216
    %v2311 = vsub.f32 %v1827, %v2219
    %v2312 = vsub.f32 %v2053, %v2219
    %v2313 = vsub.f32 %v1830, %v2222
    %v2314 = vsub.f32 %v2056, %v2222
    %v2315 = vsub.f32 %v1833, %v2225
    %v2316 = vsub.f32 %v2059, %v2225
    %v2317 = vsub.f32 %v1836, %v2228
    %v2318 = vsub.f32 %v2062, %v2228
    %v2319 = vsub.f32 %v1839, %v2231
    %v2320 = vsub.f32 %v2065, %v2231
    %v2321 = vsub.f32 %v1842, %v2234
    %v2322 = vsub.f32 %v2068, %v2234
    %v2323 = vsub.f32 %v1845, %v2237
    %v2324 = vsub.f32 %v2071, %v2237
    %v2325 = vsub.f32 %v1848, %v2240
    %v2326 = vsub.f32 %v2074, %v2240
    %v2327 = vsub.f32 %v1851, %v2243
    %v2328 = vsub.f32 %v2077, %v2243
    %v2329 = vsub.f32 %v1854, %v2246
    %v2330 = vsub.f32 %v2080, %v2246
    %v2331 = vsub.f32 %v1857, %v2249
    %v2332 = vsub.f32 %v2083, %v2249
    %v2333 = vsub.f32 %v1860, %v2252
    %v2334 = vsub.f32 %v2086, %v2252
    %v2335 = vsub.f32 %v1863, %v2255
    %v2336 = vsub.f32 %v2089, %v2255
    %v2337 = vsub.f32 %v1866, %v2258
    %v2338 = vsub.f32 %v2092, %v2258
    %v2339 = vsub.f32 %v1869, %v2261
    %v2340 = vsub.f32 %v2095, %v2261
    %v2341 = vsub.f32 %v1872, %v2264
    %v2342 = vsub.f32 %v2098, %v2264
    %v2343 = vsub.f32 %v1875, %v2267
    %v2344 = vsub.f32 %v2101, %v2267
    %v2345 = vsub.f32 %v1878, %v2270
    %v2346 = vsub.f32 %v2104, %v2270
    %v2347 = vsub.f32 %v1881, %v2273
    %v2348 = vsub.f32 %v2107, %v2273
    %v2349 = vsub.f32 %v1884, %v2276
    %v2350 = vsub.f32 %v2110, %v2276
    %v2351 = vsub.f32 %v1887, %v2279
    %v2352 = vsub.f32 %v2113, %v2279
    %v2353 = vsub.f32 %v1890, %v2282
    %v2354 = vsub.f32 %v2116, %v2282
    %v2355 = vsub.f32 %v1893, %v2285
    %v2356 = vsub.f32 %v2119, %v2285
    %v2357 = vsub.f32 %v1896, %v2288
    %v2358 = vsub.f32 %v2122, %v2288
    %v2359 = vsub.f32 %v1899, %v2291
    %v2360 = vsub.f32 %v2125, %v2291
    %v2361 = vsub.f32 %v1902, %v2294
    %v2362 = vsub.f32 %v2128, %v2294
    %v2363 = vsub.f32 %v1905, %v2297
    %v2364 = vsub.f32 %v2131, %v2297
    %v2365 = vsub.f32 %v1908, %v2300
    %v2366 = vsub.f32 %v2134, %v2300
    %v2367 = vsub.f32 %v1911, %v2303
    %v2368 = vsub.f32 %v2137, %v2303
    %v2369 = vsub.f32 %v1914, %v2306
    %v2370 = vsub.f32 %v2140, %v2306
    %v2371 = vmul.f32 %v2307, 1.442695
    %v2372 = vpow.pop %v2371
    %v2373 = vmul.f32 %v2308, 1.442695
    %v2374 = vpow.pop %v2373
    %v2375 = vmul.f32 %v2309, 1.442695
    %v2376 = vpow.pop %v2375
    %v2377 = vmul.f32 %v2310, 1.442695
    %v2378 = vpow.pop %v2377
    %v2379 = vmul.f32 %v2311, 1.442695
    %v2380 = vpow.pop %v2379
    %v2381 = vmul.f32 %v2312, 1.442695
    %v2382 = vpow.pop %v2381
    %v2383 = vmul.f32 %v2313, 1.442695
    %v2384 = vpow.pop %v2383
    %v2385 = vmul.f32 %v2314, 1.442695
    %v2386 = vpow.pop %v2385
    %v2387 = vmul.f32 %v2315, 1.442695
    %v2388 = vpow.pop %v2387
    %v2389 = vmul.f32 %v2316, 1.442695
    %v2390 = vpow.pop %v2389
    %v2391 = vmul.f32 %v2317, 1.442695
    %v2392 = vpow.pop %v2391
    %v2393 = vmul.f32 %v2318, 1.442695
    %v2394 = vpow.pop %v2393
    %v2395 = vmul.f32 %v2319, 1.442695
    %v2396 = vpow.pop %v2395
    %v2397 = vmul.f32 %v2320, 1.442695
    %v2398 = vpow.pop %v2397
    %v2399 = vmul.f32 %v2321, 1.442695
    %v2400 = vpow.pop %v2399
    %v2401 = vmul.f32 %v2322, 1.442695
    %v2402 = vpow.pop %v2401
    %v2403 = vmul.f32 %v2323, 1.442695
    %v2404 = vpow.pop %v2403
    %v2405 = vmul.f32 %v2324, 1.442695
    %v2406 = vpow.pop %v2405
    %v2407 = vmul.f32 %v2325, 1.442695
    %v2408 = vpow.pop %v2407
    %v2409 = vmul.f32 %v2326, 1.442695
    %v2410 = vpow.pop %v2409
    %v2411 = vmul.f32 %v2327, 1.442695
    %v2412 = vpow.pop %v2411
    %v2413 = vmul.f32 %v2328, 1.442695
    %v2414 = vpow.pop %v2413
    %v2415 = vmul.f32 %v2329, 1.442695
    %v2416 = vpow.pop %v2415
    %v2417 = vmul.f32 %v2330, 1.442695
    %v2418 = vpow.pop %v2417
    %v2419 = vmul.f32 %v2331, 1.442695
    %v2420 = vpow.pop %v2419
    %v2421 = vmul.f32 %v2332, 1.442695
    %v2422 = vpow.pop %v2421
    %v2423 = vmul.f32 %v2333, 1.442695
    %v2424 = vpow.pop %v2423
    %v2425 = vmul.f32 %v2334, 1.442695
    %v2426 = vpow.pop %v2425
    %v2427 = vmul.f32 %v2335, 1.442695
    %v2428 = vpow.pop %v2427
    %v2429 = vmul.f32 %v2336, 1.442695
    %v2430 = vpow.pop %v2429
    %v2431 = vmul.f32 %v2337, 1.442695
    %v2432 = vpow.pop %v2431
    %v2433 = vmul.f32 %v2338, 1.442695
    %v2434 = vpow.pop %v2433
    %v2435 = vmul.f32 %v2339, 1.442695
    %v2436 = vpow.pop %v2435
    %v2437 = vmul.f32 %v2340, 1.442695
    %v2438 = vpow.pop %v2437
    %v2439 = vmul.f32 %v2341, 1.442695
    %v2440 = vpow.pop %v2439
    %v2441 = vmul.f32 %v2342, 1.442695
    %v2442 = vpow.pop %v2441
    %v2443 = vmul.f32 %v2343, 1.442695
    %v2444 = vpow.pop %v2443
    %v2445 = vmul.f32 %v2344, 1.442695
    %v2446 = vpow.pop %v2445
    %v2447 = vmul.f32 %v2345, 1.442695
    %v2448 = vpow.pop %v2447
    %v2449 = vmul.f32 %v2346, 1.442695
    %v2450 = vpow.pop %v2449
    %v2451 = vmul.f32 %v2347, 1.442695
    %v2452 = vpow.pop %v2451
    %v2453 = vmul.f32 %v2348, 1.442695
    %v2454 = vpow.pop %v2453
    %v2455 = vmul.f32 %v2349, 1.442695
    %v2456 = vpow.pop %v2455
    %v2457 = vmul.f32 %v2350, 1.442695
    %v2458 = vpow.pop %v2457
    %v2459 = vmul.f32 %v2351, 1.442695
    %v2460 = vpow.pop %v2459
    %v2461 = vmul.f32 %v2352, 1.442695
    %v2462 = vpow.pop %v2461
    %v2463 = vmul.f32 %v2353, 1.442695
    %v2464 = vpow.pop %v2463
    %v2465 = vmul.f32 %v2354, 1.442695
    %v2466 = vpow.pop %v2465
    %v2467 = vmul.f32 %v2355, 1.442695
    %v2468 = vpow.pop %v2467
    %v2469 = vmul.f32 %v2356, 1.442695
    %v2470 = vpow.pop %v2469
    %v2471 = vmul.f32 %v2357, 1.442695
    %v2472 = vpow.pop %v2471
    %v2473 = vmul.f32 %v2358, 1.442695
    %v2474 = vpow.pop %v2473
    %v2475 = vmul.f32 %v2359, 1.442695
    %v2476 = vpow.pop %v2475
    %v2477 = vmul.f32 %v2360, 1.442695
    %v2478 = vpow.pop %v2477
    %v2479 = vmul.f32 %v2361, 1.442695
    %v2480 = vpow.pop %v2479
    %v2481 = vmul.f32 %v2362, 1.442695
    %v2482 = vpow.pop %v2481
    %v2483 = vmul.f32 %v2363, 1.442695
    %v2484 = vpow.pop %v2483
    %v2485 = vmul.f32 %v2364, 1.442695
    %v2486 = vpow.pop %v2485
    %v2487 = vmul.f32 %v2365, 1.442695
    %v2488 = vpow.pop %v2487
    %v2489 = vmul.f32 %v2366, 1.442695
    %v2490 = vpow.pop %v2489
    %v2491 = vmul.f32 %v2367, 1.442695
    %v2492 = vpow.pop %v2491
    %v2493 = vmul.f32 %v2368, 1.442695
    %v2494 = vpow.pop %v2493
    %v2495 = vmul.f32 %v2369, 1.442695
    %v2496 = vpow.pop %v2495
    %v2497 = vmul.f32 %v2370, 1.442695
    %v2498 = vpow.pop %v2497
    %v2499 = vsel %vm2145, %v2372, 0.0
    %v2500 = vsel %vm2146, %v2374, 0.0
    %v2501 = vsel %vm2145, %v2376, 0.0
    %v2502 = vsel %vm2146, %v2378, 0.0
    %v2503 = vsel %vm2145, %v2380, 0.0
    %v2504 = vsel %vm2146, %v2382, 0.0
    %v2505 = vsel %vm2145, %v2384, 0.0
    %v2506 = vsel %vm2146, %v2386, 0.0
    %v2507 = vsel %vm2145, %v2388, 0.0
    %v2508 = vsel %vm2146, %v2390, 0.0
    %v2509 = vsel %vm2145, %v2392, 0.0
    %v2510 = vsel %vm2146, %v2394, 0.0
    %v2511 = vsel %vm2145, %v2396, 0.0
    %v2512 = vsel %vm2146, %v2398, 0.0
    %v2513 = vsel %vm2145, %v2400, 0.0
    %v2514 = vsel %vm2146, %v2402, 0.0
    %v2515 = vsel %vm2145, %v2404, 0.0
    %v2516 = vsel %vm2146, %v2406, 0.0
    %v2517 = vsel %vm2145, %v2408, 0.0
    %v2518 = vsel %vm2146, %v2410, 0.0
    %v2519 = vsel %vm2145, %v2412, 0.0
    %v2520 = vsel %vm2146, %v2414, 0.0
    %v2521 = vsel %vm2145, %v2416, 0.0
    %v2522 = vsel %vm2146, %v2418, 0.0
    %v2523 = vsel %vm2145, %v2420, 0.0
    %v2524 = vsel %vm2146, %v2422, 0.0
    %v2525 = vsel %vm2145, %v2424, 0.0
    %v2526 = vsel %vm2146, %v2426, 0.0
    %v2527 = vsel %vm2145, %v2428, 0.0
    %v2528 = vsel %vm2146, %v2430, 0.0
    %v2529 = vsel %vm2145, %v2432, 0.0
    %v2530 = vsel %vm2146, %v2434, 0.0
    %v2531 = vsel %vm2145, %v2436, 0.0
    %v2532 = vsel %vm2146, %v2438, 0.0
    %v2533 = vsel %vm2145, %v2440, 0.0
    %v2534 = vsel %vm2146, %v2442, 0.0
    %v2535 = vsel %vm2145, %v2444, 0.0
    %v2536 = vsel %vm2146, %v2446, 0.0
    %v2537 = vsel %vm2145, %v2448, 0.0
    %v2538 = vsel %vm2146, %v2450, 0.0
    %v2539 = vsel %vm2145, %v2452, 0.0
    %v2540 = vsel %vm2146, %v2454, 0.0
    %v2541 = vsel %vm2145, %v2456, 0.0
    %v2542 = vsel %vm2146, %v2458, 0.0
    %v2543 = vsel %vm2145, %v2460, 0.0
    %v2544 = vsel %vm2146, %v2462, 0.0
    %v2545 = vsel %vm2145, %v2464, 0.0
    %v2546 = vsel %vm2146, %v2466, 0.0
    %v2547 = vsel %vm2145, %v2468, 0.0
    %v2548 = vsel %vm2146, %v2470, 0.0
    %v2549 = vsel %vm2145, %v2472, 0.0
    %v2550 = vsel %vm2146, %v2474, 0.0
    %v2551 = vsel %vm2145, %v2476, 0.0
    %v2552 = vsel %vm2146, %v2478, 0.0
    %v2553 = vsel %vm2145, %v2480, 0.0
    %v2554 = vsel %vm2146, %v2482, 0.0
    %v2555 = vsel %vm2145, %v2484, 0.0
    %v2556 = vsel %vm2146, %v2486, 0.0
    %v2557 = vsel %vm2145, %v2488, 0.0
    %v2558 = vsel %vm2146, %v2490, 0.0
    %v2559 = vsel %vm2145, %v2492, 0.0
    %v2560 = vsel %vm2146, %v2494, 0.0
    %v2561 = vsel %vm2145, %v2496, 0.0
    %v2562 = vsel %vm2146, %v2498, 0.0
    %v2563 = vadd.f32 %v2499, %v2500
    %2564 = vadd.xlane.f32.xlu0 %v2563
    %v2565 = vpop.xlane.xlu0 %2564
    %v2566 = vadd.f32 %v2501, %v2502
    %2567 = vadd.xlane.f32.xlu0 %v2566
    %v2568 = vpop.xlane.xlu0 %2567
    %v2569 = vadd.f32 %v2503, %v2504
    %2570 = vadd.xlane.f32.xlu0 %v2569
    %v2571 = vpop.xlane.xlu0 %2570
    %v2572 = vadd.f32 %v2505, %v2506
    %2573 = vadd.xlane.f32.xlu0 %v2572
    %v2574 = vpop.xlane.xlu0 %2573
    %v2575 = vadd.f32 %v2507, %v2508
    %2576 = vadd.xlane.f32.xlu0 %v2575
    %v2577 = vpop.xlane.xlu0 %2576
    %v2578 = vadd.f32 %v2509, %v2510
    %2579 = vadd.xlane.f32.xlu0 %v2578
    %v2580 = vpop.xlane.xlu0 %2579
    %v2581 = vadd.f32 %v2511, %v2512
    %2582 = vadd.xlane.f32.xlu0 %v2581
    %v2583 = vpop.xlane.xlu0 %2582
    %v2584 = vadd.f32 %v2513, %v2514
    %2585 = vadd.xlane.f32.xlu0 %v2584
    %v2586 = vpop.xlane.xlu0 %2585
    %v2587 = vadd.f32 %v2515, %v2516
    %2588 = vadd.xlane.f32.xlu0 %v2587
    %v2589 = vpop.xlane.xlu0 %2588
    %v2590 = vadd.f32 %v2517, %v2518
    %2591 = vadd.xlane.f32.xlu0 %v2590
    %v2592 = vpop.xlane.xlu0 %2591
    %v2593 = vadd.f32 %v2519, %v2520
    %2594 = vadd.xlane.f32.xlu0 %v2593
    %v2595 = vpop.xlane.xlu0 %2594
    %v2596 = vadd.f32 %v2521, %v2522
    %2597 = vadd.xlane.f32.xlu0 %v2596
    %v2598 = vpop.xlane.xlu0 %2597
    %v2599 = vadd.f32 %v2523, %v2524
    %2600 = vadd.xlane.f32.xlu0 %v2599
    %v2601 = vpop.xlane.xlu0 %2600
    %v2602 = vadd.f32 %v2525, %v2526
    %2603 = vadd.xlane.f32.xlu0 %v2602
    %v2604 = vpop.xlane.xlu0 %2603
    %v2605 = vadd.f32 %v2527, %v2528
    %2606 = vadd.xlane.f32.xlu0 %v2605
    %v2607 = vpop.xlane.xlu0 %2606
    %v2608 = vadd.f32 %v2529, %v2530
    %2609 = vadd.xlane.f32.xlu0 %v2608
    %v2610 = vpop.xlane.xlu0 %2609
    %v2611 = vadd.f32 %v2531, %v2532
    %2612 = vadd.xlane.f32.xlu0 %v2611
    %v2613 = vpop.xlane.xlu0 %2612
    %v2614 = vadd.f32 %v2533, %v2534
    %2615 = vadd.xlane.f32.xlu0 %v2614
    %v2616 = vpop.xlane.xlu0 %2615
    %v2617 = vadd.f32 %v2535, %v2536
    %2618 = vadd.xlane.f32.xlu0 %v2617
    %v2619 = vpop.xlane.xlu0 %2618
    %v2620 = vadd.f32 %v2537, %v2538
    %2621 = vadd.xlane.f32.xlu0 %v2620
    %v2622 = vpop.xlane.xlu0 %2621
    %v2623 = vadd.f32 %v2539, %v2540
    %2624 = vadd.xlane.f32.xlu0 %v2623
    %v2625 = vpop.xlane.xlu0 %2624
    %v2626 = vadd.f32 %v2541, %v2542
    %2627 = vadd.xlane.f32.xlu0 %v2626
    %v2628 = vpop.xlane.xlu0 %2627
    %v2629 = vadd.f32 %v2543, %v2544
    %2630 = vadd.xlane.f32.xlu0 %v2629
    %v2631 = vpop.xlane.xlu0 %2630
    %v2632 = vadd.f32 %v2545, %v2546
    %2633 = vadd.xlane.f32.xlu0 %v2632
    %v2634 = vpop.xlane.xlu0 %2633
    %v2635 = vadd.f32 %v2547, %v2548
    %2636 = vadd.xlane.f32.xlu0 %v2635
    %v2637 = vpop.xlane.xlu0 %2636
    %v2638 = vadd.f32 %v2549, %v2550
    %2639 = vadd.xlane.f32.xlu0 %v2638
    %v2640 = vpop.xlane.xlu0 %2639
    %v2641 = vadd.f32 %v2551, %v2552
    %2642 = vadd.xlane.f32.xlu0 %v2641
    %v2643 = vpop.xlane.xlu0 %2642
    %v2644 = vadd.f32 %v2553, %v2554
    %2645 = vadd.xlane.f32.xlu0 %v2644
    %v2646 = vpop.xlane.xlu0 %2645
    %v2647 = vadd.f32 %v2555, %v2556
    %2648 = vadd.xlane.f32.xlu0 %v2647
    %v2649 = vpop.xlane.xlu0 %2648
    %v2650 = vadd.f32 %v2557, %v2558
    %2651 = vadd.xlane.f32.xlu0 %v2650
    %v2652 = vpop.xlane.xlu0 %2651
    %v2653 = vadd.f32 %v2559, %v2560
    %2654 = vadd.xlane.f32.xlu0 %v2653
    %v2655 = vpop.xlane.xlu0 %2654
    %v2656 = vadd.f32 %v2561, %v2562
    %2657 = vadd.xlane.f32.xlu0 %v2656
    %v2658 = vpop.xlane.xlu0 %2657
    %v2659 = vlog2.pop %v2565
    %v2660 = vmul.f32 %v2659, 0.6931472
    %v2661 = vlog2.pop %v2568
    %v2662 = vmul.f32 %v2661, 0.6931472
    %v2663 = vlog2.pop %v2571
    %v2664 = vmul.f32 %v2663, 0.6931472
    %v2665 = vlog2.pop %v2574
    %v2666 = vmul.f32 %v2665, 0.6931472
    %v2667 = vlog2.pop %v2577
    %v2668 = vmul.f32 %v2667, 0.6931472
    %v2669 = vlog2.pop %v2580
    %v2670 = vmul.f32 %v2669, 0.6931472
    %v2671 = vlog2.pop %v2583
    %v2672 = vmul.f32 %v2671, 0.6931472
    %v2673 = vlog2.pop %v2586
    %v2674 = vmul.f32 %v2673, 0.6931472
    %v2675 = vlog2.pop %v2589
    %v2676 = vmul.f32 %v2675, 0.6931472
    %v2677 = vlog2.pop %v2592
    %v2678 = vmul.f32 %v2677, 0.6931472
    %v2679 = vlog2.pop %v2595
    %v2680 = vmul.f32 %v2679, 0.6931472
    %v2681 = vlog2.pop %v2598
    %v2682 = vmul.f32 %v2681, 0.6931472
    %v2683 = vlog2.pop %v2601
    %v2684 = vmul.f32 %v2683, 0.6931472
    %v2685 = vlog2.pop %v2604
    %v2686 = vmul.f32 %v2685, 0.6931472
    %v2687 = vlog2.pop %v2607
    %v2688 = vmul.f32 %v2687, 0.6931472
    %v2689 = vlog2.pop %v2610
    %v2690 = vmul.f32 %v2689, 0.6931472
    %v2691 = vlog2.pop %v2613
    %v2692 = vmul.f32 %v2691, 0.6931472
    %v2693 = vlog2.pop %v2616
    %v2694 = vmul.f32 %v2693, 0.6931472
    %v2695 = vlog2.pop %v2619
    %v2696 = vmul.f32 %v2695, 0.6931472
    %v2697 = vlog2.pop %v2622
    %v2698 = vmul.f32 %v2697, 0.6931472
    %v2699 = vlog2.pop %v2625
    %v2700 = vmul.f32 %v2699, 0.6931472
    %v2701 = vlog2.pop %v2628
    %v2702 = vmul.f32 %v2701, 0.6931472
    %v2703 = vlog2.pop %v2631
    %v2704 = vmul.f32 %v2703, 0.6931472
    %v2705 = vlog2.pop %v2634
    %v2706 = vmul.f32 %v2705, 0.6931472
    %v2707 = vlog2.pop %v2637
    %v2708 = vmul.f32 %v2707, 0.6931472
    %v2709 = vlog2.pop %v2640
    %v2710 = vmul.f32 %v2709, 0.6931472
    %v2711 = vlog2.pop %v2643
    %v2712 = vmul.f32 %v2711, 0.6931472
    %v2713 = vlog2.pop %v2646
    %v2714 = vmul.f32 %v2713, 0.6931472
    %v2715 = vlog2.pop %v2649
    %v2716 = vmul.f32 %v2715, 0.6931472
    %v2717 = vlog2.pop %v2652
    %v2718 = vmul.f32 %v2717, 0.6931472
    %v2719 = vlog2.pop %v2655
    %v2720 = vmul.f32 %v2719, 0.6931472
    %v2721 = vlog2.pop %v2658
    %v2722 = vmul.f32 %v2721, 0.6931472
    %v2723 = vsub.f32 %v2307, %v2660
    %v2724 = vsub.f32 %v2308, %v2660
    %v2725 = vsub.f32 %v2309, %v2662
    %v2726 = vsub.f32 %v2310, %v2662
    %v2727 = vsub.f32 %v2311, %v2664
    %v2728 = vsub.f32 %v2312, %v2664
    %v2729 = vsub.f32 %v2313, %v2666
    %v2730 = vsub.f32 %v2314, %v2666
    %v2731 = vsub.f32 %v2315, %v2668
    %v2732 = vsub.f32 %v2316, %v2668
    %v2733 = vsub.f32 %v2317, %v2670
    %v2734 = vsub.f32 %v2318, %v2670
    %v2735 = vsub.f32 %v2319, %v2672
    %v2736 = vsub.f32 %v2320, %v2672
    %v2737 = vsub.f32 %v2321, %v2674
    %v2738 = vsub.f32 %v2322, %v2674
    %v2739 = vsub.f32 %v2323, %v2676
    %v2740 = vsub.f32 %v2324, %v2676
    %v2741 = vsub.f32 %v2325, %v2678
    %v2742 = vsub.f32 %v2326, %v2678
    %v2743 = vsub.f32 %v2327, %v2680
    %v2744 = vsub.f32 %v2328, %v2680
    %v2745 = vsub.f32 %v2329, %v2682
    %v2746 = vsub.f32 %v2330, %v2682
    %v2747 = vsub.f32 %v2331, %v2684
    %v2748 = vsub.f32 %v2332, %v2684
    %v2749 = vsub.f32 %v2333, %v2686
    %v2750 = vsub.f32 %v2334, %v2686
    %v2751 = vsub.f32 %v2335, %v2688
    %v2752 = vsub.f32 %v2336, %v2688
    %v2753 = vsub.f32 %v2337, %v2690
    %v2754 = vsub.f32 %v2338, %v2690
    %v2755 = vsub.f32 %v2339, %v2692
    %v2756 = vsub.f32 %v2340, %v2692
    %v2757 = vsub.f32 %v2341, %v2694
    %v2758 = vsub.f32 %v2342, %v2694
    %v2759 = vsub.f32 %v2343, %v2696
    %v2760 = vsub.f32 %v2344, %v2696
    %v2761 = vsub.f32 %v2345, %v2698
    %v2762 = vsub.f32 %v2346, %v2698
    %v2763 = vsub.f32 %v2347, %v2700
    %v2764 = vsub.f32 %v2348, %v2700
    %v2765 = vsub.f32 %v2349, %v2702
    %v2766 = vsub.f32 %v2350, %v2702
    %v2767 = vsub.f32 %v2351, %v2704
    %v2768 = vsub.f32 %v2352, %v2704
    %v2769 = vsub.f32 %v2353, %v2706
    %v2770 = vsub.f32 %v2354, %v2706
    %v2771 = vsub.f32 %v2355, %v2708
    %v2772 = vsub.f32 %v2356, %v2708
    %v2773 = vsub.f32 %v2357, %v2710
    %v2774 = vsub.f32 %v2358, %v2710
    %v2775 = vsub.f32 %v2359, %v2712
    %v2776 = vsub.f32 %v2360, %v2712
    %v2777 = vsub.f32 %v2361, %v2714
    %v2778 = vsub.f32 %v2362, %v2714
    %v2779 = vsub.f32 %v2363, %v2716
    %v2780 = vsub.f32 %v2364, %v2716
    %v2781 = vsub.f32 %v2365, %v2718
    %v2782 = vsub.f32 %v2366, %v2718
    %v2783 = vsub.f32 %v2367, %v2720
    %v2784 = vsub.f32 %v2368, %v2720
    %v2785 = vsub.f32 %v2369, %v2722
    %v2786 = vsub.f32 %v2370, %v2722
    %v2787 = vsel %vm2145, %v2723, 0.0
    %v2788 = vsel %vm2146, %v2724, 0.0
    %v2789 = vsel %vm2145, %v2725, 0.0
    %v2790 = vsel %vm2146, %v2726, 0.0
    %v2791 = vsel %vm2145, %v2727, 0.0
    %v2792 = vsel %vm2146, %v2728, 0.0
    %v2793 = vsel %vm2145, %v2729, 0.0
    %v2794 = vsel %vm2146, %v2730, 0.0
    %v2795 = vsel %vm2145, %v2731, 0.0
    %v2796 = vsel %vm2146, %v2732, 0.0
    %v2797 = vsel %vm2145, %v2733, 0.0
    %v2798 = vsel %vm2146, %v2734, 0.0
    %v2799 = vsel %vm2145, %v2735, 0.0
    %v2800 = vsel %vm2146, %v2736, 0.0
    %v2801 = vsel %vm2145, %v2737, 0.0
    %v2802 = vsel %vm2146, %v2738, 0.0
    %v2803 = vsel %vm2145, %v2739, 0.0
    %v2804 = vsel %vm2146, %v2740, 0.0
    %v2805 = vsel %vm2145, %v2741, 0.0
    %v2806 = vsel %vm2146, %v2742, 0.0
    %v2807 = vsel %vm2145, %v2743, 0.0
    %v2808 = vsel %vm2146, %v2744, 0.0
    %v2809 = vsel %vm2145, %v2745, 0.0
    %v2810 = vsel %vm2146, %v2746, 0.0
    %v2811 = vsel %vm2145, %v2747, 0.0
    %v2812 = vsel %vm2146, %v2748, 0.0
    %v2813 = vsel %vm2145, %v2749, 0.0
    %v2814 = vsel %vm2146, %v2750, 0.0
    %v2815 = vsel %vm2145, %v2751, 0.0
    %v2816 = vsel %vm2146, %v2752, 0.0
    %v2817 = vsel %vm2145, %v2753, 0.0
    %v2818 = vsel %vm2146, %v2754, 0.0
    %v2819 = vsel %vm2145, %v2755, 0.0
    %v2820 = vsel %vm2146, %v2756, 0.0
    %v2821 = vsel %vm2145, %v2757, 0.0
    %v2822 = vsel %vm2146, %v2758, 0.0
    %v2823 = vsel %vm2145, %v2759, 0.0
    %v2824 = vsel %vm2146, %v2760, 0.0
    %v2825 = vsel %vm2145, %v2761, 0.0
    %v2826 = vsel %vm2146, %v2762, 0.0
    %v2827 = vsel %vm2145, %v2763, 0.0
    %v2828 = vsel %vm2146, %v2764, 0.0
    %v2829 = vsel %vm2145, %v2765, 0.0
    %v2830 = vsel %vm2146, %v2766, 0.0
    %v2831 = vsel %vm2145, %v2767, 0.0
    %v2832 = vsel %vm2146, %v2768, 0.0
    %v2833 = vsel %vm2145, %v2769, 0.0
    %v2834 = vsel %vm2146, %v2770, 0.0
    %v2835 = vsel %vm2145, %v2771, 0.0
    %v2836 = vsel %vm2146, %v2772, 0.0
    %v2837 = vsel %vm2145, %v2773, 0.0
    %v2838 = vsel %vm2146, %v2774, 0.0
    %v2839 = vsel %vm2145, %v2775, 0.0
    %v2840 = vsel %vm2146, %v2776, 0.0
    %v2841 = vsel %vm2145, %v2777, 0.0
    %v2842 = vsel %vm2146, %v2778, 0.0
    %v2843 = vsel %vm2145, %v2779, 0.0
    %v2844 = vsel %vm2146, %v2780, 0.0
    %v2845 = vsel %vm2145, %v2781, 0.0
    %v2846 = vsel %vm2146, %v2782, 0.0
    %v2847 = vsel %vm2145, %v2783, 0.0
    %v2848 = vsel %vm2146, %v2784, 0.0
    %v2849 = vsel %vm2145, %v2785, 0.0
    %v2850 = vsel %vm2146, %v2786, 0.0
    %v2851 = vld [vmem:[#allocation10] sm:$0xff]
    %v2852 = vld [vmem:[#allocation10 + $0x8] sm:$0xff]
    %v2853 = vld [vmem:[#allocation10 + $0x10] sm:$0xff]
    %v2854 = vld [vmem:[#allocation10 + $0x18] sm:$0xff]
    %v2855 = vld [vmem:[#allocation10 + $0x20] sm:$0xff]
    %v2856 = vld [vmem:[#allocation10 + $0x28] sm:$0xff]
    %v2857 = vld [vmem:[#allocation10 + $0x30] sm:$0xff]
    %v2858 = vld [vmem:[#allocation10 + $0x38] sm:$0xff]
    %v2859 = vld [vmem:[#allocation10 + $0x40] sm:$0xff]
    %v2860 = vld [vmem:[#allocation10 + $0x48] sm:$0xff]
    %v2861 = vld [vmem:[#allocation10 + $0x50] sm:$0xff]
    %v2862 = vld [vmem:[#allocation10 + $0x58] sm:$0xff]
    %v2863 = vld [vmem:[#allocation10 + $0x60] sm:$0xff]
    %v2864 = vld [vmem:[#allocation10 + $0x68] sm:$0xff]
    %v2865 = vld [vmem:[#allocation10 + $0x70] sm:$0xff]
    %v2866 = vld [vmem:[#allocation10 + $0x78] sm:$0xff]
    %v2867 = vld [vmem:[#allocation10 + $0x80] sm:$0xff]
    %v2868 = vld [vmem:[#allocation10 + $0x88] sm:$0xff]
    %v2869 = vld [vmem:[#allocation10 + $0x90] sm:$0xff]
    %v2870 = vld [vmem:[#allocation10 + $0x98] sm:$0xff]
    %v2871 = vld [vmem:[#allocation10 + $0xa0] sm:$0xff]
    %v2872 = vld [vmem:[#allocation10 + $0xa8] sm:$0xff]
    %v2873 = vld [vmem:[#allocation10 + $0xb0] sm:$0xff]
    %v2874 = vld [vmem:[#allocation10 + $0xb8] sm:$0xff]
    %v2875 = vld [vmem:[#allocation10 + $0xc0] sm:$0xff]
    %v2876 = vld [vmem:[#allocation10 + $0xc8] sm:$0xff]
    %v2877 = vld [vmem:[#allocation10 + $0xd0] sm:$0xff]
    %v2878 = vld [vmem:[#allocation10 + $0xd8] sm:$0xff]
    %v2879 = vld [vmem:[#allocation10 + $0xe0] sm:$0xff]
    %v2880 = vld [vmem:[#allocation10 + $0xe8] sm:$0xff]
    %v2881 = vld [vmem:[#allocation10 + $0xf0] sm:$0xff]
    %v2882 = vld [vmem:[#allocation10 + $0xf8] sm:$0xff]
    %v2883 = vld [vmem:[%s6] sm:$0x1]
    %v2885 = vperm.slane %v2883, 0
    %2887 = vmatpush.msra.mxu0 %v2866
    %2888 = vmatpush.msra.mxu0 %v2865
    %2889 = vmatpush.msra.mxu0 %v2864
    %2890 = vmatpush.msra.mxu0 %v2863
    %2891 = vmatpush.msra.mxu0 %v2862
    %2892 = vmatpush.msra.mxu0 %v2861
    %2893 = vmatpush.msra.mxu0 %v2860
    %2894 = vmatpush.msra.mxu0 %v2859
    %2895 = vmatpush.msra.mxu0 %v2858
    %2896 = vmatpush.msra.mxu0 %v2857
    %2897 = vmatpush.msra.mxu0 %v2856
    %2898 = vmatpush.msra.mxu0 %v2855
    %2899 = vmatpush.msra.mxu0 %v2854
    %2900 = vmatpush.msra.mxu0 %v2853
    %2901 = vmatpush.msra.mxu0 %v2852
    %2902 = vmatpush.msra.mxu0 %v2851
    %2903 = vmatmul.f32.gmra.mxu0 %v2787
    %v2904 = vpop.f32.mrf.mxu0
    %v2905 = vadd.f32 %v2885, %v2904
    %2906 = vmatmul.f32.gmra.mxu0 %v2789
    %v2907 = vpop.f32.mrf.mxu0
    %v2908 = vadd.f32 %v2885, %v2907
    %2909 = vmatmul.f32.gmra.mxu0 %v2791
    %v2910 = vpop.f32.mrf.mxu0
    %v2911 = vadd.f32 %v2885, %v2910
    %2912 = vmatmul.f32.gmra.mxu0 %v2793
    %v2913 = vpop.f32.mrf.mxu0
    %v2914 = vadd.f32 %v2885, %v2913
    %2915 = vmatmul.f32.gmra.mxu0 %v2795
    %v2916 = vpop.f32.mrf.mxu0
    %v2917 = vadd.f32 %v2885, %v2916
    %2918 = vmatmul.f32.gmra.mxu0 %v2797
    %v2919 = vpop.f32.mrf.mxu0
    %v2920 = vadd.f32 %v2885, %v2919
    %2921 = vmatmul.f32.gmra.mxu0 %v2799
    %v2922 = vpop.f32.mrf.mxu0
    %v2923 = vadd.f32 %v2885, %v2922
    %2924 = vmatmul.f32.gmra.mxu0 %v2801
    %v2925 = vpop.f32.mrf.mxu0
    %v2926 = vadd.f32 %v2885, %v2925
    %2927 = vmatmul.f32.gmra.mxu0 %v2803
    %v2928 = vpop.f32.mrf.mxu0
    %v2929 = vadd.f32 %v2885, %v2928
    %2930 = vmatmul.f32.gmra.mxu0 %v2805
    %v2931 = vpop.f32.mrf.mxu0
    %v2932 = vadd.f32 %v2885, %v2931
    %2933 = vmatmul.f32.gmra.mxu0 %v2807
    %v2934 = vpop.f32.mrf.mxu0
    %v2935 = vadd.f32 %v2885, %v2934
    %2936 = vmatmul.f32.gmra.mxu0 %v2809
    %v2937 = vpop.f32.mrf.mxu0
    %v2938 = vadd.f32 %v2885, %v2937
    %2939 = vmatmul.f32.gmra.mxu0 %v2811
    %v2940 = vpop.f32.mrf.mxu0
    %v2941 = vadd.f32 %v2885, %v2940
    %2942 = vmatmul.f32.gmra.mxu0 %v2813
    %v2943 = vpop.f32.mrf.mxu0
    %v2944 = vadd.f32 %v2885, %v2943
    %2945 = vmatmul.f32.gmra.mxu0 %v2815
    %v2946 = vpop.f32.mrf.mxu0
    %v2947 = vadd.f32 %v2885, %v2946
    %2948 = vmatmul.f32.gmra.mxu0 %v2817
    %v2949 = vpop.f32.mrf.mxu0
    %v2950 = vadd.f32 %v2885, %v2949
    %2951 = vmatmul.f32.gmra.mxu0 %v2819
    %v2952 = vpop.f32.mrf.mxu0
    %v2953 = vadd.f32 %v2885, %v2952
    %2954 = vmatmul.f32.gmra.mxu0 %v2821
    %v2955 = vpop.f32.mrf.mxu0
    %v2956 = vadd.f32 %v2885, %v2955
    %2957 = vmatmul.f32.gmra.mxu0 %v2823
    %v2958 = vpop.f32.mrf.mxu0
    %v2959 = vadd.f32 %v2885, %v2958
    %2960 = vmatmul.f32.gmra.mxu0 %v2825
    %v2961 = vpop.f32.mrf.mxu0
    %v2962 = vadd.f32 %v2885, %v2961
    %2963 = vmatmul.f32.gmra.mxu0 %v2827
    %v2964 = vpop.f32.mrf.mxu0
    %v2965 = vadd.f32 %v2885, %v2964
    %2966 = vmatmul.f32.gmra.mxu0 %v2829
    %v2967 = vpop.f32.mrf.mxu0
    %v2968 = vadd.f32 %v2885, %v2967
    %2969 = vmatmul.f32.gmra.mxu0 %v2831
    %v2970 = vpop.f32.mrf.mxu0
    %v2971 = vadd.f32 %v2885, %v2970
    %2972 = vmatmul.f32.gmra.mxu0 %v2833
    %v2973 = vpop.f32.mrf.mxu0
    %v2974 = vadd.f32 %v2885, %v2973
    %2975 = vmatmul.f32.gmra.mxu0 %v2835
    %v2976 = vpop.f32.mrf.mxu0
    %v2977 = vadd.f32 %v2885, %v2976
    %2978 = vmatmul.f32.gmra.mxu0 %v2837
    %v2979 = vpop.f32.mrf.mxu0
    %v2980 = vadd.f32 %v2885, %v2979
    %2981 = vmatmul.f32.gmra.mxu0 %v2839
    %v2982 = vpop.f32.mrf.mxu0
    %v2983 = vadd.f32 %v2885, %v2982
    %2984 = vmatmul.f32.gmra.mxu0 %v2841
    %v2985 = vpop.f32.mrf.mxu0
    %v2986 = vadd.f32 %v2885, %v2985
    %2987 = vmatmul.f32.gmra.mxu0 %v2843
    %v2988 = vpop.f32.mrf.mxu0
    %v2989 = vadd.f32 %v2885, %v2988
    %2990 = vmatmul.f32.gmra.mxu0 %v2845
    %v2991 = vpop.f32.mrf.mxu0
    %v2992 = vadd.f32 %v2885, %v2991
    %2993 = vmatmul.f32.gmra.mxu0 %v2847
    %v2994 = vpop.f32.mrf.mxu0
    %v2995 = vadd.f32 %v2885, %v2994
    %2996 = vmatmul.f32.gmra.mxu0 %v2849
    %v2997 = vpop.f32.mrf.mxu0
    %v2998 = vadd.f32 %v2885, %v2997
    %2999 = vdwg.mxu0
    %3000 = vmatpush.msra.mxu0 %v2882
    %3001 = vmatpush.msra.mxu0 %v2881
    %3002 = vmatpush.msra.mxu0 %v2880
    %3003 = vmatpush.msra.mxu0 %v2879
    %3004 = vmatpush.msra.mxu0 %v2878
    %3005 = vmatpush.msra.mxu0 %v2877
    %3006 = vmatpush.msra.mxu0 %v2876
    %3007 = vmatpush.msra.mxu0 %v2875
    %3008 = vmatpush.msra.mxu0 %v2874
    %3009 = vmatpush.msra.mxu0 %v2873
    %3010 = vmatpush.msra.mxu0 %v2872
    %3011 = vmatpush.msra.mxu0 %v2871
    %3012 = vmatpush.msra.mxu0 %v2870
    %3013 = vmatpush.msra.mxu0 %v2869
    %3014 = vmatpush.msra.mxu0 %v2868
    %3015 = vmatpush.msra.mxu0 %v2867
    %3016 = vmatmul.f32.gmra.mxu0 %v2788
    %v3017 = vpop.f32.mrf.mxu0
    %v3018 = vadd.f32 %v2905, %v3017
    %3019 = vmatmul.f32.gmra.mxu0 %v2790
    %v3020 = vpop.f32.mrf.mxu0
    %v3021 = vadd.f32 %v2908, %v3020
    %3022 = vmatmul.f32.gmra.mxu0 %v2792
    %v3023 = vpop.f32.mrf.mxu0
    %v3024 = vadd.f32 %v2911, %v3023
    %3025 = vmatmul.f32.gmra.mxu0 %v2794
    %v3026 = vpop.f32.mrf.mxu0
    %v3027 = vadd.f32 %v2914, %v3026
    %3028 = vmatmul.f32.gmra.mxu0 %v2796
    %v3029 = vpop.f32.mrf.mxu0
    %v3030 = vadd.f32 %v2917, %v3029
    %3031 = vmatmul.f32.gmra.mxu0 %v2798
    %v3032 = vpop.f32.mrf.mxu0
    %v3033 = vadd.f32 %v2920, %v3032
    %3034 = vmatmul.f32.gmra.mxu0 %v2800
    %v3035 = vpop.f32.mrf.mxu0
    %v3036 = vadd.f32 %v2923, %v3035
    %3037 = vmatmul.f32.gmra.mxu0 %v2802
    %v3038 = vpop.f32.mrf.mxu0
    %v3039 = vadd.f32 %v2926, %v3038
    %3040 = vmatmul.f32.gmra.mxu0 %v2804
    %v3041 = vpop.f32.mrf.mxu0
    %v3042 = vadd.f32 %v2929, %v3041
    %3043 = vmatmul.f32.gmra.mxu0 %v2806
    %v3044 = vpop.f32.mrf.mxu0
    %v3045 = vadd.f32 %v2932, %v3044
    %3046 = vmatmul.f32.gmra.mxu0 %v2808
    %v3047 = vpop.f32.mrf.mxu0
    %v3048 = vadd.f32 %v2935, %v3047
    %3049 = vmatmul.f32.gmra.mxu0 %v2810
    %v3050 = vpop.f32.mrf.mxu0
    %v3051 = vadd.f32 %v2938, %v3050
    %3052 = vmatmul.f32.gmra.mxu0 %v2812
    %v3053 = vpop.f32.mrf.mxu0
    %v3054 = vadd.f32 %v2941, %v3053
    %3055 = vmatmul.f32.gmra.mxu0 %v2814
    %v3056 = vpop.f32.mrf.mxu0
    %v3057 = vadd.f32 %v2944, %v3056
    %3058 = vmatmul.f32.gmra.mxu0 %v2816
    %v3059 = vpop.f32.mrf.mxu0
    %v3060 = vadd.f32 %v2947, %v3059
    %3061 = vmatmul.f32.gmra.mxu0 %v2818
    %v3062 = vpop.f32.mrf.mxu0
    %v3063 = vadd.f32 %v2950, %v3062
    %3064 = vmatmul.f32.gmra.mxu0 %v2820
    %v3065 = vpop.f32.mrf.mxu0
    %v3066 = vadd.f32 %v2953, %v3065
    %3067 = vmatmul.f32.gmra.mxu0 %v2822
    %v3068 = vpop.f32.mrf.mxu0
    %v3069 = vadd.f32 %v2956, %v3068
    %3070 = vmatmul.f32.gmra.mxu0 %v2824
    %v3071 = vpop.f32.mrf.mxu0
    %v3072 = vadd.f32 %v2959, %v3071
    %3073 = vmatmul.f32.gmra.mxu0 %v2826
    %v3074 = vpop.f32.mrf.mxu0
    %v3075 = vadd.f32 %v2962, %v3074
    %3076 = vmatmul.f32.gmra.mxu0 %v2828
    %v3077 = vpop.f32.mrf.mxu0
    %v3078 = vadd.f32 %v2965, %v3077
    %3079 = vmatmul.f32.gmra.mxu0 %v2830
    %v3080 = vpop.f32.mrf.mxu0
    %v3081 = vadd.f32 %v2968, %v3080
    %3082 = vmatmul.f32.gmra.mxu0 %v2832
    %v3083 = vpop.f32.mrf.mxu0
    %v3084 = vadd.f32 %v2971, %v3083
    %3085 = vmatmul.f32.gmra.mxu0 %v2834
    %v3086 = vpop.f32.mrf.mxu0
    %v3087 = vadd.f32 %v2974, %v3086
    %3088 = vmatmul.f32.gmra.mxu0 %v2836
    %v3089 = vpop.f32.mrf.mxu0
    %v3090 = vadd.f32 %v2977, %v3089
    %3091 = vmatmul.f32.gmra.mxu0 %v2838
    %v3092 = vpop.f32.mrf.mxu0
    %v3093 = vadd.f32 %v2980, %v3092
    %3094 = vmatmul.f32.gmra.mxu0 %v2840
    %v3095 = vpop.f32.mrf.mxu0
    %v3096 = vadd.f32 %v2983, %v3095
    %3097 = vmatmul.f32.gmra.mxu0 %v2842
    %v3098 = vpop.f32.mrf.mxu0
    %v3099 = vadd.f32 %v2986, %v3098
    %3100 = vmatmul.f32.gmra.mxu0 %v2844
    %v3101 = vpop.f32.mrf.mxu0
    %v3102 = vadd.f32 %v2989, %v3101
    %3103 = vmatmul.f32.gmra.mxu0 %v2846
    %v3104 = vpop.f32.mrf.mxu0
    %v3105 = vadd.f32 %v2992, %v3104
    %3106 = vmatmul.f32.gmra.mxu0 %v2848
    %v3107 = vpop.f32.mrf.mxu0
    %v3108 = vadd.f32 %v2995, %v3107
    %3109 = vmatmul.f32.gmra.mxu0 %v2850
    %v3110 = vpop.f32.mrf.mxu0
    %v3111 = vadd.f32 %v2998, %v3110
    %3112 = vdwg.mxu0
    %3113 = vst [vmem:[#allocation11] sm:$0xff] %v3018
    %3114 = vst [vmem:[#allocation11 + $0x8] sm:$0xff] %v3021
    %3115 = vst [vmem:[#allocation11 + $0x10] sm:$0xff] %v3024
    %3116 = vst [vmem:[#allocation11 + $0x18] sm:$0xff] %v3027
    %3117 = vst [vmem:[#allocation11 + $0x20] sm:$0xff] %v3030
    %3118 = vst [vmem:[#allocation11 + $0x28] sm:$0xff] %v3033
    %3119 = vst [vmem:[#allocation11 + $0x30] sm:$0xff] %v3036
    %3120 = vst [vmem:[#allocation11 + $0x38] sm:$0xff] %v3039
    %3121 = vst [vmem:[#allocation11 + $0x40] sm:$0xff] %v3042
    %3122 = vst [vmem:[#allocation11 + $0x48] sm:$0xff] %v3045
    %3123 = vst [vmem:[#allocation11 + $0x50] sm:$0xff] %v3048
    %3124 = vst [vmem:[#allocation11 + $0x58] sm:$0xff] %v3051
    %3125 = vst [vmem:[#allocation11 + $0x60] sm:$0xff] %v3054
    %3126 = vst [vmem:[#allocation11 + $0x68] sm:$0xff] %v3057
    %3127 = vst [vmem:[#allocation11 + $0x70] sm:$0xff] %v3060
    %3128 = vst [vmem:[#allocation11 + $0x78] sm:$0xff] %v3063
    %3129 = vst [vmem:[#allocation11 + $0x80] sm:$0xff] %v3066
    %3130 = vst [vmem:[#allocation11 + $0x88] sm:$0xff] %v3069
    %3131 = vst [vmem:[#allocation11 + $0x90] sm:$0xff] %v3072
    %3132 = vst [vmem:[#allocation11 + $0x98] sm:$0xff] %v3075
    %3133 = vst [vmem:[#allocation11 + $0xa0] sm:$0xff] %v3078
    %3134 = vst [vmem:[#allocation11 + $0xa8] sm:$0xff] %v3081
    %3135 = vst [vmem:[#allocation11 + $0xb0] sm:$0xff] %v3084
    %3136 = vst [vmem:[#allocation11 + $0xb8] sm:$0xff] %v3087
    %3137 = vst [vmem:[#allocation11 + $0xc0] sm:$0xff] %v3090
    %3138 = vst [vmem:[#allocation11 + $0xc8] sm:$0xff] %v3093
    %3139 = vst [vmem:[#allocation11 + $0xd0] sm:$0xff] %v3096
    %3140 = vst [vmem:[#allocation11 + $0xd8] sm:$0xff] %v3099
    %3141 = vst [vmem:[#allocation11 + $0xe0] sm:$0xff] %v3102
    %3142 = vst [vmem:[#allocation11 + $0xe8] sm:$0xff] %v3105
    %3143 = vst [vmem:[#allocation11 + $0xf0] sm:$0xff] %v3108
    %3144 = vst [vmem:[#allocation11 + $0xf8] sm:$0xff] %v3111
    // Predicated region
    $region50: #{tpu_custom_call.1} parent=1 // pred_check
      _
    $region51: #{tpu_custom_call.1} parent=1 // pred_check_branch
      %3146 = sbr.rel (0) target = $region53
    $region52: #{tpu_custom_call.1} parent=1 // pred_region
      %3148 = vsyncadd [#allocation4], 0
      %s3149 = sshll.u32 [#allocation11], 4
      %s3150 = int_to_ptr.vmem [resolvable:$true] %s3149
      %s3151 = sshll.u32 %s7, 4
      %s3152 = int_to_ptr.hbm [resolvable:$true] %s3151
      %3157 = dma.vmem_to_hbm [thread:$0]  %s3150, 4096, %s3152, [#allocation4], 128, 128, 8
    $region53: #{tpu_custom_call.1} parent=1 // pred_fallthru
      _
    // Predicated region
    $region54: #{tpu_custom_call.1} parent=1 // pred_check
      _
    $region55: #{tpu_custom_call.1} parent=1 // pred_check_branch
      %3159 = sbr.rel (0) target = $region57
    $region56: #{tpu_custom_call.1} parent=1 // pred_region
      %3161 = dma.done [#allocation4], 4096
    $region57: #{tpu_custom_call.1} parent=1 // pred_fallthru
      _
    %3162 = vsyncpa [#allocation3], 1
    %3163 = vsyncpa [#allocation6], 1
    %3164 = vsyncpa [#allocation9], 1
    %3165 = vsyncpa [#allocation4], 1

</llo_original>
